<compile_context>
chip_gen: v5e
topology: v5e:2x2
jax: 0.10.0
libtpu: 0.0.40
codegen_flags: <defaults>
</compile_context>

<pallas_src>
import functools

import jax
import jax.numpy as jnp
from jax import lax
from jax.experimental import pallas as pl
from jax.experimental.pallas import tpu as pltpu

EPS = 1e-5


def _round_up(x, m):
    return (x + m - 1) // m * m


def _tpu_budgets():
    """Generation-dependent scoped-VMEM limit and per-step row budget."""
    try:
        phys = int(pltpu.get_tpu_info().vmem_capacity_bytes)
    except Exception:
        phys = 64 * 1024 * 1024
    if phys >= 128 * 1024 * 1024:           # v5e / v6e: 128 MiB physical VMEM
        return 96 * 1024 * 1024, 1024
    return 32 * 1024 * 1024, 512            # v7x (64 MiB physical) / conservative fallback


VMEM_LIMIT, MAX_TILE_ROWS = _tpu_budgets()


# ----------------------------- pallas kernels / calls ----------------------------- #

def _conv1_stats(p1, w1m, *, G, HoWo, Cp, n_half):
    """Phase 1: conv1 matmul (bf16 operands, f32 acc) + per-channel sum / sum-of-squares.

    Grid = (2 cores, steps-per-core); each core owns its own stats slab (summed later).
    """
    Np, _, K1p = p1.shape

    def kernel(p_ref, w_ref, pre_ref, st_ref):
        i = pl.program_id(1)

        @pl.when(i == 0)
        def _():
            st_ref[...] = jnp.zeros_like(st_ref)

        lhs = p_ref[...].reshape(G * HoWo, K1p)
        acc = jnp.dot(lhs, w_ref[...], preferred_element_type=jnp.float32)
        pre_ref[...] = acc.astype(pre_ref.dtype).reshape(G, HoWo, Cp)
        st_ref[0, 0:1, :] += jnp.sum(acc, axis=0, keepdims=True)
        st_ref[0, 1:2, :] += jnp.sum(acc * acc, axis=0, keepdims=True)

    return pl.pallas_call(
        kernel,
        grid=(2, n_half),
        in_specs=[pl.BlockSpec((G, HoWo, K1p), lambda c, i: (c * n_half + i, 0, 0)),
                  pl.BlockSpec((K1p, Cp), lambda c, i: (0, 0))],       # VMEM-resident weight
        out_specs=[pl.BlockSpec((G, HoWo, Cp), lambda c, i: (c * n_half + i, 0, 0)),
                   pl.BlockSpec((1, 2, Cp), lambda c, i: (c, 0, 0))],  # per-core stats slab
        out_shape=[jax.ShapeDtypeStruct((Np, HoWo, Cp), jnp.bfloat16),
                   jax.ShapeDtypeStruct((2, 2, Cp), jnp.float32)],
        compiler_params=pltpu.CompilerParams(
            dimension_semantics=("parallel", "arbitrary"),
            vmem_limit_bytes=VMEM_LIMIT),
    )(p1, w1m)


def _fused_tail(pre1, xs, sc1, sh1, w2m, wsm, *, G, Ho, Wo, Cp, n_half, n_imgs):
    """Phase 2 (fused): BN1+ReLU -> conv2 (9 shifted matmuls, in-kernel zero padding)
    -> stats2, plus the strided 1x1 shortcut matmul -> stats_s.  y1 never touches HBM."""
    Np = pre1.shape[0]
    CinK = xs.shape[-1]
    HoWo = Ho * Wo

    def kernel(pre1_ref, xs_ref, sc1_ref, sh1_ref, w2_ref, ws_ref,
               pre2_ref, pres_ref, st2_ref, sts_ref, ypad_ref, acc_ref):
        c = pl.program_id(0)
        i = pl.program_id(1)

        @pl.when(i == 0)
        def _():
            st2_ref[...] = jnp.zeros_like(st2_ref)
            sts_ref[...] = jnp.zeros_like(sts_ref)

        scale1 = sc1_ref[...]                       # (1, Cp) f32, loaded once per step
        shift1 = sh1_ref[...]
        base = (c * n_half + i) * G

        for g in range(G):
            # Padded images (M padding) are skipped so they cannot pollute the batch stats.
            @pl.when(base + g < n_imgs)
            def _process(g=g):
                # ---- BN1 + ReLU fused on the conv1 pre-activation (f32 math) ----
                y1 = jnp.maximum(pre1_ref[g].astype(jnp.float32) * scale1 + shift1, 0.0)
                y1 = y1.astype(jnp.bfloat16).reshape(Ho, Wo, Cp)
                # ---- in-kernel patch formation: zero border = conv2 padding ----
                ypad_ref[...] = jnp.zeros_like(ypad_ref)
                ypad_ref[1:Ho + 1, 1:Wo + 1, :] = y1
                # ---- conv2 = sum over the 9 taps of shifted-window matmuls ----
                acc_ref[...] = jnp.zeros_like(acc_ref)
                for kh in range(3):
                    for kw in range(3):
                        lhs = ypad_ref[kh:kh + Ho, kw:kw + Wo, :].reshape(HoWo, Cp)
                        acc_ref[...] += jnp.dot(lhs, w2_ref[3 * kh + kw],
                                                preferred_element_type=jnp.float32)
                a = acc_ref[...]
                pre2_ref[g] = a.astype(pre2_ref.dtype)
                st2_ref[0, 0:1, :] += jnp.sum(a, axis=0, keepdims=True)
                st2_ref[0, 1:2, :] += jnp.sum(a * a, axis=0, keepdims=True)
                # ---- 1x1 strided shortcut ----
                s = jnp.dot(xs_ref[g], ws_ref[...], preferred_element_type=jnp.float32)
                pres_ref[g] = s.astype(pres_ref.dtype)
                sts_ref[0, 0:1, :] += jnp.sum(s, axis=0, keepdims=True)
                sts_ref[0, 1:2, :] += jnp.sum(s * s, axis=0, keepdims=True)

    return pl.pallas_call(
        kernel,
        grid=(2, n_half),
        in_specs=[pl.BlockSpec((G, HoWo, Cp), lambda c, i: (c * n_half + i, 0, 0)),
                  pl.BlockSpec((G, HoWo, CinK), lambda c, i: (c * n_half + i, 0, 0)),
                  pl.BlockSpec((1, Cp), lambda c, i: (0, 0)),
                  pl.BlockSpec((1, Cp), lambda c, i: (0, 0)),
                  pl.BlockSpec((9, Cp, Cp), lambda c, i: (0, 0, 0)),   # resident conv2 weight
                  pl.BlockSpec((CinK, Cp), lambda c, i: (0, 0))],      # resident shortcut weight
        out_specs=[pl.BlockSpec((G, HoWo, Cp), lambda c, i: (c * n_half + i, 0, 0)),
                   pl.BlockSpec((G, HoWo, Cp), lambda c, i: (c * n_half + i, 0, 0)),
                   pl.BlockSpec((1, 2, Cp), lambda c, i: (c, 0, 0)),
                   pl.BlockSpec((1, 2, Cp), lambda c, i: (c, 0, 0))],
        out_shape=[jax.ShapeDtypeStruct((Np, HoWo, Cp), jnp.bfloat16),
                   jax.ShapeDtypeStruct((Np, HoWo, Cp), jnp.bfloat16),
                   jax.ShapeDtypeStruct((2, 2, Cp), jnp.float32),
                   jax.ShapeDtypeStruct((2, 2, Cp), jnp.float32)],
        scratch_shapes=[pltpu.VMEM((Ho + 2, Wo + 2, Cp), jnp.bfloat16),   # zero-bordered y1
                        pltpu.VMEM((HoWo, Cp), jnp.float32)],             # conv2 accumulator
        compiler_params=pltpu.CompilerParams(
            dimension_semantics=("parallel", "arbitrary"),
            vmem_limit_bytes=VMEM_LIMIT),
    )(pre1, xs, sc1, sh1, w2m, wsm)


def _combine(pre2, pres, s2, b2, ss, bs, *, G, Cp, n_steps):
    """Phase 3: out = relu(0.5*BN(conv2) + BN(shortcut)); the 0.5 is folded into s2/b2."""
    Np, HoWo, _ = pre2.shape

    def kernel(pre2_ref, pres_ref, s2_ref, b2_ref, ss_ref, bs_ref, o_ref):
        a = pre2_ref[...].astype(jnp.float32) * s2_ref[...] + b2_ref[...]
        s = pres_ref[...].astype(jnp.float32) * ss_ref[...] + bs_ref[...]
        o_ref[...] = jnp.maximum(a + s, 0.0).astype(o_ref.dtype)

    return pl.pallas_call(
        kernel,
        grid=(n_steps,),
        in_specs=[pl.BlockSpec((G, HoWo, Cp), lambda i: (i, 0, 0)),
                  pl.BlockSpec((G, HoWo, Cp), lambda i: (i, 0, 0)),
                  pl.BlockSpec((1, Cp), lambda i: (0, 0)),
                  pl.BlockSpec((1, Cp), lambda i: (0, 0)),
                  pl.BlockSpec((1, Cp), lambda i: (0, 0)),
                  pl.BlockSpec((1, Cp), lambda i: (0, 0))],
        out_specs=pl.BlockSpec((G, HoWo, Cp), lambda i: (i, 0, 0)),
        out_shape=jax.ShapeDtypeStruct((Np, HoWo, Cp), jnp.float32),
        compiler_params=pltpu.CompilerParams(
            dimension_semantics=("parallel",),
            vmem_limit_bytes=VMEM_LIMIT),
    )(pre2, pres, s2, b2, ss, bs)


# --------------------------------- JAX glue --------------------------------- #

def im2col_patches(x, k, stride, pad):
    """x: (N, H, W, C) -> (N, Ho, Wo, k*k*C); tap order (kh, kw, c), c fastest."""
    N, H, W, C = x.shape
    xp = jnp.pad(x, ((0, 0), (pad, pad), (pad, pad), (0, 0)))
    Ho = (H + 2 * pad - k) // stride + 1
    Wo = (W + 2 * pad - k) // stride + 1
    cols = []
    for kh in range(k):
        for kw in range(k):
            cols.append(xp[:, kh:kh + Ho * stride:stride, kw:kw + Wo * stride:stride, :])
    return jnp.concatenate(cols, axis=-1), Ho, Wo


def _pad2d(a, rows, cols):
    r, c = a.shape
    return jnp.pad(a, ((0, rows - r), (0, cols - c)))


def _pad_row(v, cols):
    return jnp.pad(v, (0, cols - v.shape[0])).reshape(1, cols).astype(jnp.float32)


def _bn_scale_shift(stats, m_rows, g, b):
    """Per-channel scale/shift from accumulated sum / sum-of-squares (biased variance)."""
    cout = g.shape[0]
    mean = stats[0, :cout] / m_rows
    var = jnp.maximum(stats[1, :cout] / m_rows - mean * mean, 0.0)
    scale = g * lax.rsqrt(var + EPS)
    shift = b - mean * scale
    return scale, shift


def _pick_group(Ho, Wo, Cp, CinK, N):
    """Images per grid step, from a row budget and a VMEM byte budget of the fused tail."""
    HoWo = Ho * Wo
    per_img = 2 * 2 * HoWo * (3 * Cp + CinK)                      # streamed bf16, double-buffered
    fixed = (2 * 2 * 9 * Cp * Cp + 2 * 2 * CinK * Cp              # weights (double-buffered)
             + 2 * (Ho + 2) * (Wo + 2) * Cp + 4 * HoWo * Cp)      # scratch
    budget = int(0.75 * VMEM_LIMIT)
    g_bytes = max(1, (budget - fixed) // max(per_img, 1)) if budget > fixed else 1
    g_rows = max(1, MAX_TILE_ROWS // max(HoWo, 1))
    return int(max(1, min(g_bytes, g_rows, max(N // 2, 1), 8)))


@functools.partial(jax.jit, static_argnums=2)
def basic_block_forward(x_nhwc, params, stride):
    """x_nhwc: (N, H, W, Cin) float32 -> (N, Ho, Wo, Cout) float32."""
    w1, g1, b1, w2, g2, b2, ws, gs, bs = params
    N, H, W, Cin = x_nhwc.shape
    Cout = w1.shape[-1]
    Cp = _round_up(Cout, 128)              # lane-dense channel padding
    CinK = _round_up(Cin, 8)

    x_bf = x_nhwc.astype(jnp.bfloat16)     # cast BEFORE the patch gather (halves its traffic)

    # conv1 patches (XLA-side gather; only conv1 still uses im2col — see TODO(synk) above)
    p1, Ho, Wo = im2col_patches(x_bf, 3, stride, 1)
    HoWo = Ho * Wo
    M = N * HoWo
    K1 = 9 * Cin
    K1p = _round_up(K1, 8)

    G = _pick_group(Ho, Wo, Cp, CinK, N)   # images per grid step
    Np = _round_up(N, 2 * G)               # even number of steps (2-core split)
    n_steps = Np // G
    n_half = n_steps // 2

    p1 = p1.reshape(N, HoWo, K1)
    p1 = jnp.pad(p1, ((0, Np - N), (0, 0), (0, K1p - K1)))
    w1m = _pad2d(w1.reshape(K1, Cout), K1p, Cp).astype(jnp.bfloat16)

    # phase 1: conv1 + batch stats
    pre1, st1 = _conv1_stats(p1, w1m, G=G, HoWo=HoWo, Cp=Cp, n_half=n_half)
    sc1, sh1 = _bn_scale_shift(st1[0] + st1[1], M, g1, b1)

    # phase 2 (fused): BN1+ReLU -> conv2 (in-kernel patches) + shortcut + stats
    w2m = jnp.pad(w2.reshape(9, Cout, Cout),
                  ((0, 0), (0, Cp - Cout), (0, Cp - Cout))).astype(jnp.bfloat16)
    xs = x_bf[:, ::stride, ::stride, :].reshape(N, HoWo, Cin)
    xs = jnp.pad(xs, ((0, Np - N), (0, 0), (0, CinK - Cin)))
    wsm = _pad2d(ws.reshape(Cin, Cout), CinK, Cp).astype(jnp.bfloat16)

    pre2, pres, st2, sts = _fused_tail(
        pre1, xs, _pad_row(sc1, Cp), _pad_row(sh1, Cp), w2m, wsm,
        G=G, Ho=Ho, Wo=Wo, Cp=Cp, n_half=n_half, n_imgs=N)

    sc2, sh2 = _bn_scale_shift(st2[0] + st2[1], M, g2, b2)
    sc2, sh2 = 0.5 * sc2, 0.5 * sh2        # fold the 0.5 residual weight into BN2
    scs, shs = _bn_scale_shift(sts[0] + sts[1], M, gs, bs)

    # phase 3: relu(0.5*BN(conv2) + BN(shortcut))
    out = _combine(pre2, pres, _pad_row(sc2, Cp), _pad_row(sh2, Cp),
                   _pad_row(scs, Cp), _pad_row(shs, Cp), G=G, Cp=Cp, n_steps=n_steps)
    return out[:N, :, :Cout].reshape(N, Ho, Wo, Cout)


# --------------------------------- reference --------------------------------- #

def _bn_ref(y, g, b):
    mean = y.mean(axis=(0, 1, 2))
    var = ((y - mean) ** 2).mean(axis=(0, 1, 2))
    return (y - mean) / jnp.sqrt(var + EPS) * g + b


def basic_block_ref(x_nhwc, params, stride):
    w1, g1, b1, w2, g2, b2, ws, gs, bs = params
    dn = ("NHWC", "HWIO", "NHWC")
    y = lax.conv_general_dilated(x_nhwc, w1, (stride, stride), ((1, 1), (1, 1)),
                                 dimension_numbers=dn)
    y = jnp.maximum(_bn_ref(y, g1, b1), 0.0)
    y = lax.conv_general_dilated(y, w2, (1, 1), ((1, 1), (1, 1)), dimension_numbers=dn)
    x1 = _bn_ref(y, g2, b2)
    s = lax.conv_general_dilated(x_nhwc, ws, (stride, stride), ((0, 0), (0, 0)),
                                 dimension_numbers=dn)
    x2 = _bn_ref(s, gs, bs)
    return jnp.maximum(0.5 * x1 + x2, 0.0)


# ----------------------------------- main ----------------------------------- #

if __name__ == "__main__":
    key = jax.random.PRNGKey(0)
    N, Cin, H, W = 2, 4, 16, 16
    Cout, stride = 8, 2

    ks = jax.random.split(key, 8)
    w1 = jax.random.normal(ks[0], (3, 3, Cin, Cout), jnp.float32) * 0.1
    w2 = jax.random.normal(ks[1], (3, 3, Cout, Cout), jnp.float32) * 0.1
    ws = jax.random.normal(ks[2], (1, 1, Cin, Cout), jnp.float32) * 0.1
    g1 = 1.0 + 0.1 * jax.random.normal(ks[3], (Cout,), jnp.float32)
    b1 = 0.1 * jax.random.normal(ks[4], (Cout,), jnp.float32)
    g2 = 1.0 + 0.1 * jax.random.normal(ks[5], (Cout,), jnp.float32)
    b2 = 0.1 * jax.random.normal(ks[6], (Cout,), jnp.float32)
    gs = jnp.ones((Cout,), jnp.float32)
    bs = jnp.zeros((Cout,), jnp.float32)
    params = (w1, g1, b1, w2, g2, b2, ws, gs, bs)

    # input in PyTorch NCHW, permuted to NHWC for the kernel path
    x_nchw = jax.random.normal(ks[7], (N, Cin, H, W), jnp.float32)
    x_nhwc = jnp.transpose(x_nchw, (0, 2, 3, 1))

    out = basic_block_forward(x_nhwc, params, stride)
    out = jax.block_until_ready(out)

    ref = basic_block_ref(x_nhwc, params, stride)
    assert out.shape == ref.shape
    # tolerance accounts for bf16 MXU operands and bf16 pre-activation storage (f32 BN math)
    assert jnp.allclose(out, ref, atol=5e-2, rtol=5e-2), float(jnp.max(jnp.abs(out - ref)))

    print("KERNEL_OK")
</pallas_src>

<mosaic_0001>
module attributes {stable_mosaic.version = 11 : i64} {
  func.func @kernel(%arg0: i32, %arg1: i32, %arg2: memref<1x64x128xbf16, #tpu.memory_space<vmem>>, %arg3: memref<1x64x8xbf16, #tpu.memory_space<vmem>>, %arg4: memref<1x128xf32, #tpu.memory_space<vmem>>, %arg5: memref<1x128xf32, #tpu.memory_space<vmem>>, %arg6: memref<9x128x128xbf16, #tpu.memory_space<vmem>>, %arg7: memref<8x128xbf16, #tpu.memory_space<vmem>>, %arg8: memref<1x64x128xbf16, #tpu.memory_space<vmem>>, %arg9: memref<1x64x128xbf16, #tpu.memory_space<vmem>>, %arg10: memref<1x2x128xf32, #tpu.memory_space<vmem>>, %arg11: memref<1x2x128xf32, #tpu.memory_space<vmem>>, %arg12: memref<10x10x128xbf16, #tpu.memory_space<vmem>>, %arg13: memref<64x128xf32, #tpu.memory_space<vmem>>) attributes {dimension_semantics = [#tpu.dimension_semantics<parallel>, #tpu.dimension_semantics<arbitrary>], iteration_bounds = array<i64: 2, 1>, scalar_prefetch = 0 : i64, scratch_operands = 2 : i64, tpu.core_type = #tpu.core_type<tc>, window_params = [{transform_indices = @transform_0, window_bounds = array<i64: 1, 64, 128>}, {transform_indices = @transform_1, window_bounds = array<i64: 1, 64, 8>}, {pipeline_mode = #tpu.pipeline_mode<synchronous>, transform_indices = @transform_2, window_bounds = array<i64: 1, 128>}, {pipeline_mode = #tpu.pipeline_mode<synchronous>, transform_indices = @transform_3, window_bounds = array<i64: 1, 128>}, {pipeline_mode = #tpu.pipeline_mode<synchronous>, transform_indices = @transform_4, window_bounds = array<i64: 9, 128, 128>}, {pipeline_mode = #tpu.pipeline_mode<synchronous>, transform_indices = @transform_5, window_bounds = array<i64: 8, 128>}, {transform_indices = @transform_6, window_bounds = array<i64: 1, 64, 128>}, {transform_indices = @transform_7, window_bounds = array<i64: 1, 64, 128>}, {transform_indices = @transform_8, window_bounds = array<i64: 1, 2, 128>}, {transform_indices = @transform_9, window_bounds = array<i64: 1, 2, 128>}]} {
    %c0_i32 = arith.constant 0 : i32
    %0 = arith.cmpi eq, %arg1, %c0_i32 : i32
    %1 = arith.extui %0 : i1 to i32
    %c0_i32_0 = arith.constant 0 : i32
    %2 = arith.cmpi ne, %1, %c0_i32_0 : i32
    scf.if %2 {
      %cst = arith.constant 0.000000e+00 : f32
      %12 = vector.broadcast %cst : f32 to vector<1x2x128xf32>
      %c0_7 = arith.constant 0 : index
      %c0_8 = arith.constant 0 : index
      %c0_9 = arith.constant 0 : index
      %13 = vector.load %arg10[%c0_7, %c0_8, %c0_9] : memref<1x2x128xf32, #tpu.memory_space<vmem>>, vector<1x2x128xf32>
      tpu.vector_store %arg10[%c0_7, %c0_8, %c0_9], %12 {strides = array<i32>} : memref<1x2x128xf32, #tpu.memory_space<vmem>>, vector<1x2x128xf32>,
      %cst_10 = arith.constant 0.000000e+00 : f32
      %14 = vector.broadcast %cst_10 : f32 to vector<1x2x128xf32>
      %c0_11 = arith.constant 0 : index
      %c0_12 = arith.constant 0 : index
      %c0_13 = arith.constant 0 : index
      %15 = vector.load %arg11[%c0_11, %c0_12, %c0_13] : memref<1x2x128xf32, #tpu.memory_space<vmem>>, vector<1x2x128xf32>
      tpu.vector_store %arg11[%c0_11, %c0_12, %c0_13], %14 {strides = array<i32>} : memref<1x2x128xf32, #tpu.memory_space<vmem>>, vector<1x2x128xf32>,
    } else {
    }
    %c0 = arith.constant 0 : index
    %c0_1 = arith.constant 0 : index
    %3 = vector.load %arg4[%c0, %c0_1] : memref<1x128xf32, #tpu.memory_space<vmem>>, vector<1x128xf32>
    %c0_2 = arith.constant 0 : index
    %c0_3 = arith.constant 0 : index
    %4 = vector.load %arg5[%c0_2, %c0_3] : memref<1x128xf32, #tpu.memory_space<vmem>>, vector<1x128xf32>
    %c1_i32 = arith.constant 1 : i32
    %5 = arith.muli %arg0, %c1_i32 : i32
    %6 = arith.addi %5, %arg1 : i32
    %c1_i32_4 = arith.constant 1 : i32
    %7 = arith.muli %6, %c1_i32_4 : i32
    %c0_i32_5 = arith.constant 0 : i32
    %8 = arith.addi %7, %c0_i32_5 : i32
    %c2_i32 = arith.constant 2 : i32
    %9 = arith.cmpi slt, %8, %c2_i32 : i32
    %10 = arith.extui %9 : i1 to i32
    %c0_i32_6 = arith.constant 0 : i32
    %11 = arith.cmpi ne, %10, %c0_i32_6 : i32
    scf.if %11 {
      %c0_7 = arith.constant 0 : index
      %c0_8 = arith.constant 0 : index
      %c0_9 = arith.constant 0 : index
      %12 = vector.load %arg2[%c0_7, %c0_8, %c0_9] : memref<1x64x128xbf16, #tpu.memory_space<vmem>>, vector<1x64x128xbf16>
      %13 = vector.shape_cast %12 : vector<1x64x128xbf16> to vector<64x128xbf16>
      %14 = arith.extf %13 : vector<64x128xbf16> to vector<64x128xf32>
      %15 = vector.broadcast %3 : vector<1x128xf32> to vector<64x128xf32>
      %16 = arith.mulf %14, %15 : vector<64x128xf32>
      %17 = vector.broadcast %4 : vector<1x128xf32> to vector<64x128xf32>
      %18 = arith.addf %16, %17 : vector<64x128xf32>
      %cst = arith.constant 0.000000e+00 : f32
      %19 = vector.broadcast %cst : f32 to vector<64x128xf32>
      %20 = arith.maximumf %18, %19 : vector<64x128xf32>
      %21 = arith.truncf %20 : vector<64x128xf32> to vector<64x128xbf16>
      %22 = vector.shape_cast %21 : vector<64x128xbf16> to vector<8x8x128xbf16>
      %cst_10 = arith.constant 0.000000e+00 : bf16
      %23 = vector.broadcast %cst_10 : bf16 to vector<10x10x128xbf16>
      %c0_11 = arith.constant 0 : index
      %c0_12 = arith.constant 0 : index
      %c0_13 = arith.constant 0 : index
      %24 = vector.load %arg12[%c0_11, %c0_12, %c0_13] : memref<10x10x128xbf16, #tpu.memory_space<vmem>>, vector<10x10x128xbf16>
      tpu.vector_store %arg12[%c0_11, %c0_12, %c0_13], %23 {strides = array<i32>} : memref<10x10x128xbf16, #tpu.memory_space<vmem>>, vector<10x10x128xbf16>,
      %c1 = arith.constant 1 : index
      %c1_14 = arith.constant 1 : index
      %c0_15 = arith.constant 0 : index
      %25 = vector.load %arg12[%c1, %c1_14, %c0_15] : memref<10x10x128xbf16, #tpu.memory_space<vmem>>, vector<8x8x128xbf16>
      tpu.vector_store %arg12[%c1, %c1_14, %c0_15], %22 {strides = array<i32>} : memref<10x10x128xbf16, #tpu.memory_space<vmem>>, vector<8x8x128xbf16>,
      %cst_16 = arith.constant 0.000000e+00 : f32
      %26 = vector.broadcast %cst_16 : f32 to vector<64x128xf32>
      %c0_17 = arith.constant 0 : index
      %c0_18 = arith.constant 0 : index
      %27 = vector.load %arg13[%c0_17, %c0_18] : memref<64x128xf32, #tpu.memory_space<vmem>>, vector<64x128xf32>
      tpu.vector_store %arg13[%c0_17, %c0_18], %26 {strides = array<i32>} : memref<64x128xf32, #tpu.memory_space<vmem>>, vector<64x128xf32>,
      %c0_19 = arith.constant 0 : index
      %c0_20 = arith.constant 0 : index
      %c0_21 = arith.constant 0 : index
      %28 = vector.load %arg12[%c0_19, %c0_20, %c0_21] : memref<10x10x128xbf16, #tpu.memory_space<vmem>>, vector<8x8x128xbf16>
      %29 = vector.shape_cast %28 : vector<8x8x128xbf16> to vector<64x128xbf16>
      %c0_22 = arith.constant 0 : index
      %c0_23 = arith.constant 0 : index
      %30 = vector.load %arg13[%c0_22, %c0_23] : memref<64x128xf32, #tpu.memory_space<vmem>>, vector<64x128xf32>
      %c0_24 = arith.constant 0 : index
      %c0_25 = arith.constant 0 : index
      %c0_26 = arith.constant 0 : index
      %31 = vector.load %arg6[%c0_24, %c0_25, %c0_26] : memref<9x128x128xbf16, #tpu.memory_space<vmem>>, vector<1x128x128xbf16>
      %32 = vector.shape_cast %31 : vector<1x128x128xbf16> to vector<128x128xbf16>
      %cst_27 = arith.constant dense<0.000000e+00> : vector<64x128xf32>
      %33 = tpu.matmul %29, %32, %cst_27 {dimension_numbers = #tpu.dot_dimension_numbers<[1], [0], [0], [1], [0, 0, 1, 1], [], []>} : vector<64x128xbf16>, vector<128x128xbf16>, vector<64x128xf32> -> vector<64x128xf32>
      %34 = arith.addf %30, %33 : vector<64x128xf32>
      %c0_28 = arith.constant 0 : index
      %c0_29 = arith.constant 0 : index
      %35 = vector.load %arg13[%c0_28, %c0_29] : memref<64x128xf32, #tpu.memory_space<vmem>>, vector<64x128xf32>
      tpu.vector_store %arg13[%c0_28, %c0_29], %34 {strides = array<i32>} : memref<64x128xf32, #tpu.memory_space<vmem>>, vector<64x128xf32>,
      %c0_30 = arith.constant 0 : index
      %c1_31 = arith.constant 1 : index
      %c0_32 = arith.constant 0 : index
      %36 = vector.load %arg12[%c0_30, %c1_31, %c0_32] : memref<10x10x128xbf16, #tpu.memory_space<vmem>>, vector<8x8x128xbf16>
      %37 = vector.shape_cast %36 : vector<8x8x128xbf16> to vector<64x128xbf16>
      %c0_33 = arith.constant 0 : index
      %c0_34 = arith.constant 0 : index
      %38 = vector.load %arg13[%c0_33, %c0_34] : memref<64x128xf32, #tpu.memory_space<vmem>>, vector<64x128xf32>
      %c1_35 = arith.constant 1 : index
      %c0_36 = arith.constant 0 : index
      %c0_37 = arith.constant 0 : index
      %39 = vector.load %arg6[%c1_35, %c0_36, %c0_37] : memref<9x128x128xbf16, #tpu.memory_space<vmem>>, vector<1x128x128xbf16>
      %40 = vector.shape_cast %39 : vector<1x128x128xbf16> to vector<128x128xbf16>
      %cst_38 = arith.constant dense<0.000000e+00> : vector<64x128xf32>
      %41 = tpu.matmul %37, %40, %cst_38 {dimension_numbers = #tpu.dot_dimension_numbers<[1], [0], [0], [1], [0, 0, 1, 1], [], []>} : vector<64x128xbf16>, vector<128x128xbf16>, vector<64x128xf32> -> vector<64x128xf32>
      %42 = arith.addf %38, %41 : vector<64x128xf32>
      %c0_39 = arith.constant 0 : index
      %c0_40 = arith.constant 0 : index
      %43 = vector.load %arg13[%c0_39, %c0_40] : memref<64x128xf32, #tpu.memory_space<vmem>>, vector<64x128xf32>
      tpu.vector_store %arg13[%c0_39, %c0_40], %42 {strides = array<i32>} : memref<64x128xf32, #tpu.memory_space<vmem>>, vector<64x128xf32>,
      %c0_41 = arith.constant 0 : index
      %c2 = arith.constant 2 : index
      %c0_42 = arith.constant 0 : index
      %44 = vector.load %arg12[%c0_41, %c2, %c0_42] : memref<10x10x128xbf16, #tpu.memory_space<vmem>>, vector<8x8x128xbf16>
      %45 = vector.shape_cast %44 : vector<8x8x128xbf16> to vector<64x128xbf16>
      %c0_43 = arith.constant 0 : index
      %c0_44 = arith.constant 0 : index
      %46 = vector.load %arg13[%c0_43, %c0_44] : memref<64x128xf32, #tpu.memory_space<vmem>>, vector<64x128xf32>
      %c2_45 = arith.constant 2 : index
      %c0_46 = arith.constant 0 : index
      %c0_47 = arith.constant 0 : index
      %47 = vector.load %arg6[%c2_45, %c0_46, %c0_47] : memref<9x128x128xbf16, #tpu.memory_space<vmem>>, vector<1x128x128xbf16>
      %48 = vector.shape_cast %47 : vector<1x128x128xbf16> to vector<128x128xbf16>
      %cst_48 = arith.constant dense<0.000000e+00> : vector<64x128xf32>
      %49 = tpu.matmul %45, %48, %cst_48 {dimension_numbers = #tpu.dot_dimension_numbers<[1], [0], [0], [1], [0, 0, 1, 1], [], []>} : vector<64x128xbf16>, vector<128x128xbf16>, vector<64x128xf32> -> vector<64x128xf32>
      %50 = arith.addf %46, %49 : vector<64x128xf32>
      %c0_49 = arith.constant 0 : index
      %c0_50 = arith.constant 0 : index
      %51 = vector.load %arg13[%c0_49, %c0_50] : memref<64x128xf32, #tpu.memory_space<vmem>>, vector<64x128xf32>
      tpu.vector_store %arg13[%c0_49, %c0_50], %50 {strides = array<i32>} : memref<64x128xf32, #tpu.memory_space<vmem>>, vector<64x128xf32>,
      %c1_51 = arith.constant 1 : index
      %c0_52 = arith.constant 0 : index
      %c0_53 = arith.constant 0 : index
      %52 = vector.load %arg12[%c1_51, %c0_52, %c0_53] : memref<10x10x128xbf16, #tpu.memory_space<vmem>>, vector<8x8x128xbf16>
      %53 = vector.shape_cast %52 : vector<8x8x128xbf16> to vector<64x128xbf16>
      %c0_54 = arith.constant 0 : index
      %c0_55 = arith.constant 0 : index
      %54 = vector.load %arg13[%c0_54, %c0_55] : memref<64x128xf32, #tpu.memory_space<vmem>>, vector<64x128xf32>
      %c3 = arith.constant 3 : index
      %c0_56 = arith.constant 0 : index
      %c0_57 = arith.constant 0 : index
      %55 = vector.load %arg6[%c3, %c0_56, %c0_57] : memref<9x128x128xbf16, #tpu.memory_space<vmem>>, vector<1x128x128xbf16>
      %56 = vector.shape_cast %55 : vector<1x128x128xbf16> to vector<128x128xbf16>
      %cst_58 = arith.constant dense<0.000000e+00> : vector<64x128xf32>
      %57 = tpu.matmul %53, %56, %cst_58 {dimension_numbers = #tpu.dot_dimension_numbers<[1], [0], [0], [1], [0, 0, 1, 1], [], []>} : vector<64x128xbf16>, vector<128x128xbf16>, vector<64x128xf32> -> vector<64x128xf32>
      %58 = arith.addf %54, %57 : vector<64x128xf32>
      %c0_59 = arith.constant 0 : index
      %c0_60 = arith.constant 0 : index
      %59 = vector.load %arg13[%c0_59, %c0_60] : memref<64x128xf32, #tpu.memory_space<vmem>>, vector<64x128xf32>
      tpu.vector_store %arg13[%c0_59, %c0_60], %58 {strides = array<i32>} : memref<64x128xf32, #tpu.memory_space<vmem>>, vector<64x128xf32>,
      %c1_61 = arith.constant 1 : index
      %c1_62 = arith.constant 1 : index
      %c0_63 = arith.constant 0 : index
      %60 = vector.load %arg12[%c1_61, %c1_62, %c0_63] : memref<10x10x128xbf16, #tpu.memory_space<vmem>>, vector<8x8x128xbf16>
      %61 = vector.shape_cast %60 : vector<8x8x128xbf16> to vector<64x128xbf16>
      %c0_64 = arith.constant 0 : index
      %c0_65 = arith.constant 0 : index
      %62 = vector.load %arg13[%c0_64, %c0_65] : memref<64x128xf32, #tpu.memory_space<vmem>>, vector<64x128xf32>
      %c4 = arith.constant 4 : index
      %c0_66 = arith.constant 0 : index
      %c0_67 = arith.constant 0 : index
      %63 = vector.load %arg6[%c4, %c0_66, %c0_67] : memref<9x128x128xbf16, #tpu.memory_space<vmem>>, vector<1x128x128xbf16>
      %64 = vector.shape_cast %63 : vector<1x128x128xbf16> to vector<128x128xbf16>
      %cst_68 = arith.constant dense<0.000000e+00> : vector<64x128xf32>
      %65 = tpu.matmul %61, %64, %cst_68 {dimension_numbers = #tpu.dot_dimension_numbers<[1], [0], [0], [1], [0, 0, 1, 1], [], []>} : vector<64x128xbf16>, vector<128x128xbf16>, vector<64x128xf32> -> vector<64x128xf32>
      %66 = arith.addf %62, %65 : vector<64x128xf32>
      %c0_69 = arith.constant 0 : index
      %c0_70 = arith.constant 0 : index
      %67 = vector.load %arg13[%c0_69, %c0_70] : memref<64x128xf32, #tpu.memory_space<vmem>>, vector<64x128xf32>
      tpu.vector_store %arg13[%c0_69, %c0_70], %66 {strides = array<i32>} : memref<64x128xf32, #tpu.memory_space<vmem>>, vector<64x128xf32>,
      %c1_71 = arith.constant 1 : index
      %c2_72 = arith.constant 2 : index
      %c0_73 = arith.constant 0 : index
      %68 = vector.load %arg12[%c1_71, %c2_72, %c0_73] : memref<10x10x128xbf16, #tpu.memory_space<vmem>>, vector<8x8x128xbf16>
      %69 = vector.shape_cast %68 : vector<8x8x128xbf16> to vector<64x128xbf16>
      %c0_74 = arith.constant 0 : index
      %c0_75 = arith.constant 0 : index
      %70 = vector.load %arg13[%c0_74, %c0_75] : memref<64x128xf32, #tpu.memory_space<vmem>>, vector<64x128xf32>
      %c5 = arith.constant 5 : index
      %c0_76 = arith.constant 0 : index
      %c0_77 = arith.constant 0 : index
      %71 = vector.load %arg6[%c5, %c0_76, %c0_77] : memref<9x128x128xbf16, #tpu.memory_space<vmem>>, vector<1x128x128xbf16>
      %72 = vector.shape_cast %71 : vector<1x128x128xbf16> to vector<128x128xbf16>
      %cst_78 = arith.constant dense<0.000000e+00> : vector<64x128xf32>
      %73 = tpu.matmul %69, %72, %cst_78 {dimension_numbers = #tpu.dot_dimension_numbers<[1], [0], [0], [1], [0, 0, 1, 1], [], []>} : vector<64x128xbf16>, vector<128x128xbf16>, vector<64x128xf32> -> vector<64x128xf32>
      %74 = arith.addf %70, %73 : vector<64x128xf32>
      %c0_79 = arith.constant 0 : index
      %c0_80 = arith.constant 0 : index
      %75 = vector.load %arg13[%c0_79, %c0_80] : memref<64x128xf32, #tpu.memory_space<vmem>>, vector<64x128xf32>
      tpu.vector_store %arg13[%c0_79, %c0_80], %74 {strides = array<i32>} : memref<64x128xf32, #tpu.memory_space<vmem>>, vector<64x128xf32>,
      %c2_81 = arith.constant 2 : index
      %c0_82 = arith.constant 0 : index
      %c0_83 = arith.constant 0 : index
      %76 = vector.load %arg12[%c2_81, %c0_82, %c0_83] : memref<10x10x128xbf16, #tpu.memory_space<vmem>>, vector<8x8x128xbf16>
      %77 = vector.shape_cast %76 : vector<8x8x128xbf16> to vector<64x128xbf16>
      %c0_84 = arith.constant 0 : index
      %c0_85 = arith.constant 0 : index
      %78 = vector.load %arg13[%c0_84, %c0_85] : memref<64x128xf32, #tpu.memory_space<vmem>>, vector<64x128xf32>
      %c6 = arith.constant 6 : index
      %c0_86 = arith.constant 0 : index
      %c0_87 = arith.constant 0 : index
      %79 = vector.load %arg6[%c6, %c0_86, %c0_87] : memref<9x128x128xbf16, #tpu.memory_space<vmem>>, vector<1x128x128xbf16>
      %80 = vector.shape_cast %79 : vector<1x128x128xbf16> to vector<128x128xbf16>
      %cst_88 = arith.constant dense<0.000000e+00> : vector<64x128xf32>
      %81 = tpu.matmul %77, %80, %cst_88 {dimension_numbers = #tpu.dot_dimension_numbers<[1], [0], [0], [1], [0, 0, 1, 1], [], []>} : vector<64x128xbf16>, vector<128x128xbf16>, vector<64x128xf32> -> vector<64x128xf32>
      %82 = arith.addf %78, %81 : vector<64x128xf32>
      %c0_89 = arith.constant 0 : index
      %c0_90 = arith.constant 0 : index
      %83 = vector.load %arg13[%c0_89, %c0_90] : memref<64x128xf32, #tpu.memory_space<vmem>>, vector<64x128xf32>
      tpu.vector_store %arg13[%c0_89, %c0_90], %82 {strides = array<i32>} : memref<64x128xf32, #tpu.memory_space<vmem>>, vector<64x128xf32>,
      %c2_91 = arith.constant 2 : index
      %c1_92 = arith.constant 1 : index
      %c0_93 = arith.constant 0 : index
      %84 = vector.load %arg12[%c2_91, %c1_92, %c0_93] : memref<10x10x128xbf16, #tpu.memory_space<vmem>>, vector<8x8x128xbf16>
      %85 = vector.shape_cast %84 : vector<8x8x128xbf16> to vector<64x128xbf16>
      %c0_94 = arith.constant 0 : index
      %c0_95 = arith.constant 0 : index
      %86 = vector.load %arg13[%c0_94, %c0_95] : memref<64x128xf32, #tpu.memory_space<vmem>>, vector<64x128xf32>
      %c7 = arith.constant 7 : index
      %c0_96 = arith.constant 0 : index
      %c0_97 = arith.constant 0 : index
      %87 = vector.load %arg6[%c7, %c0_96, %c0_97] : memref<9x128x128xbf16, #tpu.memory_space<vmem>>, vector<1x128x128xbf16>
      %88 = vector.shape_cast %87 : vector<1x128x128xbf16> to vector<128x128xbf16>
      %cst_98 = arith.constant dense<0.000000e+00> : vector<64x128xf32>
      %89 = tpu.matmul %85, %88, %cst_98 {dimension_numbers = #tpu.dot_dimension_numbers<[1], [0], [0], [1], [0, 0, 1, 1], [], []>} : vector<64x128xbf16>, vector<128x128xbf16>, vector<64x128xf32> -> vector<64x128xf32>
      %90 = arith.addf %86, %89 : vector<64x128xf32>
      %c0_99 = arith.constant 0 : index
      %c0_100 = arith.constant 0 : index
      %91 = vector.load %arg13[%c0_99, %c0_100] : memref<64x128xf32, #tpu.memory_space<vmem>>, vector<64x128xf32>
      tpu.vector_store %arg13[%c0_99, %c0_100], %90 {strides = array<i32>} : memref<64x128xf32, #tpu.memory_space<vmem>>, vector<64x128xf32>,
      %c2_101 = arith.constant 2 : index
      %c2_102 = arith.constant 2 : index
      %c0_103 = arith.constant 0 : index
      %92 = vector.load %arg12[%c2_101, %c2_102, %c0_103] : memref<10x10x128xbf16, #tpu.memory_space<vmem>>, vector<8x8x128xbf16>
      %93 = vector.shape_cast %92 : vector<8x8x128xbf16> to vector<64x128xbf16>
      %c0_104 = arith.constant 0 : index
      %c0_105 = arith.constant 0 : index
      %94 = vector.load %arg13[%c0_104, %c0_105] : memref<64x128xf32, #tpu.memory_space<vmem>>, vector<64x128xf32>
      %c8 = arith.constant 8 : index
      %c0_106 = arith.constant 0 : index
      %c0_107 = arith.constant 0 : index
      %95 = vector.load %arg6[%c8, %c0_106, %c0_107] : memref<9x128x128xbf16, #tpu.memory_space<vmem>>, vector<1x128x128xbf16>
      %96 = vector.shape_cast %95 : vector<1x128x128xbf16> to vector<128x128xbf16>
      %cst_108 = arith.constant dense<0.000000e+00> : vector<64x128xf32>
      %97 = tpu.matmul %93, %96, %cst_108 {dimension_numbers = #tpu.dot_dimension_numbers<[1], [0], [0], [1], [0, 0, 1, 1], [], []>} : vector<64x128xbf16>, vector<128x128xbf16>, vector<64x128xf32> -> vector<64x128xf32>
      %98 = arith.addf %94, %97 : vector<64x128xf32>
      %c0_109 = arith.constant 0 : index
      %c0_110 = arith.constant 0 : index
      %99 = vector.load %arg13[%c0_109, %c0_110] : memref<64x128xf32, #tpu.memory_space<vmem>>, vector<64x128xf32>
      tpu.vector_store %arg13[%c0_109, %c0_110], %98 {strides = array<i32>} : memref<64x128xf32, #tpu.memory_space<vmem>>, vector<64x128xf32>,
      %c0_111 = arith.constant 0 : index
      %c0_112 = arith.constant 0 : index
      %100 = vector.load %arg13[%c0_111, %c0_112] : memref<64x128xf32, #tpu.memory_space<vmem>>, vector<64x128xf32>
      %101 = arith.truncf %100 : vector<64x128xf32> to vector<64x128xbf16>
      %c0_113 = arith.constant 0 : index
      %c0_114 = arith.constant 0 : index
      %c0_115 = arith.constant 0 : index
      %102 = vector.load %arg8[%c0_113, %c0_114, %c0_115] : memref<1x64x128xbf16, #tpu.memory_space<vmem>>, vector<1x64x128xbf16>
      %103 = vector.shape_cast %102 : vector<1x64x128xbf16> to vector<64x128xbf16>
      %104 = vector.shape_cast %101 : vector<64x128xbf16> to vector<1x64x128xbf16>
      tpu.vector_store %arg8[%c0_113, %c0_114, %c0_115], %104 {strides = array<i32>} : memref<1x64x128xbf16, #tpu.memory_space<vmem>>, vector<1x64x128xbf16>,
      %c0_116 = arith.constant 0 : index
      %c0_117 = arith.constant 0 : index
      %c0_118 = arith.constant 0 : index
      %105 = vector.load %arg10[%c0_116, %c0_117, %c0_118] : memref<1x2x128xf32, #tpu.memory_space<vmem>>, vector<1x1x128xf32>
      %106 = vector.shape_cast %105 : vector<1x1x128xf32> to vector<1x128xf32>
      %cst_119 = arith.constant dense<0.000000e+00> : vector<128xf32>
      %107 = vector.multi_reduction <add>, %100, %cst_119 [0] : vector<64x128xf32> to vector<128xf32>
      %108 = vector.shape_cast %107 : vector<128xf32> to vector<1x128xf32>
      %109 = arith.addf %106, %108 : vector<1x128xf32>
      %c0_120 = arith.constant 0 : index
      %c0_121 = arith.constant 0 : index
      %c0_122 = arith.constant 0 : index
      %110 = vector.load %arg10[%c0_120, %c0_121, %c0_122] : memref<1x2x128xf32, #tpu.memory_space<vmem>>, vector<1x1x128xf32>
      %111 = vector.shape_cast %110 : vector<1x1x128xf32> to vector<1x128xf32>
      %112 = vector.shape_cast %109 : vector<1x128xf32> to vector<1x1x128xf32>
      tpu.vector_store %arg10[%c0_120, %c0_121, %c0_122], %112 {strides = array<i32>} : memref<1x2x128xf32, #tpu.memory_space<vmem>>, vector<1x1x128xf32>,
      %c0_123 = arith.constant 0 : index
      %c1_124 = arith.constant 1 : index
      %c0_125 = arith.constant 0 : index
      %113 = vector.load %arg10[%c0_123, %c1_124, %c0_125] : memref<1x2x128xf32, #tpu.memory_space<vmem>>, vector<1x1x128xf32>
      %114 = vector.shape_cast %113 : vector<1x1x128xf32> to vector<1x128xf32>
      %115 = arith.mulf %100, %100 : vector<64x128xf32>
      %cst_126 = arith.constant dense<0.000000e+00> : vector<128xf32>
      %116 = vector.multi_reduction <add>, %115, %cst_126 [0] : vector<64x128xf32> to vector<128xf32>
      %117 = vector.shape_cast %116 : vector<128xf32> to vector<1x128xf32>
      %118 = arith.addf %114, %117 : vector<1x128xf32>
      %c0_127 = arith.constant 0 : index
      %c1_128 = arith.constant 1 : index
      %c0_129 = arith.constant 0 : index
      %119 = vector.load %arg10[%c0_127, %c1_128, %c0_129] : memref<1x2x128xf32, #tpu.memory_space<vmem>>, vector<1x1x128xf32>
      %120 = vector.shape_cast %119 : vector<1x1x128xf32> to vector<1x128xf32>
      %121 = vector.shape_cast %118 : vector<1x128xf32> to vector<1x1x128xf32>
      tpu.vector_store %arg10[%c0_127, %c1_128, %c0_129], %121 {strides = array<i32>} : memref<1x2x128xf32, #tpu.memory_space<vmem>>, vector<1x1x128xf32>,
      %c0_130 = arith.constant 0 : index
      %c0_131 = arith.constant 0 : index
      %c0_132 = arith.constant 0 : index
      %122 = vector.load %arg3[%c0_130, %c0_131, %c0_132] : memref<1x64x8xbf16, #tpu.memory_space<vmem>>, vector<1x64x8xbf16>
      %123 = vector.shape_cast %122 : vector<1x64x8xbf16> to vector<64x8xbf16>
      %c0_133 = arith.constant 0 : index
      %c0_134 = arith.constant 0 : index
      %124 = vector.load %arg7[%c0_133, %c0_134] : memref<8x128xbf16, #tpu.memory_space<vmem>>, vector<8x128xbf16>
      %cst_135 = arith.constant dense<0.000000e+00> : vector<64x128xf32>
      %125 = tpu.matmul %123, %124, %cst_135 {dimension_numbers = #tpu.dot_dimension_numbers<[1], [0], [0], [1], [0, 0, 1, 1], [], []>} : vector<64x8xbf16>, vector<8x128xbf16>, vector<64x128xf32> -> vector<64x128xf32>
      %126 = arith.truncf %125 : vector<64x128xf32> to vector<64x128xbf16>
      %c0_136 = arith.constant 0 : index
      %c0_137 = arith.constant 0 : index
      %c0_138 = arith.constant 0 : index
      %127 = vector.load %arg9[%c0_136, %c0_137, %c0_138] : memref<1x64x128xbf16, #tpu.memory_space<vmem>>, vector<1x64x128xbf16>
      %128 = vector.shape_cast %127 : vector<1x64x128xbf16> to vector<64x128xbf16>
      %129 = vector.shape_cast %126 : vector<64x128xbf16> to vector<1x64x128xbf16>
      tpu.vector_store %arg9[%c0_136, %c0_137, %c0_138], %129 {strides = array<i32>} : memref<1x64x128xbf16, #tpu.memory_space<vmem>>, vector<1x64x128xbf16>,
      %c0_139 = arith.constant 0 : index
      %c0_140 = arith.constant 0 : index
      %c0_141 = arith.constant 0 : index
      %130 = vector.load %arg11[%c0_139, %c0_140, %c0_141] : memref<1x2x128xf32, #tpu.memory_space<vmem>>, vector<1x1x128xf32>
      %131 = vector.shape_cast %130 : vector<1x1x128xf32> to vector<1x128xf32>
      %cst_142 = arith.constant dense<0.000000e+00> : vector<128xf32>
      %132 = vector.multi_reduction <add>, %125, %cst_142 [0] : vector<64x128xf32> to vector<128xf32>
      %133 = vector.shape_cast %132 : vector<128xf32> to vector<1x128xf32>
      %134 = arith.addf %131, %133 : vector<1x128xf32>
      %c0_143 = arith.constant 0 : index
      %c0_144 = arith.constant 0 : index
      %c0_145 = arith.constant 0 : index
      %135 = vector.load %arg11[%c0_143, %c0_144, %c0_145] : memref<1x2x128xf32, #tpu.memory_space<vmem>>, vector<1x1x128xf32>
      %136 = vector.shape_cast %135 : vector<1x1x128xf32> to vector<1x128xf32>
      %137 = vector.shape_cast %134 : vector<1x128xf32> to vector<1x1x128xf32>
      tpu.vector_store %arg11[%c0_143, %c0_144, %c0_145], %137 {strides = array<i32>} : memref<1x2x128xf32, #tpu.memory_space<vmem>>, vector<1x1x128xf32>,
      %c0_146 = arith.constant 0 : index
      %c1_147 = arith.constant 1 : index
      %c0_148 = arith.constant 0 : index
      %138 = vector.load %arg11[%c0_146, %c1_147, %c0_148] : memref<1x2x128xf32, #tpu.memory_space<vmem>>, vector<1x1x128xf32>
      %139 = vector.shape_cast %138 : vector<1x1x128xf32> to vector<1x128xf32>
      %140 = arith.mulf %125, %125 : vector<64x128xf32>
      %cst_149 = arith.constant dense<0.000000e+00> : vector<128xf32>
      %141 = vector.multi_reduction <add>, %140, %cst_149 [0] : vector<64x128xf32> to vector<128xf32>
      %142 = vector.shape_cast %141 : vector<128xf32> to vector<1x128xf32>
      %143 = arith.addf %139, %142 : vector<1x128xf32>
      %c0_150 = arith.constant 0 : index
      %c1_151 = arith.constant 1 : index
      %c0_152 = arith.constant 0 : index
      %144 = vector.load %arg11[%c0_150, %c1_151, %c0_152] : memref<1x2x128xf32, #tpu.memory_space<vmem>>, vector<1x1x128xf32>
      %145 = vector.shape_cast %144 : vector<1x1x128xf32> to vector<1x128xf32>
      %146 = vector.shape_cast %143 : vector<1x128xf32> to vector<1x1x128xf32>
      tpu.vector_store %arg11[%c0_150, %c1_151, %c0_152], %146 {strides = array<i32>} : memref<1x2x128xf32, #tpu.memory_space<vmem>>, vector<1x1x128xf32>,
    } else {
    }
    return
  }
  func.func @transform_0(%arg0: i32, %arg1: i32) -> (i32, i32, i32) {
    %c1_i32 = arith.constant 1 : i32
    %0 = arith.muli %arg0, %c1_i32 : i32
    %1 = arith.addi %0, %arg1 : i32
    %c0_i32 = arith.constant 0 : i32
    %c0_i32_0 = arith.constant 0 : i32
    %c0_i32_1 = arith.constant 0 : i32
    return %1, %c0_i32, %c0_i32_0 : i32, i32, i32
  }
  func.func @transform_1(%arg0: i32, %arg1: i32) -> (i32, i32, i32) {
    %c1_i32 = arith.constant 1 : i32
    %0 = arith.muli %arg0, %c1_i32 : i32
    %1 = arith.addi %0, %arg1 : i32
    %c0_i32 = arith.constant 0 : i32
    %c0_i32_0 = arith.constant 0 : i32
    %c0_i32_1 = arith.constant 0 : i32
    return %1, %c0_i32, %c0_i32_0 : i32, i32, i32
  }
  func.func @transform_2(%arg0: i32, %arg1: i32) -> (i32, i32) {
    %c0_i32 = arith.constant 0 : i32
    %c0_i32_0 = arith.constant 0 : i32
    %c0_i32_1 = arith.constant 0 : i32
    return %c0_i32, %c0_i32_0 : i32, i32
  }
  func.func @transform_3(%arg0: i32, %arg1: i32) -> (i32, i32) {
    %c0_i32 = arith.constant 0 : i32
    %c0_i32_0 = arith.constant 0 : i32
    %c0_i32_1 = arith.constant 0 : i32
    return %c0_i32, %c0_i32_0 : i32, i32
  }
  func.func @transform_4(%arg0: i32, %arg1: i32) -> (i32, i32, i32) {
    %c0_i32 = arith.constant 0 : i32
    %c0_i32_0 = arith.constant 0 : i32
    %c0_i32_1 = arith.constant 0 : i32
    %c0_i32_2 = arith.constant 0 : i32
    return %c0_i32, %c0_i32_0, %c0_i32_1 : i32, i32, i32
  }
  func.func @transform_5(%arg0: i32, %arg1: i32) -> (i32, i32) {
    %c0_i32 = arith.constant 0 : i32
    %c0_i32_0 = arith.constant 0 : i32
    %c0_i32_1 = arith.constant 0 : i32
    return %c0_i32, %c0_i32_0 : i32, i32
  }
  func.func @transform_6(%arg0: i32, %arg1: i32) -> (i32, i32, i32) {
    %c1_i32 = arith.constant 1 : i32
    %0 = arith.muli %arg0, %c1_i32 : i32
    %1 = arith.addi %0, %arg1 : i32
    %c0_i32 = arith.constant 0 : i32
    %c0_i32_0 = arith.constant 0 : i32
    %c0_i32_1 = arith.constant 0 : i32
    return %1, %c0_i32, %c0_i32_0 : i32, i32, i32
  }
  func.func @transform_7(%arg0: i32, %arg1: i32) -> (i32, i32, i32) {
    %c1_i32 = arith.constant 1 : i32
    %0 = arith.muli %arg0, %c1_i32 : i32
    %1 = arith.addi %0, %arg1 : i32
    %c0_i32 = arith.constant 0 : i32
    %c0_i32_0 = arith.constant 0 : i32
    %c0_i32_1 = arith.constant 0 : i32
    return %1, %c0_i32, %c0_i32_0 : i32, i32, i32
  }
  func.func @transform_8(%arg0: i32, %arg1: i32) -> (i32, i32, i32) {
    %c0_i32 = arith.constant 0 : i32
    %c0_i32_0 = arith.constant 0 : i32
    %c0_i32_1 = arith.constant 0 : i32
    return %arg0, %c0_i32, %c0_i32_0 : i32, i32, i32
  }
  func.func @transform_9(%arg0: i32, %arg1: i32) -> (i32, i32, i32) {
    %c0_i32 = arith.constant 0 : i32
    %c0_i32_0 = arith.constant 0 : i32
    %c0_i32_1 = arith.constant 0 : i32
    return %arg0, %c0_i32, %c0_i32_0 : i32, i32, i32
  }
}

module attributes {stable_mosaic.version = 11 : i64} {
  func.func @kernel(%arg0: i32, %arg1: i32, %arg2: memref<1x64x40xbf16, #tpu.memory_space<vmem>>, %arg3: memref<40x128xbf16, #tpu.memory_space<vmem>>, %arg4: memref<1x64x128xbf16, #tpu.memory_space<vmem>>, %arg5: memref<1x2x128xf32, #tpu.memory_space<vmem>>) attributes {dimension_semantics = [#tpu.dimension_semantics<parallel>, #tpu.dimension_semantics<arbitrary>], iteration_bounds = array<i64: 2, 1>, scalar_prefetch = 0 : i64, scratch_operands = 0 : i64, tpu.core_type = #tpu.core_type<tc>, window_params = [{transform_indices = @transform_0, window_bounds = array<i64: 1, 64, 40>}, {pipeline_mode = #tpu.pipeline_mode<synchronous>, transform_indices = @transform_1, window_bounds = array<i64: 40, 128>}, {transform_indices = @transform_2, window_bounds = array<i64: 1, 64, 128>}, {transform_indices = @transform_3, window_bounds = array<i64: 1, 2, 128>}]} {
    %c0_i32 = arith.constant 0 : i32
    %0 = arith.cmpi eq, %arg1, %c0_i32 : i32
    %1 = arith.extui %0 : i1 to i32
    %c0_i32_0 = arith.constant 0 : i32
    %2 = arith.cmpi ne, %1, %c0_i32_0 : i32
    scf.if %2 {
      %cst_21 = arith.constant 0.000000e+00 : f32
      %27 = vector.broadcast %cst_21 : f32 to vector<1x2x128xf32>
      %c0_22 = arith.constant 0 : index
      %c0_23 = arith.constant 0 : index
      %c0_24 = arith.constant 0 : index
      %28 = vector.load %arg5[%c0_22, %c0_23, %c0_24] : memref<1x2x128xf32, #tpu.memory_space<vmem>>, vector<1x2x128xf32>
      tpu.vector_store %arg5[%c0_22, %c0_23, %c0_24], %27 {strides = array<i32>} : memref<1x2x128xf32, #tpu.memory_space<vmem>>, vector<1x2x128xf32>,
    } else {
    }
    %c0 = arith.constant 0 : index
    %c0_1 = arith.constant 0 : index
    %c0_2 = arith.constant 0 : index
    %3 = vector.load %arg2[%c0, %c0_1, %c0_2] : memref<1x64x40xbf16, #tpu.memory_space<vmem>>, vector<1x64x40xbf16>
    %4 = vector.shape_cast %3 : vector<1x64x40xbf16> to vector<64x40xbf16>
    %c0_3 = arith.constant 0 : index
    %c0_4 = arith.constant 0 : index
    %5 = vector.load %arg3[%c0_3, %c0_4] : memref<40x128xbf16, #tpu.memory_space<vmem>>, vector<40x128xbf16>
    %cst = arith.constant dense<0.000000e+00> : vector<64x128xf32>
    %6 = tpu.matmul %4, %5, %cst {dimension_numbers = #tpu.dot_dimension_numbers<[1], [0], [0], [1], [0, 0, 1, 1], [], []>} : vector<64x40xbf16>, vector<40x128xbf16>, vector<64x128xf32> -> vector<64x128xf32>
    %7 = arith.truncf %6 : vector<64x128xf32> to vector<64x128xbf16>
    %8 = vector.shape_cast %7 : vector<64x128xbf16> to vector<1x64x128xbf16>
    %c0_5 = arith.constant 0 : index
    %c0_6 = arith.constant 0 : index
    %c0_7 = arith.constant 0 : index
    %9 = vector.load %arg4[%c0_5, %c0_6, %c0_7] : memref<1x64x128xbf16, #tpu.memory_space<vmem>>, vector<1x64x128xbf16>
    tpu.vector_store %arg4[%c0_5, %c0_6, %c0_7], %8 {strides = array<i32>} : memref<1x64x128xbf16, #tpu.memory_space<vmem>>, vector<1x64x128xbf16>,
    %c0_8 = arith.constant 0 : index
    %c0_9 = arith.constant 0 : index
    %c0_10 = arith.constant 0 : index
    %10 = vector.load %arg5[%c0_8, %c0_9, %c0_10] : memref<1x2x128xf32, #tpu.memory_space<vmem>>, vector<1x1x128xf32>
    %11 = vector.shape_cast %10 : vector<1x1x128xf32> to vector<1x128xf32>
    %cst_11 = arith.constant dense<0.000000e+00> : vector<128xf32>
    %12 = vector.multi_reduction <add>, %6, %cst_11 [0] : vector<64x128xf32> to vector<128xf32>
    %13 = vector.shape_cast %12 : vector<128xf32> to vector<1x128xf32>
    %14 = arith.addf %11, %13 : vector<1x128xf32>
    %c0_12 = arith.constant 0 : index
    %c0_13 = arith.constant 0 : index
    %c0_14 = arith.constant 0 : index
    %15 = vector.load %arg5[%c0_12, %c0_13, %c0_14] : memref<1x2x128xf32, #tpu.memory_space<vmem>>, vector<1x1x128xf32>
    %16 = vector.shape_cast %15 : vector<1x1x128xf32> to vector<1x128xf32>
    %17 = vector.shape_cast %14 : vector<1x128xf32> to vector<1x1x128xf32>
    tpu.vector_store %arg5[%c0_12, %c0_13, %c0_14], %17 {strides = array<i32>} : memref<1x2x128xf32, #tpu.memory_space<vmem>>, vector<1x1x128xf32>,
    %c0_15 = arith.constant 0 : index
    %c1 = arith.constant 1 : index
    %c0_16 = arith.constant 0 : index
    %18 = vector.load %arg5[%c0_15, %c1, %c0_16] : memref<1x2x128xf32, #tpu.memory_space<vmem>>, vector<1x1x128xf32>
    %19 = vector.shape_cast %18 : vector<1x1x128xf32> to vector<1x128xf32>
    %20 = arith.mulf %6, %6 : vector<64x128xf32>
    %cst_17 = arith.constant dense<0.000000e+00> : vector<128xf32>
    %21 = vector.multi_reduction <add>, %20, %cst_17 [0] : vector<64x128xf32> to vector<128xf32>
    %22 = vector.shape_cast %21 : vector<128xf32> to vector<1x128xf32>
    %23 = arith.addf %19, %22 : vector<1x128xf32>
    %c0_18 = arith.constant 0 : index
    %c1_19 = arith.constant 1 : index
    %c0_20 = arith.constant 0 : index
    %24 = vector.load %arg5[%c0_18, %c1_19, %c0_20] : memref<1x2x128xf32, #tpu.memory_space<vmem>>, vector<1x1x128xf32>
    %25 = vector.shape_cast %24 : vector<1x1x128xf32> to vector<1x128xf32>
    %26 = vector.shape_cast %23 : vector<1x128xf32> to vector<1x1x128xf32>
    tpu.vector_store %arg5[%c0_18, %c1_19, %c0_20], %26 {strides = array<i32>} : memref<1x2x128xf32, #tpu.memory_space<vmem>>, vector<1x1x128xf32>,
    return
  }
  func.func @transform_0(%arg0: i32, %arg1: i32) -> (i32, i32, i32) {
    %c1_i32 = arith.constant 1 : i32
    %0 = arith.muli %arg0, %c1_i32 : i32
    %1 = arith.addi %0, %arg1 : i32
    %c0_i32 = arith.constant 0 : i32
    %c0_i32_0 = arith.constant 0 : i32
    %c0_i32_1 = arith.constant 0 : i32
    return %1, %c0_i32, %c0_i32_0 : i32, i32, i32
  }
  func.func @transform_1(%arg0: i32, %arg1: i32) -> (i32, i32) {
    %c0_i32 = arith.constant 0 : i32
    %c0_i32_0 = arith.constant 0 : i32
    %c0_i32_1 = arith.constant 0 : i32
    return %c0_i32, %c0_i32_0 : i32, i32
  }
  func.func @transform_2(%arg0: i32, %arg1: i32) -> (i32, i32, i32) {
    %c1_i32 = arith.constant 1 : i32
    %0 = arith.muli %arg0, %c1_i32 : i32
    %1 = arith.addi %0, %arg1 : i32
    %c0_i32 = arith.constant 0 : i32
    %c0_i32_0 = arith.constant 0 : i32
    %c0_i32_1 = arith.constant 0 : i32
    return %1, %c0_i32, %c0_i32_0 : i32, i32, i32
  }
  func.func @transform_3(%arg0: i32, %arg1: i32) -> (i32, i32, i32) {
    %c0_i32 = arith.constant 0 : i32
    %c0_i32_0 = arith.constant 0 : i32
    %c0_i32_1 = arith.constant 0 : i32
    return %arg0, %c0_i32, %c0_i32_0 : i32, i32, i32
  }
}

module attributes {stable_mosaic.version = 11 : i64} {
  func.func @kernel(%arg0: i32, %arg1: memref<1x64x128xbf16, #tpu.memory_space<vmem>>, %arg2: memref<1x64x128xbf16, #tpu.memory_space<vmem>>, %arg3: memref<1x128xf32, #tpu.memory_space<vmem>>, %arg4: memref<1x128xf32, #tpu.memory_space<vmem>>, %arg5: memref<1x128xf32, #tpu.memory_space<vmem>>, %arg6: memref<1x128xf32, #tpu.memory_space<vmem>>, %arg7: memref<1x64x128xf32, #tpu.memory_space<vmem>>) attributes {dimension_semantics = [#tpu.dimension_semantics<parallel>], iteration_bounds = array<i64: 2>, scalar_prefetch = 0 : i64, scratch_operands = 0 : i64, tpu.core_type = #tpu.core_type<tc>, window_params = [{transform_indices = @transform_0, window_bounds = array<i64: 1, 64, 128>}, {transform_indices = @transform_1, window_bounds = array<i64: 1, 64, 128>}, {pipeline_mode = #tpu.pipeline_mode<synchronous>, transform_indices = @transform_2, window_bounds = array<i64: 1, 128>}, {pipeline_mode = #tpu.pipeline_mode<synchronous>, transform_indices = @transform_3, window_bounds = array<i64: 1, 128>}, {pipeline_mode = #tpu.pipeline_mode<synchronous>, transform_indices = @transform_4, window_bounds = array<i64: 1, 128>}, {pipeline_mode = #tpu.pipeline_mode<synchronous>, transform_indices = @transform_5, window_bounds = array<i64: 1, 128>}, {transform_indices = @transform_6, window_bounds = array<i64: 1, 64, 128>}]} {
    %c0 = arith.constant 0 : index
    %c0_0 = arith.constant 0 : index
    %c0_1 = arith.constant 0 : index
    %0 = vector.load %arg1[%c0, %c0_0, %c0_1] : memref<1x64x128xbf16, #tpu.memory_space<vmem>>, vector<1x64x128xbf16>
    %1 = arith.extf %0 : vector<1x64x128xbf16> to vector<1x64x128xf32>
    %c0_2 = arith.constant 0 : index
    %c0_3 = arith.constant 0 : index
    %2 = vector.load %arg3[%c0_2, %c0_3] : memref<1x128xf32, #tpu.memory_space<vmem>>, vector<1x128xf32>
    %3 = vector.shape_cast %2 : vector<1x128xf32> to vector<1x1x128xf32>
    %4 = vector.broadcast %3 : vector<1x1x128xf32> to vector<1x64x128xf32>
    %5 = arith.mulf %1, %4 : vector<1x64x128xf32>
    %c0_4 = arith.constant 0 : index
    %c0_5 = arith.constant 0 : index
    %6 = vector.load %arg4[%c0_4, %c0_5] : memref<1x128xf32, #tpu.memory_space<vmem>>, vector<1x128xf32>
    %7 = vector.shape_cast %6 : vector<1x128xf32> to vector<1x1x128xf32>
    %8 = vector.broadcast %7 : vector<1x1x128xf32> to vector<1x64x128xf32>
    %9 = arith.addf %5, %8 : vector<1x64x128xf32>
    %c0_6 = arith.constant 0 : index
    %c0_7 = arith.constant 0 : index
    %c0_8 = arith.constant 0 : index
    %10 = vector.load %arg2[%c0_6, %c0_7, %c0_8] : memref<1x64x128xbf16, #tpu.memory_space<vmem>>, vector<1x64x128xbf16>
    %11 = arith.extf %10 : vector<1x64x128xbf16> to vector<1x64x128xf32>
    %c0_9 = arith.constant 0 : index
    %c0_10 = arith.constant 0 : index
    %12 = vector.load %arg5[%c0_9, %c0_10] : memref<1x128xf32, #tpu.memory_space<vmem>>, vector<1x128xf32>
    %13 = vector.shape_cast %12 : vector<1x128xf32> to vector<1x1x128xf32>
    %14 = vector.broadcast %13 : vector<1x1x128xf32> to vector<1x64x128xf32>
    %15 = arith.mulf %11, %14 : vector<1x64x128xf32>
    %c0_11 = arith.constant 0 : index
    %c0_12 = arith.constant 0 : index
    %16 = vector.load %arg6[%c0_11, %c0_12] : memref<1x128xf32, #tpu.memory_space<vmem>>, vector<1x128xf32>
    %17 = vector.shape_cast %16 : vector<1x128xf32> to vector<1x1x128xf32>
    %18 = vector.broadcast %17 : vector<1x1x128xf32> to vector<1x64x128xf32>
    %19 = arith.addf %15, %18 : vector<1x64x128xf32>
    %20 = arith.addf %9, %19 : vector<1x64x128xf32>
    %cst = arith.constant 0.000000e+00 : f32
    %21 = vector.broadcast %cst : f32 to vector<1x64x128xf32>
    %22 = arith.maximumf %20, %21 : vector<1x64x128xf32>
    %c0_13 = arith.constant 0 : index
    %c0_14 = arith.constant 0 : index
    %c0_15 = arith.constant 0 : index
    %23 = vector.load %arg7[%c0_13, %c0_14, %c0_15] : memref<1x64x128xf32, #tpu.memory_space<vmem>>, vector<1x64x128xf32>
    tpu.vector_store %arg7[%c0_13, %c0_14, %c0_15], %22 {strides = array<i32>} : memref<1x64x128xf32, #tpu.memory_space<vmem>>, vector<1x64x128xf32>,
    return
  }
  func.func @transform_0(%arg0: i32) -> (i32, i32, i32) {
    %c0_i32 = arith.constant 0 : i32
    %c0_i32_0 = arith.constant 0 : i32
    %c0_i32_1 = arith.constant 0 : i32
    return %arg0, %c0_i32, %c0_i32_0 : i32, i32, i32
  }
  func.func @transform_1(%arg0: i32) -> (i32, i32, i32) {
    %c0_i32 = arith.constant 0 : i32
    %c0_i32_0 = arith.constant 0 : i32
    %c0_i32_1 = arith.constant 0 : i32
    return %arg0, %c0_i32, %c0_i32_0 : i32, i32, i32
  }
  func.func @transform_2(%arg0: i32) -> (i32, i32) {
    %c0_i32 = arith.constant 0 : i32
    %c0_i32_0 = arith.constant 0 : i32
    %c0_i32_1 = arith.constant 0 : i32
    return %c0_i32, %c0_i32_0 : i32, i32
  }
  func.func @transform_3(%arg0: i32) -> (i32, i32) {
    %c0_i32 = arith.constant 0 : i32
    %c0_i32_0 = arith.constant 0 : i32
    %c0_i32_1 = arith.constant 0 : i32
    return %c0_i32, %c0_i32_0 : i32, i32
  }
  func.func @transform_4(%arg0: i32) -> (i32, i32) {
    %c0_i32 = arith.constant 0 : i32
    %c0_i32_0 = arith.constant 0 : i32
    %c0_i32_1 = arith.constant 0 : i32
    return %c0_i32, %c0_i32_0 : i32, i32
  }
  func.func @transform_5(%arg0: i32) -> (i32, i32) {
    %c0_i32 = arith.constant 0 : i32
    %c0_i32_0 = arith.constant 0 : i32
    %c0_i32_1 = arith.constant 0 : i32
    return %c0_i32, %c0_i32_0 : i32, i32
  }
  func.func @transform_6(%arg0: i32) -> (i32, i32, i32) {
    %c0_i32 = arith.constant 0 : i32
    %c0_i32_0 = arith.constant 0 : i32
    %c0_i32_1 = arith.constant 0 : i32
    return %arg0, %c0_i32, %c0_i32_0 : i32, i32, i32
  }
}

</mosaic_0001>

<llo_original>
// kernel: basic_block_forward.5
$region0: #{basic_block_forward.5}
  #allocation0 [shape = 'u32[]', space=smem, size = 0x4, offset = 0x4, fixed_abs, tag = 'smem constant byte address 0x4 - core index']
  #allocation1 [shape = 'u32[72,128]{1,0:T(1,128)}', space=vmem, size = 0x9000, scoped, tag = 'internal scratch']
  %s0 = inlined_call_operand.vmem [shape: bf16[2,64,128], index: 0, kind: input, shape index: {}]
  %s1 = inlined_call_operand.vmem [shape: bf16[2,64,128], index: 1, kind: input, shape index: {}]
  %s2 = inlined_call_operand.vmem [shape: f32[1,128], index: 2, kind: input, shape index: {}]
  %s3 = inlined_call_operand.vmem [shape: f32[1,128], index: 3, kind: input, shape index: {}]
  %s4 = inlined_call_operand.vmem [shape: f32[1,128], index: 4, kind: input, shape index: {}]
  %s5 = inlined_call_operand.vmem [shape: f32[1,128], index: 5, kind: input, shape index: {}]
  %s6 = inlined_call_operand.vmem [shape: f32[2,64,128], index: 6, kind: output, shape index: {}]
  %s7 = sld [smem:[#allocation0]]
  $region57: #{basic_block_forward.5} parent=0
    _
  %s9 = ssub.s32 1, %s7
  %s10 = scalar_select 0, %s9, %s7
  loop: start=0, step=1, limit=4
  $region2: #{basic_block_forward.5} parent=0 // loop_pre_header
    _
  $region3: #{basic_block_forward.5} parent=0 // loop_header
    %s12 = sphi 0, %s16
    %p13 = scmp.ge.s32.totalorder %s12, 4
    %s22 = sphi 0, %s24
    %s25 = sphi 0, %s22
    %s26 = sphi 0, %s25
    %s42 = sphi 0, %s26
    %s48 = sphi 0, %s50
    %s51 = sphi 0, %s48
    %s52 = sphi 0, %s51
    %s68 = sphi 0, %s52
    %s72 = sphi 0, %s72
    %s74 = sphi 0, %s72
    %s75 = sphi 0, %s74
    %s89 = sphi 0, %s75
    %s93 = sphi 0, %s93
    %s95 = sphi 0, %s93
    %s96 = sphi 0, %s95
    %s110 = sphi 0, %s96
    %s114 = sphi 0, %s114
    %s116 = sphi 0, %s114
    %s117 = sphi 0, %s116
    %s131 = sphi 0, %s117
    %s135 = sphi 0, %s135
    %s137 = sphi 0, %s135
    %s138 = sphi 0, %s137
    %s152 = sphi 0, %s138
    %s158 = sphi 0, %s160
    %s161 = sphi 0, %s158
    %s162 = sphi 0, %s161
    %s178 = sphi 0, %s162
  $region4: #{basic_block_forward.5} parent=0 // loop_header_branch
    %15 = sbr.rel (%p13) target = $region8
  $region5: #{basic_block_forward.5} parent=0 // loop_body
    %s17 = ssub.s32 %s12, 1
    %s18 = ssub.s32 %s12, 2
    %s19 = sadd.s32 %s12, 1
    %s20 = ssub.s32 %s12, %s19
    %p21 = scmp.eq.s32.totalorder %s20, 0
    %s23 = sadd.s32 %s22, 1
    %s24 = scalar_select %p21, %s22, %s23
    %p27 = pneg %p21
    %p28 = scmp.eq.s32.totalorder %s12, 1
    %p29 = por %p27, %p28
    %p30 = scmp.ne.s32.totalorder %s22, %s25
    %p31 = scmp.eq.s32.totalorder %s12, 0
    %p32 = por %p30, %p31
    %p33 = scmp.ne.s32.totalorder %s22, %s25
    %p34 = scmp.eq.s32.totalorder %s17, 1
    %p35 = por %p33, %p34
    %p36 = scmp.ne.s32.totalorder %s25, %s26
    %p37 = scmp.eq.s32.totalorder %s17, 0
    %p38 = por %p36, %p37
    %p39 = scmp.ne.s32.totalorder %s25, %s26
    %p40 = scmp.eq.s32.totalorder %s18, 1
    %p41 = por %p39, %p40
    %p43 = scmp.ne.s32.totalorder %s26, %s42
    %p44 = scmp.eq.s32.totalorder %s18, 0
    %p45 = por %p43, %p44
    %s46 = ssub.s32 %s12, %s19
    %p47 = scmp.eq.s32.totalorder %s46, 0
    %s49 = sadd.s32 %s48, 1
    %s50 = scalar_select %p47, %s48, %s49
    %p53 = pneg %p47
    %p54 = scmp.eq.s32.totalorder %s12, 1
    %p55 = por %p53, %p54
    %p56 = scmp.ne.s32.totalorder %s48, %s51
    %p57 = scmp.eq.s32.totalorder %s12, 0
    %p58 = por %p56, %p57
    %p59 = scmp.ne.s32.totalorder %s48, %s51
    %p60 = scmp.eq.s32.totalorder %s17, 1
    %p61 = por %p59, %p60
    %p62 = scmp.ne.s32.totalorder %s51, %s52
    %p63 = scmp.eq.s32.totalorder %s17, 0
    %p64 = por %p62, %p63
    %p65 = scmp.ne.s32.totalorder %s51, %s52
    %p66 = scmp.eq.s32.totalorder %s18, 1
    %p67 = por %p65, %p66
    %p69 = scmp.ne.s32.totalorder %s52, %s68
    %p70 = scmp.eq.s32.totalorder %s18, 0
    %p71 = por %p69, %p70
    %s73 = sadd.s32 %s72, 1
    %p76 = scmp.eq.s32.totalorder %s12, 1
    %p77 = scmp.ne.s32.totalorder %s72, %s74
    %p78 = scmp.eq.s32.totalorder %s12, 0
    %p79 = por %p77, %p78
    %p80 = scmp.ne.s32.totalorder %s72, %s74
    %p81 = scmp.eq.s32.totalorder %s17, 1
    %p82 = por %p80, %p81
    %p83 = scmp.ne.s32.totalorder %s74, %s75
    %p84 = scmp.eq.s32.totalorder %s17, 0
    %p85 = por %p83, %p84
    %p86 = scmp.ne.s32.totalorder %s74, %s75
    %p87 = scmp.eq.s32.totalorder %s18, 1
    %p88 = por %p86, %p87
    %p90 = scmp.ne.s32.totalorder %s75, %s89
    %p91 = scmp.eq.s32.totalorder %s18, 0
    %p92 = por %p90, %p91
    %s94 = sadd.s32 %s93, 1
    %p97 = scmp.eq.s32.totalorder %s12, 1
    %p98 = scmp.ne.s32.totalorder %s93, %s95
    %p99 = scmp.eq.s32.totalorder %s12, 0
    %p100 = por %p98, %p99
    %p101 = scmp.ne.s32.totalorder %s93, %s95
    %p102 = scmp.eq.s32.totalorder %s17, 1
    %p103 = por %p101, %p102
    %p104 = scmp.ne.s32.totalorder %s95, %s96
    %p105 = scmp.eq.s32.totalorder %s17, 0
    %p106 = por %p104, %p105
    %p107 = scmp.ne.s32.totalorder %s95, %s96
    %p108 = scmp.eq.s32.totalorder %s18, 1
    %p109 = por %p107, %p108
    %p111 = scmp.ne.s32.totalorder %s96, %s110
    %p112 = scmp.eq.s32.totalorder %s18, 0
    %p113 = por %p111, %p112
    %s115 = sadd.s32 %s114, 1
    %p118 = scmp.eq.s32.totalorder %s12, 1
    %p119 = scmp.ne.s32.totalorder %s114, %s116
    %p120 = scmp.eq.s32.totalorder %s12, 0
    %p121 = por %p119, %p120
    %p122 = scmp.ne.s32.totalorder %s114, %s116
    %p123 = scmp.eq.s32.totalorder %s17, 1
    %p124 = por %p122, %p123
    %p125 = scmp.ne.s32.totalorder %s116, %s117
    %p126 = scmp.eq.s32.totalorder %s17, 0
    %p127 = por %p125, %p126
    %p128 = scmp.ne.s32.totalorder %s116, %s117
    %p129 = scmp.eq.s32.totalorder %s18, 1
    %p130 = por %p128, %p129
    %p132 = scmp.ne.s32.totalorder %s117, %s131
    %p133 = scmp.eq.s32.totalorder %s18, 0
    %p134 = por %p132, %p133
    %s136 = sadd.s32 %s135, 1
    %p139 = scmp.eq.s32.totalorder %s12, 1
    %p140 = scmp.ne.s32.totalorder %s135, %s137
    %p141 = scmp.eq.s32.totalorder %s12, 0
    %p142 = por %p140, %p141
    %p143 = scmp.ne.s32.totalorder %s135, %s137
    %p144 = scmp.eq.s32.totalorder %s17, 1
    %p145 = por %p143, %p144
    %p146 = scmp.ne.s32.totalorder %s137, %s138
    %p147 = scmp.eq.s32.totalorder %s17, 0
    %p148 = por %p146, %p147
    %p149 = scmp.ne.s32.totalorder %s137, %s138
    %p150 = scmp.eq.s32.totalorder %s18, 1
    %p151 = por %p149, %p150
    %p153 = scmp.ne.s32.totalorder %s138, %s152
    %p154 = scmp.eq.s32.totalorder %s18, 0
    %p155 = por %p153, %p154
    %s156 = ssub.s32 %s12, %s19
    %p157 = scmp.eq.s32.totalorder %s156, 0
    %s159 = sadd.s32 %s158, 1
    %s160 = scalar_select %p157, %s158, %s159
    %p163 = pneg %p157
    %p164 = scmp.eq.s32.totalorder %s12, 1
    %p165 = por %p163, %p164
    %p166 = scmp.ne.s32.totalorder %s158, %s161
    %p167 = scmp.eq.s32.totalorder %s12, 0
    %p168 = por %p166, %p167
    %p169 = scmp.ne.s32.totalorder %s158, %s161
    %p170 = scmp.eq.s32.totalorder %s17, 1
    %p171 = por %p169, %p170
    %p172 = scmp.ne.s32.totalorder %s161, %s162
    %p173 = scmp.eq.s32.totalorder %s17, 0
    %p174 = por %p172, %p173
    %p175 = scmp.ne.s32.totalorder %s161, %s162
    %p176 = scmp.eq.s32.totalorder %s18, 1
    %p177 = por %p175, %p176
    %p179 = scmp.ne.s32.totalorder %s162, %s178
    %p180 = scmp.eq.s32.totalorder %s18, 0
    %p181 = por %p179, %p180
    %p182 = scmp.le.s32.totalorder 1, %s12
    %p183 = scmp.lt.s32.totalorder %s12, 3
    %p184 = pnand %p182, %p183
    %p185 = pneg %p184
    // Predicated region
    $region9: #{basic_block_forward.5} parent=5 // pred_check
      _
    $region10: #{basic_block_forward.5} parent=5 // pred_check_branch
      %187 = sbr.rel (%p184) target = $region12
    $region11: #{basic_block_forward.5} parent=5 // pred_region
      %s188 = ssub.s32 %s12, 1
      // Predicated region
      $region13: #{basic_block_forward.5} parent=11 // pred_check
        %p189 = pneg %p85
      $region14: #{basic_block_forward.5} parent=11 // pred_check_branch
        %191 = sbr.rel (%p189) target = $region16
      $region15: #{basic_block_forward.5} parent=11 // pred_region
        _
      $region16: #{basic_block_forward.5} parent=11 // pred_fallthru
        _
      // Predicated region
      $region17: #{basic_block_forward.5} parent=11 // pred_check
        %p192 = pneg %p106
      $region18: #{basic_block_forward.5} parent=11 // pred_check_branch
        %194 = sbr.rel (%p192) target = $region20
      $region19: #{basic_block_forward.5} parent=11 // pred_region
        _
      $region20: #{basic_block_forward.5} parent=11 // pred_fallthru
        _
      // Predicated region
      $region21: #{basic_block_forward.5} parent=11 // pred_check
        %p195 = pneg %p127
      $region22: #{basic_block_forward.5} parent=11 // pred_check_branch
        %197 = sbr.rel (%p195) target = $region24
      $region23: #{basic_block_forward.5} parent=11 // pred_region
        _
      $region24: #{basic_block_forward.5} parent=11 // pred_fallthru
        _
      // Predicated region
      $region25: #{basic_block_forward.5} parent=11 // pred_check
        %p198 = pneg %p148
      $region26: #{basic_block_forward.5} parent=11 // pred_check_branch
        %200 = sbr.rel (%p198) target = $region28
      $region27: #{basic_block_forward.5} parent=11 // pred_region
        _
      $region28: #{basic_block_forward.5} parent=11 // pred_fallthru
        _
    $region12: #{basic_block_forward.5} parent=5 // pred_fallthru
      _
    %p201 = scmp.lt.s32.totalorder %s12, 2
    // Predicated region
    $region29: #{basic_block_forward.5} parent=5 // pred_check
      %p202 = pneg %p201
    $region30: #{basic_block_forward.5} parent=5 // pred_check_branch
      %204 = sbr.rel (%p202) target = $region32
    $region31: #{basic_block_forward.5} parent=5 // pred_region
      // Predicated region
      $region33: #{basic_block_forward.5} parent=31 // pred_check
        %p205 = pneg %p32
      $region34: #{basic_block_forward.5} parent=31 // pred_check_branch
        %207 = sbr.rel (%p205) target = $region36
      $region35: #{basic_block_forward.5} parent=31 // pred_region
        %p208 = scmp.lt.s32.totalorder %s12, 1
        %s209 = scalar_select %p208, %s12, 1
        %s210 = smul.addr %s209, 8
        %s211 = smul.addr %s210, 4
        %s212 = scalar_lea.vmem %s0, %s211
      $region36: #{basic_block_forward.5} parent=31 // pred_fallthru
        _
      // Predicated region
      $region37: #{basic_block_forward.5} parent=31 // pred_check
        %p213 = pneg %p58
      $region38: #{basic_block_forward.5} parent=31 // pred_check_branch
        %215 = sbr.rel (%p213) target = $region40
      $region39: #{basic_block_forward.5} parent=31 // pred_region
        %p216 = scmp.lt.s32.totalorder %s12, 1
        %s217 = scalar_select %p216, %s12, 1
        %s218 = smul.addr %s217, 8
        %s219 = smul.addr %s218, 4
        %s220 = scalar_lea.vmem %s1, %s219
      $region40: #{basic_block_forward.5} parent=31 // pred_fallthru
        _
    $region32: #{basic_block_forward.5} parent=5 // pred_fallthru
      _
    %p221 = scmp.le.s32.totalorder 1, %s12
    %p222 = scmp.lt.s32.totalorder %s12, 3
    %p223 = pnand %p221, %p222
    %p224 = pneg %p223
    // Predicated region
    $region41: #{basic_block_forward.5} parent=5 // pred_check
      _
    $region42: #{basic_block_forward.5} parent=5 // pred_check_branch
      %226 = sbr.rel (%p223) target = $region44
    $region43: #{basic_block_forward.5} parent=5 // pred_region
      %s227 = ssub.s32 %s12, 1
      %p228 = scmp.lt.s32.totalorder %s17, 1
      %s229 = scalar_select %p228, %s17, 1
      %s230 = smul.addr %s229, 8
      %s231 = smul.addr %s230, 4
      %s232 = scalar_lea.vmem %s0, %s231
      %p233 = pneg %p38
      %p234 = pneg %p35
      %p235 = scmp.lt.s32.totalorder %s17, 1
      %s236 = scalar_select %p235, %s17, 1
      %s237 = smul.addr %s236, 8
      %s238 = smul.addr %s237, 4
      %s239 = scalar_lea.vmem %s1, %s238
      %p240 = pneg %p64
      %p241 = pneg %p61
      %p242 = pneg %p85
      %p243 = pneg %p82
      %p244 = pneg %p106
      %p245 = pneg %p103
      %p246 = pneg %p127
      %p247 = pneg %p124
      %p248 = pneg %p148
      %p249 = pneg %p145
      %p250 = pneg %p174
      %p251 = pneg %p171
      %p252 = scmp.lt.s32.totalorder %s17, 1
      %s253 = scalar_select %p252, %s17, 1
      %s254 = smul.addr %s253, 8
      %s255 = smul.addr %s254, 8
      %s256 = scalar_lea.vmem %s6, %s255
      %p257 = scmp.lt.s32.totalorder %s17, 1
      %s258 = scalar_select %p257, %s17, 1
      %s259 = smul.addr %s258, 8
      %s260 = smul.addr %s259, 4
      %s261 = scalar_lea.vmem %s0, %s260
      %p262 = scmp.lt.s32.totalorder %s17, 1
      %s263 = scalar_select %p262, %s17, 1
      %s264 = smul.addr %s263, 8
      %s265 = smul.addr %s264, 4
      %s266 = scalar_lea.vmem %s1, %s265
      %p267 = scmp.lt.s32.totalorder %s17, 1
      %s268 = scalar_select %p267, %s17, 1
      %s269 = smul.addr %s268, 8
      %s270 = smul.addr %s269, 8
      %s271 = scalar_lea.vmem %s6, %s270
      %v272 = vld [vmem:[%s261] sm:$0xf]
      %v273 = vld [vmem:[%s261 + $0x4] sm:$0xf]
      %v274 = vld [vmem:[%s261 + $0x8] sm:$0xf]
      %v275 = vld [vmem:[%s261 + $0xc] sm:$0xf]
      %v276 = vld [vmem:[%s261 + $0x10] sm:$0xf]
      %v277 = vld [vmem:[%s261 + $0x14] sm:$0xf]
      %v278 = vld [vmem:[%s261 + $0x18] sm:$0xf]
      %v279 = vld [vmem:[%s261 + $0x1c] sm:$0xf]
      %v280 = vunpack.c.l.bf16 %v272
      %v281 = vunpack.c.l.bf16 %v273
      %v282 = vunpack.c.l.bf16 %v274
      %v283 = vunpack.c.l.bf16 %v275
      %v284 = vunpack.c.l.bf16 %v276
      %v285 = vunpack.c.l.bf16 %v277
      %v286 = vunpack.c.l.bf16 %v278
      %v287 = vunpack.c.l.bf16 %v279
      %v288 = vld [vmem:[%s2] sm:$0x1]
      %v290 = vperm.slane %v288, 0
      %v292 = vmul.f32 %v280, %v290
      %v293 = vmul.f32 %v281, %v290
      %v294 = vmul.f32 %v282, %v290
      %v295 = vmul.f32 %v283, %v290
      %v296 = vmul.f32 %v284, %v290
      %v297 = vmul.f32 %v285, %v290
      %v298 = vmul.f32 %v286, %v290
      %v299 = vmul.f32 %v287, %v290
      %v300 = vld [vmem:[%s3] sm:$0x1]
      %v302 = vperm.slane %v300, 0
      %v304 = vadd.f32 %v292, %v302
      %v305 = vadd.f32 %v293, %v302
      %v306 = vadd.f32 %v294, %v302
      %v307 = vadd.f32 %v295, %v302
      %v308 = vadd.f32 %v296, %v302
      %v309 = vadd.f32 %v297, %v302
      %v310 = vadd.f32 %v298, %v302
      %v311 = vadd.f32 %v299, %v302
      %v312 = vld [vmem:[%s266] sm:$0xf]
      %v313 = vld [vmem:[%s266 + $0x4] sm:$0xf]
      %v314 = vld [vmem:[%s266 + $0x8] sm:$0xf]
      %v315 = vld [vmem:[%s266 + $0xc] sm:$0xf]
      %v316 = vld [vmem:[%s266 + $0x10] sm:$0xf]
      %v317 = vld [vmem:[%s266 + $0x14] sm:$0xf]
      %v318 = vld [vmem:[%s266 + $0x18] sm:$0xf]
      %v319 = vld [vmem:[%s266 + $0x1c] sm:$0xf]
      %v320 = vunpack.c.l.bf16 %v312
      %v321 = vunpack.c.l.bf16 %v313
      %v322 = vunpack.c.l.bf16 %v314
      %v323 = vunpack.c.l.bf16 %v315
      %v324 = vunpack.c.l.bf16 %v316
      %v325 = vunpack.c.l.bf16 %v317
      %v326 = vunpack.c.l.bf16 %v318
      %v327 = vunpack.c.l.bf16 %v319
      %v328 = vld [vmem:[%s4] sm:$0x1]
      %v330 = vperm.slane %v328, 0
      %v332 = vmul.f32 %v320, %v330
      %v333 = vmul.f32 %v321, %v330
      %v334 = vmul.f32 %v322, %v330
      %v335 = vmul.f32 %v323, %v330
      %v336 = vmul.f32 %v324, %v330
      %v337 = vmul.f32 %v325, %v330
      %v338 = vmul.f32 %v326, %v330
      %v339 = vmul.f32 %v327, %v330
      %v340 = vld [vmem:[%s5] sm:$0x1]
      %v342 = vperm.slane %v340, 0
      %v344 = vadd.f32 %v332, %v342
      %v345 = vadd.f32 %v333, %v342
      %v346 = vadd.f32 %v334, %v342
      %v347 = vadd.f32 %v335, %v342
      %v348 = vadd.f32 %v336, %v342
      %v349 = vadd.f32 %v337, %v342
      %v350 = vadd.f32 %v338, %v342
      %v351 = vadd.f32 %v339, %v342
      %v352 = vadd.f32 %v304, %v344
      %v353 = vadd.f32 %v305, %v345
      %v354 = vadd.f32 %v306, %v346
      %v355 = vadd.f32 %v307, %v347
      %v356 = vadd.f32 %v308, %v348
      %v357 = vadd.f32 %v309, %v349
      %v358 = vadd.f32 %v310, %v350
      %v359 = vadd.f32 %v311, %v351
      %v360 = vmax.f32 %v352, 0.0
      %v361 = vmax.f32 %v353, 0.0
      %v362 = vmax.f32 %v354, 0.0
      %v363 = vmax.f32 %v355, 0.0
      %v364 = vmax.f32 %v356, 0.0
      %v365 = vmax.f32 %v357, 0.0
      %v366 = vmax.f32 %v358, 0.0
      %v367 = vmax.f32 %v359, 0.0
      %368 = vst [vmem:[%s271] sm:$0xff] %v360
      %369 = vst [vmem:[%s271 + $0x8] sm:$0xff] %v361
      %370 = vst [vmem:[%s271 + $0x10] sm:$0xff] %v362
      %371 = vst [vmem:[%s271 + $0x18] sm:$0xff] %v363
      %372 = vst [vmem:[%s271 + $0x20] sm:$0xff] %v364
      %373 = vst [vmem:[%s271 + $0x28] sm:$0xff] %v365
      %374 = vst [vmem:[%s271 + $0x30] sm:$0xff] %v366
      %375 = vst [vmem:[%s271 + $0x38] sm:$0xff] %v367
      %p376 = scmp.lt.s32.totalorder %s17, 1
      %s377 = scalar_select %p376, %s17, 1
      %s378 = smul.addr %s377, 8
      %s379 = smul.addr %s378, 8
      %s380 = scalar_lea.vmem %s6, %s379
      // Predicated region
      $region45: #{basic_block_forward.5} parent=43 // pred_check
        %p381 = pneg %p171
      $region46: #{basic_block_forward.5} parent=43 // pred_check_branch
        %383 = sbr.rel (%p381) target = $region48
      $region47: #{basic_block_forward.5} parent=43 // pred_region
        _
      $region48: #{basic_block_forward.5} parent=43 // pred_fallthru
        _
    $region44: #{basic_block_forward.5} parent=5 // pred_fallthru
      _
    %p384 = scmp.le.s32.totalorder 2, %s12
    // Predicated region
    $region49: #{basic_block_forward.5} parent=5 // pred_check
      %p385 = pneg %p384
    $region50: #{basic_block_forward.5} parent=5 // pred_check_branch
      %387 = sbr.rel (%p385) target = $region52
    $region51: #{basic_block_forward.5} parent=5 // pred_region
      %s388 = ssub.s32 %s12, 2
      // Predicated region
      $region53: #{basic_block_forward.5} parent=51 // pred_check
        %p389 = pneg %p177
      $region54: #{basic_block_forward.5} parent=51 // pred_check_branch
        %391 = sbr.rel (%p389) target = $region56
      $region55: #{basic_block_forward.5} parent=51 // pred_region
        %p392 = scmp.lt.s32.totalorder %s18, 1
        %s393 = scalar_select %p392, %s18, 1
        %s394 = smul.addr %s393, 8
        %s395 = smul.addr %s394, 8
        %s396 = scalar_lea.vmem %s6, %s395
      $region56: #{basic_block_forward.5} parent=51 // pred_fallthru
        _
    $region52: #{basic_block_forward.5} parent=5 // pred_fallthru
      _
  $region6: #{basic_block_forward.5} parent=0 // loop_footer
    %s16 = sadd.s32 1, %s12
  $region7: #{basic_block_forward.5} parent=0 // loop_footer_branch
    %11 = sbr.rel target = $region3
  $region8: #{basic_block_forward.5} parent=0 // loop_exit
    _

// kernel: basic_block_forward.3
$region0: #{basic_block_forward.3}
  #allocation0 [shape = 'u32[]', space=smem, size = 0x4, offset = 0x4, fixed_abs, tag = 'smem constant byte address 0x4 - core index']
  #allocation1 [shape = 'u32[72,128]{1,0:T(1,128)}', space=vmem, size = 0x9000, scoped, tag = 'internal scratch']
  %s0 = inlined_call_operand.vmem [shape: bf16[2,64,40], index: 0, kind: input, shape index: {}]
  %s1 = inlined_call_operand.vmem [shape: bf16[40,128], index: 1, kind: input, shape index: {}]
  %s2 = inlined_call_operand.vmem [shape: bf16[2,64,128], index: 2, kind: output, shape index: {0}]
  %s3 = inlined_call_operand.vmem [shape: f32[2,2,128], index: 3, kind: output, shape index: {1}]
  %4 = xla_tuple %s2, %s3
  %s5 = sld [smem:[#allocation0]]
  $region53: #{basic_block_forward.3} parent=0
    _
  %s7 = ssub.s32 1, %s5
  %s8 = scalar_select 0, %s7, %s5
  loop: start=0, step=1, limit=4
  $region2: #{basic_block_forward.3} parent=0 // loop_pre_header
    _
  $region3: #{basic_block_forward.3} parent=0 // loop_header
    %s10 = sphi 0, %s14
    %p11 = scmp.ge.s32.totalorder %s10, 4
    %s17 = sphi 0, %s29
    %s18 = sphi 0, %s25
    %s19 = sphi 0, %s17
    %s20 = sphi 0, %s18
    %s21 = sphi 0, %s19
    %s22 = sphi 0, %s20
    %s34 = sphi 0, %s36
    %s37 = sphi 0, %s34
    %s38 = sphi 0, %s37
    %s54 = sphi 0, %s38
    %s58 = sphi 0, %s58
    %s60 = sphi 0, %s58
    %s61 = sphi 0, %s60
    %s75 = sphi 0, %s61
    %s83 = sphi 0, %s85
    %s86 = sphi 0, %s83
    %s87 = sphi 0, %s86
    %s103 = sphi 0, %s87
    %s109 = sphi 0, %s111
    %s112 = sphi 0, %s109
    %s113 = sphi 0, %s112
    %s129 = sphi 0, %s113
  $region4: #{basic_block_forward.3} parent=0 // loop_header_branch
    %13 = sbr.rel (%p11) target = $region8
  $region5: #{basic_block_forward.3} parent=0 // loop_body
    %s15 = ssub.s32 %s10, 1
    %s16 = ssub.s32 %s10, 2
    %s23 = sadd.s32 1, %s18
    %p24 = scmp.ge.s32.totalorder %s23, 1
    %s25 = scalar_select %p24, 0, %s23
    %s26 = sadd.s32 1, %s17
    %s27 = scalar_select %p24, %s26, %s17
    %p28 = scmp.ge.s32.totalorder %s27, 2
    %s29 = scalar_select %p28, 0, %s27
    %s30 = sadd.s32 %s17, %s18
    %s31 = sadd.s32 %s29, %s25
    %s32 = ssub.s32 %s30, %s31
    %p33 = scmp.eq.s32.totalorder %s32, 0
    %s35 = sadd.s32 %s34, 1
    %s36 = scalar_select %p33, %s34, %s35
    %p39 = pneg %p33
    %p40 = scmp.eq.s32.totalorder %s10, 1
    %p41 = por %p39, %p40
    %p42 = scmp.ne.s32.totalorder %s34, %s37
    %p43 = scmp.eq.s32.totalorder %s10, 0
    %p44 = por %p42, %p43
    %p45 = scmp.ne.s32.totalorder %s34, %s37
    %p46 = scmp.eq.s32.totalorder %s15, 1
    %p47 = por %p45, %p46
    %p48 = scmp.ne.s32.totalorder %s37, %s38
    %p49 = scmp.eq.s32.totalorder %s15, 0
    %p50 = por %p48, %p49
    %p51 = scmp.ne.s32.totalorder %s37, %s38
    %p52 = scmp.eq.s32.totalorder %s16, 1
    %p53 = por %p51, %p52
    %p55 = scmp.ne.s32.totalorder %s38, %s54
    %p56 = scmp.eq.s32.totalorder %s16, 0
    %p57 = por %p55, %p56
    %s59 = sadd.s32 %s58, 1
    %p62 = scmp.eq.s32.totalorder %s10, 1
    %p63 = scmp.ne.s32.totalorder %s58, %s60
    %p64 = scmp.eq.s32.totalorder %s10, 0
    %p65 = por %p63, %p64
    %p66 = scmp.ne.s32.totalorder %s58, %s60
    %p67 = scmp.eq.s32.totalorder %s15, 1
    %p68 = por %p66, %p67
    %p69 = scmp.ne.s32.totalorder %s60, %s61
    %p70 = scmp.eq.s32.totalorder %s15, 0
    %p71 = por %p69, %p70
    %p72 = scmp.ne.s32.totalorder %s60, %s61
    %p73 = scmp.eq.s32.totalorder %s16, 1
    %p74 = por %p72, %p73
    %p76 = scmp.ne.s32.totalorder %s61, %s75
    %p77 = scmp.eq.s32.totalorder %s16, 0
    %p78 = por %p76, %p77
    %s79 = sadd.s32 %s17, %s18
    %s80 = sadd.s32 %s29, %s25
    %s81 = ssub.s32 %s79, %s80
    %p82 = scmp.eq.s32.totalorder %s81, 0
    %s84 = sadd.s32 %s83, 1
    %s85 = scalar_select %p82, %s83, %s84
    %p88 = pneg %p82
    %p89 = scmp.eq.s32.totalorder %s10, 1
    %p90 = por %p88, %p89
    %p91 = scmp.ne.s32.totalorder %s83, %s86
    %p92 = scmp.eq.s32.totalorder %s10, 0
    %p93 = por %p91, %p92
    %p94 = scmp.ne.s32.totalorder %s83, %s86
    %p95 = scmp.eq.s32.totalorder %s15, 1
    %p96 = por %p94, %p95
    %p97 = scmp.ne.s32.totalorder %s86, %s87
    %p98 = scmp.eq.s32.totalorder %s15, 0
    %p99 = por %p97, %p98
    %p100 = scmp.ne.s32.totalorder %s86, %s87
    %p101 = scmp.eq.s32.totalorder %s16, 1
    %p102 = por %p100, %p101
    %p104 = scmp.ne.s32.totalorder %s87, %s103
    %p105 = scmp.eq.s32.totalorder %s16, 0
    %p106 = por %p104, %p105
    %s107 = ssub.s32 %s17, %s29
    %p108 = scmp.eq.s32.totalorder %s107, 0
    %s110 = sadd.s32 %s109, 1
    %s111 = scalar_select %p108, %s109, %s110
    %p114 = pneg %p108
    %p115 = scmp.eq.s32.totalorder %s10, 1
    %p116 = por %p114, %p115
    %p117 = scmp.ne.s32.totalorder %s109, %s112
    %p118 = scmp.eq.s32.totalorder %s10, 0
    %p119 = por %p117, %p118
    %p120 = scmp.ne.s32.totalorder %s109, %s112
    %p121 = scmp.eq.s32.totalorder %s15, 1
    %p122 = por %p120, %p121
    %p123 = scmp.ne.s32.totalorder %s112, %s113
    %p124 = scmp.eq.s32.totalorder %s15, 0
    %p125 = por %p123, %p124
    %p126 = scmp.ne.s32.totalorder %s112, %s113
    %p127 = scmp.eq.s32.totalorder %s16, 1
    %p128 = por %p126, %p127
    %p130 = scmp.ne.s32.totalorder %s113, %s129
    %p131 = scmp.eq.s32.totalorder %s16, 0
    %p132 = por %p130, %p131
    %p133 = scmp.le.s32.totalorder 1, %s10
    %p134 = scmp.lt.s32.totalorder %s10, 3
    %p135 = pnand %p133, %p134
    %p136 = pneg %p135
    // Predicated region
    $region9: #{basic_block_forward.3} parent=5 // pred_check
      _
    $region10: #{basic_block_forward.3} parent=5 // pred_check_branch
      %138 = sbr.rel (%p135) target = $region12
    $region11: #{basic_block_forward.3} parent=5 // pred_region
      %s139 = ssub.s32 %s10, 1
      // Predicated region
      $region13: #{basic_block_forward.3} parent=11 // pred_check
        %p140 = pneg %p71
      $region14: #{basic_block_forward.3} parent=11 // pred_check_branch
        %142 = sbr.rel (%p140) target = $region16
      $region15: #{basic_block_forward.3} parent=11 // pred_region
        _
      $region16: #{basic_block_forward.3} parent=11 // pred_fallthru
        _
    $region12: #{basic_block_forward.3} parent=5 // pred_fallthru
      _
    %p143 = scmp.lt.s32.totalorder %s10, 2
    // Predicated region
    $region17: #{basic_block_forward.3} parent=5 // pred_check
      %p144 = pneg %p143
    $region18: #{basic_block_forward.3} parent=5 // pred_check_branch
      %146 = sbr.rel (%p144) target = $region20
    $region19: #{basic_block_forward.3} parent=5 // pred_region
      // Predicated region
      $region21: #{basic_block_forward.3} parent=19 // pred_check
        %p147 = pneg %p44
      $region22: #{basic_block_forward.3} parent=19 // pred_check_branch
        %149 = sbr.rel (%p147) target = $region24
      $region23: #{basic_block_forward.3} parent=19 // pred_region
        %s150 = sadd.s32 %s17, %s18
        %p151 = scmp.lt.s32.totalorder %s150, 1
        %s152 = scalar_select %p151, %s150, 1
        %s153 = smul.addr %s152, 8
        %s154 = smul.addr %s153, 4
        %s155 = scalar_lea.vmem %s0, %s154
        %s156 = sadd.s32 %s17, %s18
      $region24: #{basic_block_forward.3} parent=19 // pred_fallthru
        _
    $region20: #{basic_block_forward.3} parent=5 // pred_fallthru
      _
    %p157 = scmp.le.s32.totalorder 1, %s10
    %p158 = scmp.lt.s32.totalorder %s10, 3
    %p159 = pnand %p157, %p158
    %p160 = pneg %p159
    // Predicated region
    $region25: #{basic_block_forward.3} parent=5 // pred_check
      _
    $region26: #{basic_block_forward.3} parent=5 // pred_check_branch
      %162 = sbr.rel (%p159) target = $region28
    $region27: #{basic_block_forward.3} parent=5 // pred_region
      %s163 = ssub.s32 %s10, 1
      %s164 = sadd.s32 %s19, %s20
      %p165 = scmp.lt.s32.totalorder %s164, 1
      %s166 = scalar_select %p165, %s164, 1
      %s167 = smul.addr %s166, 8
      %s168 = smul.addr %s167, 4
      %s169 = scalar_lea.vmem %s0, %s168
      %p170 = pneg %p50
      %p171 = pneg %p47
      %p172 = pneg %p71
      %p173 = pneg %p68
      %p174 = pneg %p99
      %p175 = pneg %p96
      %s176 = sadd.s32 %s19, %s20
      %p177 = scmp.lt.s32.totalorder %s176, 1
      %s178 = scalar_select %p177, %s176, 1
      %s179 = smul.addr %s178, 8
      %s180 = smul.addr %s179, 4
      %s181 = scalar_lea.vmem %s2, %s180
      %p182 = pneg %p125
      %p183 = pneg %p122
      %p184 = scmp.lt.s32.totalorder %s19, 1
      %s185 = scalar_select %p184, %s19, 1
      %s186 = smul.addr %s185, 2
      %s187 = scalar_lea.vmem %s3, %s186
      %s188 = sadd.s32 %s19, %s20
      %p189 = scmp.lt.s32.totalorder %s188, 1
      %s190 = scalar_select %p189, %s188, 1
      %s191 = smul.addr %s190, 8
      %s192 = smul.addr %s191, 4
      %s193 = scalar_lea.vmem %s0, %s192
      %s194 = sadd.s32 %s19, %s20
      %s195 = sadd.s32 %s19, %s20
      %p196 = scmp.lt.s32.totalorder %s195, 1
      %s197 = scalar_select %p196, %s195, 1
      %s198 = smul.addr %s197, 8
      %s199 = smul.addr %s198, 4
      %s200 = scalar_lea.vmem %s2, %s199
      %s201 = sadd.s32 %s19, %s20
      %p202 = scmp.lt.s32.totalorder %s19, 1
      %s203 = scalar_select %p202, %s19, 1
      %s204 = smul.addr %s203, 2
      %s205 = scalar_lea.vmem %s3, %s204
      %p207 = scmp.eq.s32.totalorder %s20, 0
      // Predicated region
      $region29: #{basic_block_forward.3} parent=27 // pred_check
        %p208 = pneg %p207
      $region30: #{basic_block_forward.3} parent=27 // pred_check_branch
        %210 = sbr.rel (%p208) target = $region32
      $region31: #{basic_block_forward.3} parent=27 // pred_region
        %211 = vst [vmem:[%s205] sm:$0x3] 0.0
      $region32: #{basic_block_forward.3} parent=27 // pred_fallthru
        _
      %v212 = vld [vmem:[%s193] sm:$0xf]
      %v213 = vld [vmem:[%s193 + $0x4] sm:$0xf]
      %v214 = vld [vmem:[%s193 + $0x8] sm:$0xf]
      %v215 = vld [vmem:[%s193 + $0xc] sm:$0xf]
      %v216 = vld [vmem:[%s193 + $0x10] sm:$0xf]
      %v217 = vld [vmem:[%s193 + $0x14] sm:$0xf]
      %v218 = vld [vmem:[%s193 + $0x18] sm:$0xf]
      %v219 = vld [vmem:[%s193 + $0x1c] sm:$0xf]
      %v220 = vld [vmem:[%s1] sm:$0xf]
      %v221 = vld [vmem:[%s1 + $0x4] sm:$0xf]
      %v222 = vld [vmem:[%s1 + $0x8] sm:$0xf]
      %v223 = vld [vmem:[%s1 + $0xc] sm:$0xf]
      %v224 = vld [vmem:[%s1 + $0x10] sm:$0xf]
      %v233 = vunpack.c.l.b16 %v212
      %v234 = vunpack.c.l.b16 %v213
      %v235 = vunpack.c.l.b16 %v214
      %v236 = vunpack.c.l.b16 %v215
      %v237 = vunpack.c.l.b16 %v216
      %v238 = vunpack.c.l.b16 %v217
      %v239 = vunpack.c.l.b16 %v218
      %v240 = vunpack.c.l.b16 %v219
      %v241 = vpack.c.b16 %v234, %v233
      %v242 = vpack.c.b16 %v236, %v235
      %v243 = vpack.c.b16 %v238, %v237
      %v244 = vpack.c.b16 %v240, %v239
      %v250 = vunpack.c.l.b16 %v220
      %v251 = vunpack.c.l.b16 %v221
      %v252 = vunpack.c.l.b16 %v222
      %v253 = vunpack.c.l.b16 %v223
      %v254 = vunpack.c.l.b16 %v224
      %v255 = vpack.c.b16 %v251, %v250
      %v256 = vpack.c.b16 %v253, %v252
      %v257 = vpack.c.b16 %v254, %v254
      %vm260 = vcmask 326656
      %v262 = vsel %vm260, %v241, 0
      %v265 = vsel %vm260, %v242, 0
      %v268 = vsel %vm260, %v243, 0
      %v271 = vsel %vm260, %v244, 0
      %vm273 = vcmask 1043456
      %v275 = vsel %vm273, %v257, 0
      %277 = vmatpush.bf16.msra.mxu0 0
      %278 = vmatpush.bf16.msra.mxu0 0
      %279 = vmatpush.bf16.msra.mxu0 0
      %280 = vmatpush.bf16.msra.mxu0 0
      %281 = vmatpush.bf16.msra.mxu0 0
      %282 = vmatpush.bf16.msra.mxu0 %v275
      %283 = vmatpush.bf16.msra.mxu0 %v256
      %284 = vmatpush.bf16.msra.mxu0 %v255
      %285 = vmatmul.bf16.gmra.mxu0 %v262
      %v286 = vpop.f32.mrf.mxu0
      %v287 = vadd.f32 0.0, %v286
      %v288 = vpop.f32.mrf.mxu0
      %v289 = vadd.f32 0.0, %v288
      %290 = vmatmul.bf16.gmra.mxu0 %v265
      %v291 = vpop.f32.mrf.mxu0
      %v292 = vadd.f32 0.0, %v291
      %v293 = vpop.f32.mrf.mxu0
      %v294 = vadd.f32 0.0, %v293
      %295 = vmatmul.bf16.gmra.mxu0 %v268
      %v296 = vpop.f32.mrf.mxu0
      %v297 = vadd.f32 0.0, %v296
      %v298 = vpop.f32.mrf.mxu0
      %v299 = vadd.f32 0.0, %v298
      %300 = vmatmul.bf16.gmra.mxu0 %v271
      %v301 = vpop.f32.mrf.mxu0
      %v302 = vadd.f32 0.0, %v301
      %v303 = vpop.f32.mrf.mxu0
      %v304 = vadd.f32 0.0, %v303
      %305 = vdwg.mxu0
      %v306 = vpack.c.bf16 %v287, %v287
      %v307 = vpack.c.bf16 %v289, %v289
      %v308 = vpack.c.bf16 %v292, %v292
      %v309 = vpack.c.bf16 %v294, %v294
      %v310 = vpack.c.bf16 %v297, %v297
      %v311 = vpack.c.bf16 %v299, %v299
      %v312 = vpack.c.bf16 %v302, %v302
      %v313 = vpack.c.bf16 %v304, %v304
      %314 = vst [vmem:[%s200] sm:$0xf] %v306
      %315 = vst [vmem:[%s200 + $0x4] sm:$0xf] %v307
      %316 = vst [vmem:[%s200 + $0x8] sm:$0xf] %v308
      %317 = vst [vmem:[%s200 + $0xc] sm:$0xf] %v309
      %318 = vst [vmem:[%s200 + $0x10] sm:$0xf] %v310
      %319 = vst [vmem:[%s200 + $0x14] sm:$0xf] %v311
      %320 = vst [vmem:[%s200 + $0x18] sm:$0xf] %v312
      %321 = vst [vmem:[%s200 + $0x1c] sm:$0xf] %v313
      %v322 = vld [vmem:[%s205] sm:$0x1]
      %v323 = vadd.f32 %v287, %v289
      %v324 = vadd.f32 %v323, %v292
      %v325 = vadd.f32 %v324, %v294
      %v326 = vadd.f32 %v325, %v297
      %v327 = vadd.f32 %v326, %v299
      %v328 = vadd.f32 %v327, %v302
      %v329 = vadd.f32 %v328, %v304
      %v330 = vrot.slane %v329, 4
      %v331 = vadd.f32 %v329, %v330
      %v332 = vrot.slane %v331, 2
      %v333 = vadd.f32 %v331, %v332
      %v334 = vrot.slane %v333, 1
      %v335 = vadd.f32 %v333, %v334
      %v336 = vadd.f32 %v322, %v335
      %337 = vst [vmem:[%s205] sm:$0x1] %v336
      %v338 = vld [vmem:[%s205 + $0x1] sm:$0x1]
      %v339 = vmul.f32 %v287, %v287
      %v340 = vmul.f32 %v289, %v289
      %v341 = vmul.f32 %v292, %v292
      %v342 = vmul.f32 %v294, %v294
      %v343 = vmul.f32 %v297, %v297
      %v344 = vmul.f32 %v299, %v299
      %v345 = vmul.f32 %v302, %v302
      %v346 = vmul.f32 %v304, %v304
      %v347 = vadd.f32 %v339, %v340
      %v348 = vadd.f32 %v347, %v341
      %v349 = vadd.f32 %v348, %v342
      %v350 = vadd.f32 %v349, %v343
      %v351 = vadd.f32 %v350, %v344
      %v352 = vadd.f32 %v351, %v345
      %v353 = vadd.f32 %v352, %v346
      %v354 = vrot.slane %v353, 4
      %v355 = vadd.f32 %v353, %v354
      %v356 = vrot.slane %v355, 2
      %v357 = vadd.f32 %v355, %v356
      %v358 = vrot.slane %v357, 1
      %v359 = vadd.f32 %v357, %v358
      %v360 = vadd.f32 %v338, %v359
      %361 = vst [vmem:[%s205 + $0x1] sm:$0x1] %v360
      %s362 = sadd.s32 %s19, %s20
      %p363 = scmp.lt.s32.totalorder %s362, 1
      %s364 = scalar_select %p363, %s362, 1
      %s365 = smul.addr %s364, 8
      %s366 = smul.addr %s365, 4
      %s367 = scalar_lea.vmem %s2, %s366
      %p368 = scmp.lt.s32.totalorder %s19, 1
      %s369 = scalar_select %p368, %s19, 1
      %s370 = smul.addr %s369, 2
      %s371 = scalar_lea.vmem %s3, %s370
      // Predicated region
      $region33: #{basic_block_forward.3} parent=27 // pred_check
        %p372 = pneg %p96
      $region34: #{basic_block_forward.3} parent=27 // pred_check_branch
        %374 = sbr.rel (%p372) target = $region36
      $region35: #{basic_block_forward.3} parent=27 // pred_region
        %s375 = sadd.s32 %s19, %s20
      $region36: #{basic_block_forward.3} parent=27 // pred_fallthru
        _
      // Predicated region
      $region37: #{basic_block_forward.3} parent=27 // pred_check
        %p376 = pneg %p122
      $region38: #{basic_block_forward.3} parent=27 // pred_check_branch
        %378 = sbr.rel (%p376) target = $region40
      $region39: #{basic_block_forward.3} parent=27 // pred_region
        _
      $region40: #{basic_block_forward.3} parent=27 // pred_fallthru
        _
    $region28: #{basic_block_forward.3} parent=5 // pred_fallthru
      _
    %p379 = scmp.le.s32.totalorder 2, %s10
    // Predicated region
    $region41: #{basic_block_forward.3} parent=5 // pred_check
      %p380 = pneg %p379
    $region42: #{basic_block_forward.3} parent=5 // pred_check_branch
      %382 = sbr.rel (%p380) target = $region44
    $region43: #{basic_block_forward.3} parent=5 // pred_region
      %s383 = ssub.s32 %s10, 2
      // Predicated region
      $region45: #{basic_block_forward.3} parent=43 // pred_check
        %p384 = pneg %p102
      $region46: #{basic_block_forward.3} parent=43 // pred_check_branch
        %386 = sbr.rel (%p384) target = $region48
      $region47: #{basic_block_forward.3} parent=43 // pred_region
        %s387 = sadd.s32 %s21, %s22
        %p388 = scmp.lt.s32.totalorder %s387, 1
        %s389 = scalar_select %p388, %s387, 1
        %s390 = smul.addr %s389, 8
        %s391 = smul.addr %s390, 4
        %s392 = scalar_lea.vmem %s2, %s391
      $region48: #{basic_block_forward.3} parent=43 // pred_fallthru
        _
      // Predicated region
      $region49: #{basic_block_forward.3} parent=43 // pred_check
        %p393 = pneg %p128
      $region50: #{basic_block_forward.3} parent=43 // pred_check_branch
        %395 = sbr.rel (%p393) target = $region52
      $region51: #{basic_block_forward.3} parent=43 // pred_region
        %p396 = scmp.lt.s32.totalorder %s21, 1
        %s397 = scalar_select %p396, %s21, 1
        %s398 = smul.addr %s397, 2
        %s399 = scalar_lea.vmem %s3, %s398
      $region52: #{basic_block_forward.3} parent=43 // pred_fallthru
        _
    $region44: #{basic_block_forward.3} parent=5 // pred_fallthru
      _
  $region6: #{basic_block_forward.3} parent=0 // loop_footer
    %s14 = sadd.s32 1, %s10
  $region7: #{basic_block_forward.3} parent=0 // loop_footer_branch
    %9 = sbr.rel target = $region3
  $region8: #{basic_block_forward.3} parent=0 // loop_exit
    _

// kernel: basic_block_forward.4
$region0: #{basic_block_forward.4}
  #allocation0 [shape = 'u32[]', space=smem, size = 0x4, offset = 0x4, fixed_abs, tag = 'smem constant byte address 0x4 - core index']
  #allocation1 [shape = 'u32[72,128]{1,0:T(1,128)}', space=vmem, size = 0x9000, scoped, tag = 'internal scratch']
  #allocation2 [shape = 'bf16[10,10,128]{2,1,0:T(8,128)(2,1)}', space=vmem, size = 0xa000, scoped, tag = 'scratch operand']
  #allocation3 [shape = 'f32[64,128]{1,0:T(8,128)}', space=vmem, size = 0x8000, scoped, tag = 'scratch operand']
  %s0 = inlined_call_operand.vmem [shape: bf16[2,64,128], index: 0, kind: input, shape index: {}]
  %s1 = inlined_call_operand.vmem [shape: bf16[2,64,8], index: 1, kind: input, shape index: {}]
  %s2 = inlined_call_operand.vmem [shape: f32[1,128], index: 2, kind: input, shape index: {}]
  %s3 = inlined_call_operand.vmem [shape: f32[1,128], index: 3, kind: input, shape index: {}]
  %s4 = inlined_call_operand.vmem [shape: bf16[9,128,128], index: 4, kind: input, shape index: {}]
  %s5 = inlined_call_operand.vmem [shape: bf16[8,128], index: 5, kind: input, shape index: {}]
  %s6 = inlined_call_operand.vmem [shape: bf16[2,64,128], index: 6, kind: output, shape index: {0}]
  %s7 = inlined_call_operand.vmem [shape: bf16[2,64,128], index: 7, kind: output, shape index: {1}]
  %s8 = inlined_call_operand.vmem [shape: f32[2,2,128], index: 8, kind: output, shape index: {2}]
  %s9 = inlined_call_operand.vmem [shape: f32[2,2,128], index: 9, kind: output, shape index: {3}]
  %10 = xla_tuple %s6, %s7, %s8, %s9
  %s11 = sld [smem:[#allocation0]]
  $region89: #{basic_block_forward.4} parent=0
    _
  %s13 = ssub.s32 1, %s11
  %s14 = scalar_select 0, %s13, %s11
  loop: start=0, step=1, limit=4
  $region2: #{basic_block_forward.4} parent=0 // loop_pre_header
    _
  $region3: #{basic_block_forward.4} parent=0 // loop_header
    %s16 = sphi 0, %s20
    %p17 = scmp.ge.s32.totalorder %s16, 4
    %s23 = sphi 0, %s35
    %s24 = sphi 0, %s31
    %s25 = sphi 0, %s23
    %s26 = sphi 0, %s24
    %s27 = sphi 0, %s25
    %s28 = sphi 0, %s26
    %s40 = sphi 0, %s42
    %s43 = sphi 0, %s40
    %s44 = sphi 0, %s43
    %s60 = sphi 0, %s44
    %s68 = sphi 0, %s70
    %s71 = sphi 0, %s68
    %s72 = sphi 0, %s71
    %s88 = sphi 0, %s72
    %s92 = sphi 0, %s92
    %s94 = sphi 0, %s92
    %s95 = sphi 0, %s94
    %s109 = sphi 0, %s95
    %s113 = sphi 0, %s113
    %s115 = sphi 0, %s113
    %s116 = sphi 0, %s115
    %s130 = sphi 0, %s116
    %s134 = sphi 0, %s134
    %s136 = sphi 0, %s134
    %s137 = sphi 0, %s136
    %s151 = sphi 0, %s137
    %s155 = sphi 0, %s155
    %s157 = sphi 0, %s155
    %s158 = sphi 0, %s157
    %s172 = sphi 0, %s158
    %s180 = sphi 0, %s182
    %s183 = sphi 0, %s180
    %s184 = sphi 0, %s183
    %s200 = sphi 0, %s184
    %s208 = sphi 0, %s210
    %s211 = sphi 0, %s208
    %s212 = sphi 0, %s211
    %s228 = sphi 0, %s212
    %s234 = sphi 0, %s236
    %s237 = sphi 0, %s234
    %s238 = sphi 0, %s237
    %s254 = sphi 0, %s238
    %s260 = sphi 0, %s262
    %s263 = sphi 0, %s260
    %s264 = sphi 0, %s263
    %s280 = sphi 0, %s264
  $region4: #{basic_block_forward.4} parent=0 // loop_header_branch
    %19 = sbr.rel (%p17) target = $region8
  $region5: #{basic_block_forward.4} parent=0 // loop_body
    %s21 = ssub.s32 %s16, 1
    %s22 = ssub.s32 %s16, 2
    %s29 = sadd.s32 1, %s24
    %p30 = scmp.ge.s32.totalorder %s29, 1
    %s31 = scalar_select %p30, 0, %s29
    %s32 = sadd.s32 1, %s23
    %s33 = scalar_select %p30, %s32, %s23
    %p34 = scmp.ge.s32.totalorder %s33, 2
    %s35 = scalar_select %p34, 0, %s33
    %s36 = sadd.s32 %s23, %s24
    %s37 = sadd.s32 %s35, %s31
    %s38 = ssub.s32 %s36, %s37
    %p39 = scmp.eq.s32.totalorder %s38, 0
    %s41 = sadd.s32 %s40, 1
    %s42 = scalar_select %p39, %s40, %s41
    %p45 = pneg %p39
    %p46 = scmp.eq.s32.totalorder %s16, 1
    %p47 = por %p45, %p46
    %p48 = scmp.ne.s32.totalorder %s40, %s43
    %p49 = scmp.eq.s32.totalorder %s16, 0
    %p50 = por %p48, %p49
    %p51 = scmp.ne.s32.totalorder %s40, %s43
    %p52 = scmp.eq.s32.totalorder %s21, 1
    %p53 = por %p51, %p52
    %p54 = scmp.ne.s32.totalorder %s43, %s44
    %p55 = scmp.eq.s32.totalorder %s21, 0
    %p56 = por %p54, %p55
    %p57 = scmp.ne.s32.totalorder %s43, %s44
    %p58 = scmp.eq.s32.totalorder %s22, 1
    %p59 = por %p57, %p58
    %p61 = scmp.ne.s32.totalorder %s44, %s60
    %p62 = scmp.eq.s32.totalorder %s22, 0
    %p63 = por %p61, %p62
    %s64 = sadd.s32 %s23, %s24
    %s65 = sadd.s32 %s35, %s31
    %s66 = ssub.s32 %s64, %s65
    %p67 = scmp.eq.s32.totalorder %s66, 0
    %s69 = sadd.s32 %s68, 1
    %s70 = scalar_select %p67, %s68, %s69
    %p73 = pneg %p67
    %p74 = scmp.eq.s32.totalorder %s16, 1
    %p75 = por %p73, %p74
    %p76 = scmp.ne.s32.totalorder %s68, %s71
    %p77 = scmp.eq.s32.totalorder %s16, 0
    %p78 = por %p76, %p77
    %p79 = scmp.ne.s32.totalorder %s68, %s71
    %p80 = scmp.eq.s32.totalorder %s21, 1
    %p81 = por %p79, %p80
    %p82 = scmp.ne.s32.totalorder %s71, %s72
    %p83 = scmp.eq.s32.totalorder %s21, 0
    %p84 = por %p82, %p83
    %p85 = scmp.ne.s32.totalorder %s71, %s72
    %p86 = scmp.eq.s32.totalorder %s22, 1
    %p87 = por %p85, %p86
    %p89 = scmp.ne.s32.totalorder %s72, %s88
    %p90 = scmp.eq.s32.totalorder %s22, 0
    %p91 = por %p89, %p90
    %s93 = sadd.s32 %s92, 1
    %p96 = scmp.eq.s32.totalorder %s16, 1
    %p97 = scmp.ne.s32.totalorder %s92, %s94
    %p98 = scmp.eq.s32.totalorder %s16, 0
    %p99 = por %p97, %p98
    %p100 = scmp.ne.s32.totalorder %s92, %s94
    %p101 = scmp.eq.s32.totalorder %s21, 1
    %p102 = por %p100, %p101
    %p103 = scmp.ne.s32.totalorder %s94, %s95
    %p104 = scmp.eq.s32.totalorder %s21, 0
    %p105 = por %p103, %p104
    %p106 = scmp.ne.s32.totalorder %s94, %s95
    %p107 = scmp.eq.s32.totalorder %s22, 1
    %p108 = por %p106, %p107
    %p110 = scmp.ne.s32.totalorder %s95, %s109
    %p111 = scmp.eq.s32.totalorder %s22, 0
    %p112 = por %p110, %p111
    %s114 = sadd.s32 %s113, 1
    %p117 = scmp.eq.s32.totalorder %s16, 1
    %p118 = scmp.ne.s32.totalorder %s113, %s115
    %p119 = scmp.eq.s32.totalorder %s16, 0
    %p120 = por %p118, %p119
    %p121 = scmp.ne.s32.totalorder %s113, %s115
    %p122 = scmp.eq.s32.totalorder %s21, 1
    %p123 = por %p121, %p122
    %p124 = scmp.ne.s32.totalorder %s115, %s116
    %p125 = scmp.eq.s32.totalorder %s21, 0
    %p126 = por %p124, %p125
    %p127 = scmp.ne.s32.totalorder %s115, %s116
    %p128 = scmp.eq.s32.totalorder %s22, 1
    %p129 = por %p127, %p128
    %p131 = scmp.ne.s32.totalorder %s116, %s130
    %p132 = scmp.eq.s32.totalorder %s22, 0
    %p133 = por %p131, %p132
    %s135 = sadd.s32 %s134, 1
    %p138 = scmp.eq.s32.totalorder %s16, 1
    %p139 = scmp.ne.s32.totalorder %s134, %s136
    %p140 = scmp.eq.s32.totalorder %s16, 0
    %p141 = por %p139, %p140
    %p142 = scmp.ne.s32.totalorder %s134, %s136
    %p143 = scmp.eq.s32.totalorder %s21, 1
    %p144 = por %p142, %p143
    %p145 = scmp.ne.s32.totalorder %s136, %s137
    %p146 = scmp.eq.s32.totalorder %s21, 0
    %p147 = por %p145, %p146
    %p148 = scmp.ne.s32.totalorder %s136, %s137
    %p149 = scmp.eq.s32.totalorder %s22, 1
    %p150 = por %p148, %p149
    %p152 = scmp.ne.s32.totalorder %s137, %s151
    %p153 = scmp.eq.s32.totalorder %s22, 0
    %p154 = por %p152, %p153
    %s156 = sadd.s32 %s155, 1
    %p159 = scmp.eq.s32.totalorder %s16, 1
    %p160 = scmp.ne.s32.totalorder %s155, %s157
    %p161 = scmp.eq.s32.totalorder %s16, 0
    %p162 = por %p160, %p161
    %p163 = scmp.ne.s32.totalorder %s155, %s157
    %p164 = scmp.eq.s32.totalorder %s21, 1
    %p165 = por %p163, %p164
    %p166 = scmp.ne.s32.totalorder %s157, %s158
    %p167 = scmp.eq.s32.totalorder %s21, 0
    %p168 = por %p166, %p167
    %p169 = scmp.ne.s32.totalorder %s157, %s158
    %p170 = scmp.eq.s32.totalorder %s22, 1
    %p171 = por %p169, %p170
    %p173 = scmp.ne.s32.totalorder %s158, %s172
    %p174 = scmp.eq.s32.totalorder %s22, 0
    %p175 = por %p173, %p174
    %s176 = sadd.s32 %s23, %s24
    %s177 = sadd.s32 %s35, %s31
    %s178 = ssub.s32 %s176, %s177
    %p179 = scmp.eq.s32.totalorder %s178, 0
    %s181 = sadd.s32 %s180, 1
    %s182 = scalar_select %p179, %s180, %s181
    %p185 = pneg %p179
    %p186 = scmp.eq.s32.totalorder %s16, 1
    %p187 = por %p185, %p186
    %p188 = scmp.ne.s32.totalorder %s180, %s183
    %p189 = scmp.eq.s32.totalorder %s16, 0
    %p190 = por %p188, %p189
    %p191 = scmp.ne.s32.totalorder %s180, %s183
    %p192 = scmp.eq.s32.totalorder %s21, 1
    %p193 = por %p191, %p192
    %p194 = scmp.ne.s32.totalorder %s183, %s184
    %p195 = scmp.eq.s32.totalorder %s21, 0
    %p196 = por %p194, %p195
    %p197 = scmp.ne.s32.totalorder %s183, %s184
    %p198 = scmp.eq.s32.totalorder %s22, 1
    %p199 = por %p197, %p198
    %p201 = scmp.ne.s32.totalorder %s184, %s200
    %p202 = scmp.eq.s32.totalorder %s22, 0
    %p203 = por %p201, %p202
    %s204 = sadd.s32 %s23, %s24
    %s205 = sadd.s32 %s35, %s31
    %s206 = ssub.s32 %s204, %s205
    %p207 = scmp.eq.s32.totalorder %s206, 0
    %s209 = sadd.s32 %s208, 1
    %s210 = scalar_select %p207, %s208, %s209
    %p213 = pneg %p207
    %p214 = scmp.eq.s32.totalorder %s16, 1
    %p215 = por %p213, %p214
    %p216 = scmp.ne.s32.totalorder %s208, %s211
    %p217 = scmp.eq.s32.totalorder %s16, 0
    %p218 = por %p216, %p217
    %p219 = scmp.ne.s32.totalorder %s208, %s211
    %p220 = scmp.eq.s32.totalorder %s21, 1
    %p221 = por %p219, %p220
    %p222 = scmp.ne.s32.totalorder %s211, %s212
    %p223 = scmp.eq.s32.totalorder %s21, 0
    %p224 = por %p222, %p223
    %p225 = scmp.ne.s32.totalorder %s211, %s212
    %p226 = scmp.eq.s32.totalorder %s22, 1
    %p227 = por %p225, %p226
    %p229 = scmp.ne.s32.totalorder %s212, %s228
    %p230 = scmp.eq.s32.totalorder %s22, 0
    %p231 = por %p229, %p230
    %s232 = ssub.s32 %s23, %s35
    %p233 = scmp.eq.s32.totalorder %s232, 0
    %s235 = sadd.s32 %s234, 1
    %s236 = scalar_select %p233, %s234, %s235
    %p239 = pneg %p233
    %p240 = scmp.eq.s32.totalorder %s16, 1
    %p241 = por %p239, %p240
    %p242 = scmp.ne.s32.totalorder %s234, %s237
    %p243 = scmp.eq.s32.totalorder %s16, 0
    %p244 = por %p242, %p243
    %p245 = scmp.ne.s32.totalorder %s234, %s237
    %p246 = scmp.eq.s32.totalorder %s21, 1
    %p247 = por %p245, %p246
    %p248 = scmp.ne.s32.totalorder %s237, %s238
    %p249 = scmp.eq.s32.totalorder %s21, 0
    %p250 = por %p248, %p249
    %p251 = scmp.ne.s32.totalorder %s237, %s238
    %p252 = scmp.eq.s32.totalorder %s22, 1
    %p253 = por %p251, %p252
    %p255 = scmp.ne.s32.totalorder %s238, %s254
    %p256 = scmp.eq.s32.totalorder %s22, 0
    %p257 = por %p255, %p256
    %s258 = ssub.s32 %s23, %s35
    %p259 = scmp.eq.s32.totalorder %s258, 0
    %s261 = sadd.s32 %s260, 1
    %s262 = scalar_select %p259, %s260, %s261
    %p265 = pneg %p259
    %p266 = scmp.eq.s32.totalorder %s16, 1
    %p267 = por %p265, %p266
    %p268 = scmp.ne.s32.totalorder %s260, %s263
    %p269 = scmp.eq.s32.totalorder %s16, 0
    %p270 = por %p268, %p269
    %p271 = scmp.ne.s32.totalorder %s260, %s263
    %p272 = scmp.eq.s32.totalorder %s21, 1
    %p273 = por %p271, %p272
    %p274 = scmp.ne.s32.totalorder %s263, %s264
    %p275 = scmp.eq.s32.totalorder %s21, 0
    %p276 = por %p274, %p275
    %p277 = scmp.ne.s32.totalorder %s263, %s264
    %p278 = scmp.eq.s32.totalorder %s22, 1
    %p279 = por %p277, %p278
    %p281 = scmp.ne.s32.totalorder %s264, %s280
    %p282 = scmp.eq.s32.totalorder %s22, 0
    %p283 = por %p281, %p282
    %p284 = scmp.le.s32.totalorder 1, %s16
    %p285 = scmp.lt.s32.totalorder %s16, 3
    %p286 = pnand %p284, %p285
    %p287 = pneg %p286
    // Predicated region
    $region9: #{basic_block_forward.4} parent=5 // pred_check
      _
    $region10: #{basic_block_forward.4} parent=5 // pred_check_branch
      %289 = sbr.rel (%p286) target = $region12
    $region11: #{basic_block_forward.4} parent=5 // pred_region
      %s290 = ssub.s32 %s16, 1
      // Predicated region
      $region13: #{basic_block_forward.4} parent=11 // pred_check
        %p291 = pneg %p105
      $region14: #{basic_block_forward.4} parent=11 // pred_check_branch
        %293 = sbr.rel (%p291) target = $region16
      $region15: #{basic_block_forward.4} parent=11 // pred_region
        _
      $region16: #{basic_block_forward.4} parent=11 // pred_fallthru
        _
      // Predicated region
      $region17: #{basic_block_forward.4} parent=11 // pred_check
        %p294 = pneg %p126
      $region18: #{basic_block_forward.4} parent=11 // pred_check_branch
        %296 = sbr.rel (%p294) target = $region20
      $region19: #{basic_block_forward.4} parent=11 // pred_region
        _
      $region20: #{basic_block_forward.4} parent=11 // pred_fallthru
        _
      // Predicated region
      $region21: #{basic_block_forward.4} parent=11 // pred_check
        %p297 = pneg %p147
      $region22: #{basic_block_forward.4} parent=11 // pred_check_branch
        %299 = sbr.rel (%p297) target = $region24
      $region23: #{basic_block_forward.4} parent=11 // pred_region
        _
      $region24: #{basic_block_forward.4} parent=11 // pred_fallthru
        _
      // Predicated region
      $region25: #{basic_block_forward.4} parent=11 // pred_check
        %p300 = pneg %p168
      $region26: #{basic_block_forward.4} parent=11 // pred_check_branch
        %302 = sbr.rel (%p300) target = $region28
      $region27: #{basic_block_forward.4} parent=11 // pred_region
        _
      $region28: #{basic_block_forward.4} parent=11 // pred_fallthru
        _
    $region12: #{basic_block_forward.4} parent=5 // pred_fallthru
      _
    %p303 = scmp.lt.s32.totalorder %s16, 2
    // Predicated region
    $region29: #{basic_block_forward.4} parent=5 // pred_check
      %p304 = pneg %p303
    $region30: #{basic_block_forward.4} parent=5 // pred_check_branch
      %306 = sbr.rel (%p304) target = $region32
    $region31: #{basic_block_forward.4} parent=5 // pred_region
      // Predicated region
      $region33: #{basic_block_forward.4} parent=31 // pred_check
        %p307 = pneg %p50
      $region34: #{basic_block_forward.4} parent=31 // pred_check_branch
        %309 = sbr.rel (%p307) target = $region36
      $region35: #{basic_block_forward.4} parent=31 // pred_region
        %s310 = sadd.s32 %s23, %s24
        %p311 = scmp.lt.s32.totalorder %s310, 1
        %s312 = scalar_select %p311, %s310, 1
        %s313 = smul.addr %s312, 8
        %s314 = smul.addr %s313, 4
        %s315 = scalar_lea.vmem %s0, %s314
        %s316 = sadd.s32 %s23, %s24
      $region36: #{basic_block_forward.4} parent=31 // pred_fallthru
        _
      // Predicated region
      $region37: #{basic_block_forward.4} parent=31 // pred_check
        %p317 = pneg %p78
      $region38: #{basic_block_forward.4} parent=31 // pred_check_branch
        %319 = sbr.rel (%p317) target = $region40
      $region39: #{basic_block_forward.4} parent=31 // pred_region
        %s320 = sadd.s32 %s23, %s24
        %p321 = scmp.lt.s32.totalorder %s320, 1
        %s322 = scalar_select %p321, %s320, 1
        %s323 = smul.addr %s322, 8
        %s324 = smul.addr %s323, 4
        %s325 = scalar_lea.vmem %s1, %s324
        %s326 = sadd.s32 %s23, %s24
      $region40: #{basic_block_forward.4} parent=31 // pred_fallthru
        _
    $region32: #{basic_block_forward.4} parent=5 // pred_fallthru
      _
    %p327 = scmp.le.s32.totalorder 1, %s16
    %p328 = scmp.lt.s32.totalorder %s16, 3
    %p329 = pnand %p327, %p328
    %p330 = pneg %p329
    // Predicated region
    $region41: #{basic_block_forward.4} parent=5 // pred_check
      _
    $region42: #{basic_block_forward.4} parent=5 // pred_check_branch
      %332 = sbr.rel (%p329) target = $region44
    $region43: #{basic_block_forward.4} parent=5 // pred_region
      %s333 = ssub.s32 %s16, 1
      %s334 = sadd.s32 %s25, %s26
      %p335 = scmp.lt.s32.totalorder %s334, 1
      %s336 = scalar_select %p335, %s334, 1
      %s337 = smul.addr %s336, 8
      %s338 = smul.addr %s337, 4
      %s339 = scalar_lea.vmem %s0, %s338
      %p340 = pneg %p56
      %p341 = pneg %p53
      %s342 = sadd.s32 %s25, %s26
      %p343 = scmp.lt.s32.totalorder %s342, 1
      %s344 = scalar_select %p343, %s342, 1
      %s345 = smul.addr %s344, 8
      %s346 = smul.addr %s345, 4
      %s347 = scalar_lea.vmem %s1, %s346
      %p348 = pneg %p84
      %p349 = pneg %p81
      %p350 = pneg %p105
      %p351 = pneg %p102
      %p352 = pneg %p126
      %p353 = pneg %p123
      %p354 = pneg %p147
      %p355 = pneg %p144
      %p356 = pneg %p168
      %p357 = pneg %p165
      %p358 = pneg %p196
      %p359 = pneg %p193
      %s360 = sadd.s32 %s25, %s26
      %p361 = scmp.lt.s32.totalorder %s360, 1
      %s362 = scalar_select %p361, %s360, 1
      %s363 = smul.addr %s362, 8
      %s364 = smul.addr %s363, 4
      %s365 = scalar_lea.vmem %s6, %s364
      %p366 = pneg %p224
      %p367 = pneg %p221
      %s368 = sadd.s32 %s25, %s26
      %p369 = scmp.lt.s32.totalorder %s368, 1
      %s370 = scalar_select %p369, %s368, 1
      %s371 = smul.addr %s370, 8
      %s372 = smul.addr %s371, 4
      %s373 = scalar_lea.vmem %s7, %s372
      %p374 = pneg %p250
      %p375 = pneg %p247
      %p376 = scmp.lt.s32.totalorder %s25, 1
      %s377 = scalar_select %p376, %s25, 1
      %s378 = smul.addr %s377, 2
      %s379 = scalar_lea.vmem %s8, %s378
      %p380 = pneg %p276
      %p381 = pneg %p273
      %p382 = scmp.lt.s32.totalorder %s25, 1
      %s383 = scalar_select %p382, %s25, 1
      %s384 = smul.addr %s383, 2
      %s385 = scalar_lea.vmem %s9, %s384
      %s386 = sadd.s32 %s25, %s26
      %p387 = scmp.lt.s32.totalorder %s386, 1
      %s388 = scalar_select %p387, %s386, 1
      %s389 = smul.addr %s388, 8
      %s390 = smul.addr %s389, 4
      %s391 = scalar_lea.vmem %s0, %s390
      %s392 = sadd.s32 %s25, %s26
      %s393 = sadd.s32 %s25, %s26
      %p394 = scmp.lt.s32.totalorder %s393, 1
      %s395 = scalar_select %p394, %s393, 1
      %s396 = smul.addr %s395, 8
      %s397 = smul.addr %s396, 4
      %s398 = scalar_lea.vmem %s1, %s397
      %s399 = sadd.s32 %s25, %s26
      %s400 = sadd.s32 %s25, %s26
      %p401 = scmp.lt.s32.totalorder %s400, 1
      %s402 = scalar_select %p401, %s400, 1
      %s403 = smul.addr %s402, 8
      %s404 = smul.addr %s403, 4
      %s405 = scalar_lea.vmem %s6, %s404
      %s406 = sadd.s32 %s25, %s26
      %s407 = sadd.s32 %s25, %s26
      %p408 = scmp.lt.s32.totalorder %s407, 1
      %s409 = scalar_select %p408, %s407, 1
      %s410 = smul.addr %s409, 8
      %s411 = smul.addr %s410, 4
      %s412 = scalar_lea.vmem %s7, %s411
      %s413 = sadd.s32 %s25, %s26
      %p414 = scmp.lt.s32.totalorder %s25, 1
      %s415 = scalar_select %p414, %s25, 1
      %s416 = smul.addr %s415, 2
      %s417 = scalar_lea.vmem %s8, %s416
      %p418 = scmp.lt.s32.totalorder %s25, 1
      %s419 = scalar_select %p418, %s25, 1
      %s420 = smul.addr %s419, 2
      %s421 = scalar_lea.vmem %s9, %s420
      %p423 = scmp.eq.s32.totalorder %s26, 0
      // Predicated region
      $region45: #{basic_block_forward.4} parent=43 // pred_check
        %p424 = pneg %p423
      $region46: #{basic_block_forward.4} parent=43 // pred_check_branch
        %426 = sbr.rel (%p424) target = $region48
      $region47: #{basic_block_forward.4} parent=43 // pred_region
        %427 = vst [vmem:[%s417] sm:$0x3] 0.0
        %428 = vst [vmem:[%s421] sm:$0x3] 0.0
      $region48: #{basic_block_forward.4} parent=43 // pred_fallthru
        _
      %v429 = vld [vmem:[%s2] sm:$0x1]
      %v430 = vld [vmem:[%s3] sm:$0x1]
      %s431 = sadd.s32 %s25, %s26
      %p432 = scmp.lt.s32.totalorder %s431, 2
      // Predicated region
      $region49: #{basic_block_forward.4} parent=43 // pred_check
        %p433 = pneg %p432
      $region50: #{basic_block_forward.4} parent=43 // pred_check_branch
        %435 = sbr.rel (%p433) target = $region52
      $region51: #{basic_block_forward.4} parent=43 // pred_region
        %v436 = vld [vmem:[%s391] sm:$0xf]
        %v437 = vld [vmem:[%s391 + $0x4] sm:$0xf]
        %v438 = vld [vmem:[%s391 + $0x8] sm:$0xf]
        %v439 = vld [vmem:[%s391 + $0xc] sm:$0xf]
        %v440 = vld [vmem:[%s391 + $0x10] sm:$0xf]
        %v441 = vld [vmem:[%s391 + $0x14] sm:$0xf]
        %v442 = vld [vmem:[%s391 + $0x18] sm:$0xf]
        %v443 = vld [vmem:[%s391 + $0x1c] sm:$0xf]
        %v444 = vunpack.c.l.bf16 %v436
        %v445 = vunpack.c.l.bf16 %v437
        %v446 = vunpack.c.l.bf16 %v438
        %v447 = vunpack.c.l.bf16 %v439
        %v448 = vunpack.c.l.bf16 %v440
        %v449 = vunpack.c.l.bf16 %v441
        %v450 = vunpack.c.l.bf16 %v442
        %v451 = vunpack.c.l.bf16 %v443
        %v453 = vperm.slane %v429, 0
        %v455 = vmul.f32 %v444, %v453
        %v456 = vmul.f32 %v445, %v453
        %v457 = vmul.f32 %v446, %v453
        %v458 = vmul.f32 %v447, %v453
        %v459 = vmul.f32 %v448, %v453
        %v460 = vmul.f32 %v449, %v453
        %v461 = vmul.f32 %v450, %v453
        %v462 = vmul.f32 %v451, %v453
        %v464 = vperm.slane %v430, 0
        %v466 = vadd.f32 %v455, %v464
        %v467 = vadd.f32 %v456, %v464
        %v468 = vadd.f32 %v457, %v464
        %v469 = vadd.f32 %v458, %v464
        %v470 = vadd.f32 %v459, %v464
        %v471 = vadd.f32 %v460, %v464
        %v472 = vadd.f32 %v461, %v464
        %v473 = vadd.f32 %v462, %v464
        %v474 = vmax.f32 %v466, 0.0
        %v475 = vmax.f32 %v467, 0.0
        %v476 = vmax.f32 %v468, 0.0
        %v477 = vmax.f32 %v469, 0.0
        %v478 = vmax.f32 %v470, 0.0
        %v479 = vmax.f32 %v471, 0.0
        %v480 = vmax.f32 %v472, 0.0
        %v481 = vmax.f32 %v473, 0.0
        %v482 = vpack.c.bf16 %v474, %v474
        %v483 = vpack.c.bf16 %v475, %v475
        %v484 = vpack.c.bf16 %v476, %v476
        %v485 = vpack.c.bf16 %v477, %v477
        %v486 = vpack.c.bf16 %v478, %v478
        %v487 = vpack.c.bf16 %v479, %v479
        %v488 = vpack.c.bf16 %v480, %v480
        %v489 = vpack.c.bf16 %v481, %v481
        %490 = vst [vmem:[#allocation2] sm:$0xf] 0
        %491 = vst [vmem:[#allocation2 + $0x4] sm:$0x1] 0
        %492 = vst [vmem:[#allocation2 + $0x8] sm:$0xf] 0
        %493 = vst [vmem:[#allocation2 + $0xc] sm:$0x1] 0
        %494 = vst [vmem:[#allocation2 + $0x10] sm:$0xf] 0
        %495 = vst [vmem:[#allocation2 + $0x14] sm:$0x1] 0
        %496 = vst [vmem:[#allocation2 + $0x18] sm:$0xf] 0
        %497 = vst [vmem:[#allocation2 + $0x1c] sm:$0x1] 0
        %498 = vst [vmem:[#allocation2 + $0x20] sm:$0xf] 0
        %499 = vst [vmem:[#allocation2 + $0x24] sm:$0x1] 0
        %500 = vst [vmem:[#allocation2 + $0x28] sm:$0xf] 0
        %501 = vst [vmem:[#allocation2 + $0x2c] sm:$0x1] 0
        %502 = vst [vmem:[#allocation2 + $0x30] sm:$0xf] 0
        %503 = vst [vmem:[#allocation2 + $0x34] sm:$0x1] 0
        %504 = vst [vmem:[#allocation2 + $0x38] sm:$0xf] 0
        %505 = vst [vmem:[#allocation2 + $0x3c] sm:$0x1] 0
        %506 = vst [vmem:[#allocation2 + $0x40] sm:$0xf] 0
        %507 = vst [vmem:[#allocation2 + $0x44] sm:$0x1] 0
        %508 = vst [vmem:[#allocation2 + $0x48] sm:$0xf] 0
        %509 = vst [vmem:[#allocation2 + $0x4c] sm:$0x1] 0
        %v511 = vshrl.u32 %v482, 16
        %v513 = vrot.slane %v511, 7
        %v514 = vshll.u32 %v482, 16
        %v516 = vor.u32 %v513, %v514
        %v517 = vrot.slane %v513, 4
        %v519 = vshrl.u32 %v483, 16
        %v521 = vrot.slane %v519, 7
        %v522 = vshll.u32 %v483, 16
        %v524 = vor.u32 %v521, %v522
        %v525 = vrot.slane %v521, 4
        %v527 = vshrl.u32 %v484, 16
        %v529 = vrot.slane %v527, 7
        %v530 = vshll.u32 %v484, 16
        %v532 = vor.u32 %v529, %v530
        %v533 = vrot.slane %v529, 4
        %v535 = vshrl.u32 %v485, 16
        %v537 = vrot.slane %v535, 7
        %v538 = vshll.u32 %v485, 16
        %v540 = vor.u32 %v537, %v538
        %v541 = vrot.slane %v537, 4
        %v543 = vshrl.u32 %v486, 16
        %v545 = vrot.slane %v543, 7
        %v546 = vshll.u32 %v486, 16
        %v548 = vor.u32 %v545, %v546
        %v549 = vrot.slane %v545, 4
        %v551 = vshrl.u32 %v487, 16
        %v553 = vrot.slane %v551, 7
        %v554 = vshll.u32 %v487, 16
        %v556 = vor.u32 %v553, %v554
        %v557 = vrot.slane %v553, 4
        %v559 = vshrl.u32 %v488, 16
        %v561 = vrot.slane %v559, 7
        %v562 = vshll.u32 %v488, 16
        %v564 = vor.u32 %v561, %v562
        %v565 = vrot.slane %v561, 4
        %v567 = vshrl.u32 %v489, 16
        %v569 = vrot.slane %v567, 7
        %v570 = vshll.u32 %v489, 16
        %v572 = vor.u32 %v569, %v570
        %v573 = vrot.slane %v569, 4
        %s590 = scalar_lea.vmem [#allocation2], 8
        %vm591 = vcmask 1043456
        %vm592 = vsmask.f32 7938
        %vm593 = vmand %vm591, %vm592
        %v594 = vld [vmem:[%s590] sm:$0xf]
        %v595 = vsel %vm593, %v516, %v594
        %596 = vst [vmem:[%s590] sm:$0xf] %v595
        %vm597 = vcmask 1040384
        %vm598 = vsmask.f32 256
        %vm599 = vmand %vm597, %vm598
        %v600 = vld [vmem:[%s590 + $0x4] sm:$0x1]
        %v601 = vsel %vm599, %v517, %v600
        %602 = vst [vmem:[%s590 + $0x4] sm:$0x1] %v601
        %v603 = vld [vmem:[%s590 + $0x8] sm:$0xf]
        %v604 = vsel %vm593, %v524, %v603
        %605 = vst [vmem:[%s590 + $0x8] sm:$0xf] %v604
        %v606 = vld [vmem:[%s590 + $0xc] sm:$0x1]
        %v607 = vsel %vm599, %v525, %v606
        %608 = vst [vmem:[%s590 + $0xc] sm:$0x1] %v607
        %v609 = vld [vmem:[%s590 + $0x10] sm:$0xf]
        %v610 = vsel %vm593, %v532, %v609
        %611 = vst [vmem:[%s590 + $0x10] sm:$0xf] %v610
        %v612 = vld [vmem:[%s590 + $0x14] sm:$0x1]
        %v613 = vsel %vm599, %v533, %v612
        %614 = vst [vmem:[%s590 + $0x14] sm:$0x1] %v613
        %v615 = vld [vmem:[%s590 + $0x18] sm:$0xf]
        %v616 = vsel %vm593, %v540, %v615
        %617 = vst [vmem:[%s590 + $0x18] sm:$0xf] %v616
        %v618 = vld [vmem:[%s590 + $0x1c] sm:$0x1]
        %v619 = vsel %vm599, %v541, %v618
        %620 = vst [vmem:[%s590 + $0x1c] sm:$0x1] %v619
        %v621 = vld [vmem:[%s590 + $0x20] sm:$0xf]
        %v622 = vsel %vm593, %v548, %v621
        %623 = vst [vmem:[%s590 + $0x20] sm:$0xf] %v622
        %v624 = vld [vmem:[%s590 + $0x24] sm:$0x1]
        %v625 = vsel %vm599, %v549, %v624
        %626 = vst [vmem:[%s590 + $0x24] sm:$0x1] %v625
        %v627 = vld [vmem:[%s590 + $0x28] sm:$0xf]
        %v628 = vsel %vm593, %v556, %v627
        %629 = vst [vmem:[%s590 + $0x28] sm:$0xf] %v628
        %v630 = vld [vmem:[%s590 + $0x2c] sm:$0x1]
        %v631 = vsel %vm599, %v557, %v630
        %632 = vst [vmem:[%s590 + $0x2c] sm:$0x1] %v631
        %v633 = vld [vmem:[%s590 + $0x30] sm:$0xf]
        %v634 = vsel %vm593, %v564, %v633
        %635 = vst [vmem:[%s590 + $0x30] sm:$0xf] %v634
        %v636 = vld [vmem:[%s590 + $0x34] sm:$0x1]
        %v637 = vsel %vm599, %v565, %v636
        %638 = vst [vmem:[%s590 + $0x34] sm:$0x1] %v637
        %v639 = vld [vmem:[%s590 + $0x38] sm:$0xf]
        %v640 = vsel %vm593, %v572, %v639
        %641 = vst [vmem:[%s590 + $0x38] sm:$0xf] %v640
        %v642 = vld [vmem:[%s590 + $0x3c] sm:$0x1]
        %v643 = vsel %vm599, %v573, %v642
        %644 = vst [vmem:[%s590 + $0x3c] sm:$0x1] %v643
        %645 = vst [vmem:[#allocation3] sm:$0xff] 0.0
        %646 = vst [vmem:[#allocation3 + $0x8] sm:$0xff] 0.0
        %647 = vst [vmem:[#allocation3 + $0x10] sm:$0xff] 0.0
        %648 = vst [vmem:[#allocation3 + $0x18] sm:$0xff] 0.0
        %649 = vst [vmem:[#allocation3 + $0x20] sm:$0xff] 0.0
        %650 = vst [vmem:[#allocation3 + $0x28] sm:$0xff] 0.0
        %651 = vst [vmem:[#allocation3 + $0x30] sm:$0xff] 0.0
        %652 = vst [vmem:[#allocation3 + $0x38] sm:$0xff] 0.0
        %v653 = vld [vmem:[#allocation2] sm:$0xf]
        %v654 = vld [vmem:[#allocation2 + $0x8] sm:$0xf]
        %v655 = vld [vmem:[#allocation2 + $0x10] sm:$0xf]
        %v656 = vld [vmem:[#allocation2 + $0x18] sm:$0xf]
        %v657 = vld [vmem:[#allocation2 + $0x20] sm:$0xf]
        %v658 = vld [vmem:[#allocation2 + $0x28] sm:$0xf]
        %v659 = vld [vmem:[#allocation2 + $0x30] sm:$0xf]
        %v660 = vld [vmem:[#allocation2 + $0x38] sm:$0xf]
        %v661 = vld [vmem:[#allocation3] sm:$0xff]
        %v662 = vld [vmem:[#allocation3 + $0x8] sm:$0xff]
        %v663 = vld [vmem:[#allocation3 + $0x10] sm:$0xff]
        %v664 = vld [vmem:[#allocation3 + $0x18] sm:$0xff]
        %v665 = vld [vmem:[#allocation3 + $0x20] sm:$0xff]
        %v666 = vld [vmem:[#allocation3 + $0x28] sm:$0xff]
        %v667 = vld [vmem:[#allocation3 + $0x30] sm:$0xff]
        %v668 = vld [vmem:[#allocation3 + $0x38] sm:$0xff]
        %v669 = vld [vmem:[%s4] sm:$0xf]
        %v670 = vld [vmem:[%s4 + $0x4] sm:$0xf]
        %v671 = vld [vmem:[%s4 + $0x8] sm:$0xf]
        %v672 = vld [vmem:[%s4 + $0xc] sm:$0xf]
        %v673 = vld [vmem:[%s4 + $0x10] sm:$0xf]
        %v674 = vld [vmem:[%s4 + $0x14] sm:$0xf]
        %v675 = vld [vmem:[%s4 + $0x18] sm:$0xf]
        %v676 = vld [vmem:[%s4 + $0x1c] sm:$0xf]
        %v677 = vld [vmem:[%s4 + $0x20] sm:$0xf]
        %v678 = vld [vmem:[%s4 + $0x24] sm:$0xf]
        %v679 = vld [vmem:[%s4 + $0x28] sm:$0xf]
        %v680 = vld [vmem:[%s4 + $0x2c] sm:$0xf]
        %v681 = vld [vmem:[%s4 + $0x30] sm:$0xf]
        %v682 = vld [vmem:[%s4 + $0x34] sm:$0xf]
        %v683 = vld [vmem:[%s4 + $0x38] sm:$0xf]
        %v684 = vld [vmem:[%s4 + $0x3c] sm:$0xf]
        %v693 = vunpack.c.l.b16 %v653
        %v694 = vunpack.c.l.b16 %v654
        %v695 = vunpack.c.l.b16 %v655
        %v696 = vunpack.c.l.b16 %v656
        %v697 = vunpack.c.l.b16 %v657
        %v698 = vunpack.c.l.b16 %v658
        %v699 = vunpack.c.l.b16 %v659
        %v700 = vunpack.c.l.b16 %v660
        %v701 = vpack.c.b16 %v694, %v693
        %v702 = vpack.c.b16 %v696, %v695
        %v703 = vpack.c.b16 %v698, %v697
        %v704 = vpack.c.b16 %v700, %v699
        %v725 = vunpack.c.l.b16 %v669
        %v726 = vunpack.c.l.b16 %v670
        %v727 = vunpack.c.l.b16 %v671
        %v728 = vunpack.c.l.b16 %v672
        %v729 = vunpack.c.l.b16 %v673
        %v730 = vunpack.c.l.b16 %v674
        %v731 = vunpack.c.l.b16 %v675
        %v732 = vunpack.c.l.b16 %v676
        %v733 = vunpack.c.l.b16 %v677
        %v734 = vunpack.c.l.b16 %v678
        %v735 = vunpack.c.l.b16 %v679
        %v736 = vunpack.c.l.b16 %v680
        %v737 = vunpack.c.l.b16 %v681
        %v738 = vunpack.c.l.b16 %v682
        %v739 = vunpack.c.l.b16 %v683
        %v740 = vunpack.c.l.b16 %v684
        %v741 = vpack.c.b16 %v726, %v725
        %v742 = vpack.c.b16 %v728, %v727
        %v743 = vpack.c.b16 %v730, %v729
        %v744 = vpack.c.b16 %v732, %v731
        %v745 = vpack.c.b16 %v734, %v733
        %v746 = vpack.c.b16 %v736, %v735
        %v747 = vpack.c.b16 %v738, %v737
        %v748 = vpack.c.b16 %v740, %v739
        %757 = vmatpush.bf16.msra.mxu0 %v748
        %758 = vmatpush.bf16.msra.mxu0 %v747
        %759 = vmatpush.bf16.msra.mxu0 %v746
        %760 = vmatpush.bf16.msra.mxu0 %v745
        %761 = vmatpush.bf16.msra.mxu0 %v744
        %762 = vmatpush.bf16.msra.mxu0 %v743
        %763 = vmatpush.bf16.msra.mxu0 %v742
        %764 = vmatpush.bf16.msra.mxu0 %v741
        %765 = vmatmul.bf16.gmra.mxu0 %v701
        %v766 = vpop.f32.mrf.mxu0
        %v767 = vadd.f32 0.0, %v766
        %v768 = vpop.f32.mrf.mxu0
        %v769 = vadd.f32 0.0, %v768
        %770 = vmatmul.bf16.gmra.mxu0 %v702
        %v771 = vpop.f32.mrf.mxu0
        %v772 = vadd.f32 0.0, %v771
        %v773 = vpop.f32.mrf.mxu0
        %v774 = vadd.f32 0.0, %v773
        %775 = vmatmul.bf16.gmra.mxu0 %v703
        %v776 = vpop.f32.mrf.mxu0
        %v777 = vadd.f32 0.0, %v776
        %v778 = vpop.f32.mrf.mxu0
        %v779 = vadd.f32 0.0, %v778
        %780 = vmatmul.bf16.gmra.mxu0 %v704
        %v781 = vpop.f32.mrf.mxu0
        %v782 = vadd.f32 0.0, %v781
        %v783 = vpop.f32.mrf.mxu0
        %v784 = vadd.f32 0.0, %v783
        %785 = vdwg.mxu0
        %v786 = vadd.f32 %v661, %v767
        %v787 = vadd.f32 %v662, %v769
        %v788 = vadd.f32 %v663, %v772
        %v789 = vadd.f32 %v664, %v774
        %v790 = vadd.f32 %v665, %v777
        %v791 = vadd.f32 %v666, %v779
        %v792 = vadd.f32 %v667, %v782
        %v793 = vadd.f32 %v668, %v784
        %794 = vst [vmem:[#allocation3] sm:$0xff] %v786
        %795 = vst [vmem:[#allocation3 + $0x8] sm:$0xff] %v787
        %796 = vst [vmem:[#allocation3 + $0x10] sm:$0xff] %v788
        %797 = vst [vmem:[#allocation3 + $0x18] sm:$0xff] %v789
        %798 = vst [vmem:[#allocation3 + $0x20] sm:$0xff] %v790
        %799 = vst [vmem:[#allocation3 + $0x28] sm:$0xff] %v791
        %800 = vst [vmem:[#allocation3 + $0x30] sm:$0xff] %v792
        %801 = vst [vmem:[#allocation3 + $0x38] sm:$0xff] %v793
        %v802 = vld [vmem:[#allocation2] sm:$0xf]
        %v803 = vld [vmem:[#allocation2 + $0x4] sm:$0x1]
        %v804 = vld [vmem:[#allocation2 + $0x8] sm:$0xf]
        %v805 = vld [vmem:[#allocation2 + $0xc] sm:$0x1]
        %v806 = vld [vmem:[#allocation2 + $0x10] sm:$0xf]
        %v807 = vld [vmem:[#allocation2 + $0x14] sm:$0x1]
        %v808 = vld [vmem:[#allocation2 + $0x18] sm:$0xf]
        %v809 = vld [vmem:[#allocation2 + $0x1c] sm:$0x1]
        %v810 = vld [vmem:[#allocation2 + $0x20] sm:$0xf]
        %v811 = vld [vmem:[#allocation2 + $0x24] sm:$0x1]
        %v812 = vld [vmem:[#allocation2 + $0x28] sm:$0xf]
        %v813 = vld [vmem:[#allocation2 + $0x2c] sm:$0x1]
        %v814 = vld [vmem:[#allocation2 + $0x30] sm:$0xf]
        %v815 = vld [vmem:[#allocation2 + $0x34] sm:$0x1]
        %v816 = vld [vmem:[#allocation2 + $0x38] sm:$0xf]
        %v817 = vld [vmem:[#allocation2 + $0x3c] sm:$0x1]
        %vm818 = vsmask.f32 3328
        %vm819 = vsmask.f32 7440
        %vm820 = vmor %vm818, %vm819
        %v822 = vshrl.u32 %v802, 16
        %v824 = vrot.slane %v822, 4
        %v825 = vshll.u32 %v802, 16
        %v827 = vrot.slane %v825, 5
        %v828 = vor.u32 %v824, %v827
        %v829 = vrot.slane %v828, 4
        %v831 = vshll.u32 %v803, 16
        %v833 = vrot.slane %v831, 5
        %v834 = vsel %vm820, %v829, %v833
        %v836 = vshrl.u32 %v804, 16
        %v838 = vrot.slane %v836, 4
        %v839 = vshll.u32 %v804, 16
        %v841 = vrot.slane %v839, 5
        %v842 = vor.u32 %v838, %v841
        %v843 = vrot.slane %v842, 4
        %v845 = vshll.u32 %v805, 16
        %v847 = vrot.slane %v845, 5
        %v848 = vsel %vm820, %v843, %v847
        %v850 = vshrl.u32 %v806, 16
        %v852 = vrot.slane %v850, 4
        %v853 = vshll.u32 %v806, 16
        %v855 = vrot.slane %v853, 5
        %v856 = vor.u32 %v852, %v855
        %v857 = vrot.slane %v856, 4
        %v859 = vshll.u32 %v807, 16
        %v861 = vrot.slane %v859, 5
        %v862 = vsel %vm820, %v857, %v861
        %v864 = vshrl.u32 %v808, 16
        %v866 = vrot.slane %v864, 4
        %v867 = vshll.u32 %v808, 16
        %v869 = vrot.slane %v867, 5
        %v870 = vor.u32 %v866, %v869
        %v871 = vrot.slane %v870, 4
        %v873 = vshll.u32 %v809, 16
        %v875 = vrot.slane %v873, 5
        %v876 = vsel %vm820, %v871, %v875
        %v878 = vshrl.u32 %v810, 16
        %v880 = vrot.slane %v878, 4
        %v881 = vshll.u32 %v810, 16
        %v883 = vrot.slane %v881, 5
        %v884 = vor.u32 %v880, %v883
        %v885 = vrot.slane %v884, 4
        %v887 = vshll.u32 %v811, 16
        %v889 = vrot.slane %v887, 5
        %v890 = vsel %vm820, %v885, %v889
        %v892 = vshrl.u32 %v812, 16
        %v894 = vrot.slane %v892, 4
        %v895 = vshll.u32 %v812, 16
        %v897 = vrot.slane %v895, 5
        %v898 = vor.u32 %v894, %v897
        %v899 = vrot.slane %v898, 4
        %v901 = vshll.u32 %v813, 16
        %v903 = vrot.slane %v901, 5
        %v904 = vsel %vm820, %v899, %v903
        %v906 = vshrl.u32 %v814, 16
        %v908 = vrot.slane %v906, 4
        %v909 = vshll.u32 %v814, 16
        %v911 = vrot.slane %v909, 5
        %v912 = vor.u32 %v908, %v911
        %v913 = vrot.slane %v912, 4
        %v915 = vshll.u32 %v815, 16
        %v917 = vrot.slane %v915, 5
        %v918 = vsel %vm820, %v913, %v917
        %v920 = vshrl.u32 %v816, 16
        %v922 = vrot.slane %v920, 4
        %v923 = vshll.u32 %v816, 16
        %v925 = vrot.slane %v923, 5
        %v926 = vor.u32 %v922, %v925
        %v927 = vrot.slane %v926, 4
        %v929 = vshll.u32 %v817, 16
        %v931 = vrot.slane %v929, 5
        %v932 = vsel %vm820, %v927, %v931
        %v933 = vld [vmem:[#allocation3] sm:$0xff]
        %v934 = vld [vmem:[#allocation3 + $0x8] sm:$0xff]
        %v935 = vld [vmem:[#allocation3 + $0x10] sm:$0xff]
        %v936 = vld [vmem:[#allocation3 + $0x18] sm:$0xff]
        %v937 = vld [vmem:[#allocation3 + $0x20] sm:$0xff]
        %v938 = vld [vmem:[#allocation3 + $0x28] sm:$0xff]
        %v939 = vld [vmem:[#allocation3 + $0x30] sm:$0xff]
        %v940 = vld [vmem:[#allocation3 + $0x38] sm:$0xff]
        %s941 = scalar_lea.vmem %s4, 64
        %v942 = vld [vmem:[%s941] sm:$0xf]
        %v943 = vld [vmem:[%s941 + $0x4] sm:$0xf]
        %v944 = vld [vmem:[%s941 + $0x8] sm:$0xf]
        %v945 = vld [vmem:[%s941 + $0xc] sm:$0xf]
        %v946 = vld [vmem:[%s941 + $0x10] sm:$0xf]
        %v947 = vld [vmem:[%s941 + $0x14] sm:$0xf]
        %v948 = vld [vmem:[%s941 + $0x18] sm:$0xf]
        %v949 = vld [vmem:[%s941 + $0x1c] sm:$0xf]
        %v950 = vld [vmem:[%s941 + $0x20] sm:$0xf]
        %v951 = vld [vmem:[%s941 + $0x24] sm:$0xf]
        %v952 = vld [vmem:[%s941 + $0x28] sm:$0xf]
        %v953 = vld [vmem:[%s941 + $0x2c] sm:$0xf]
        %v954 = vld [vmem:[%s941 + $0x30] sm:$0xf]
        %v955 = vld [vmem:[%s941 + $0x34] sm:$0xf]
        %v956 = vld [vmem:[%s941 + $0x38] sm:$0xf]
        %v957 = vld [vmem:[%s941 + $0x3c] sm:$0xf]
        %v958 = vunpack.c.l.b16 %v834
        %v959 = vunpack.c.l.b16 %v848
        %v960 = vunpack.c.l.b16 %v862
        %v961 = vunpack.c.l.b16 %v876
        %v962 = vunpack.c.l.b16 %v890
        %v963 = vunpack.c.l.b16 %v904
        %v964 = vunpack.c.l.b16 %v918
        %v965 = vunpack.c.l.b16 %v932
        %v966 = vpack.c.b16 %v959, %v958
        %v967 = vpack.c.b16 %v961, %v960
        %v968 = vpack.c.b16 %v963, %v962
        %v969 = vpack.c.b16 %v965, %v964
        %v990 = vunpack.c.l.b16 %v942
        %v991 = vunpack.c.l.b16 %v943
        %v992 = vunpack.c.l.b16 %v944
        %v993 = vunpack.c.l.b16 %v945
        %v994 = vunpack.c.l.b16 %v946
        %v995 = vunpack.c.l.b16 %v947
        %v996 = vunpack.c.l.b16 %v948
        %v997 = vunpack.c.l.b16 %v949
        %v998 = vunpack.c.l.b16 %v950
        %v999 = vunpack.c.l.b16 %v951
        %v1000 = vunpack.c.l.b16 %v952
        %v1001 = vunpack.c.l.b16 %v953
        %v1002 = vunpack.c.l.b16 %v954
        %v1003 = vunpack.c.l.b16 %v955
        %v1004 = vunpack.c.l.b16 %v956
        %v1005 = vunpack.c.l.b16 %v957
        %v1006 = vpack.c.b16 %v991, %v990
        %v1007 = vpack.c.b16 %v993, %v992
        %v1008 = vpack.c.b16 %v995, %v994
        %v1009 = vpack.c.b16 %v997, %v996
        %v1010 = vpack.c.b16 %v999, %v998
        %v1011 = vpack.c.b16 %v1001, %v1000
        %v1012 = vpack.c.b16 %v1003, %v1002
        %v1013 = vpack.c.b16 %v1005, %v1004
        %1022 = vmatpush.bf16.msra.mxu0 %v1013
        %1023 = vmatpush.bf16.msra.mxu0 %v1012
        %1024 = vmatpush.bf16.msra.mxu0 %v1011
        %1025 = vmatpush.bf16.msra.mxu0 %v1010
        %1026 = vmatpush.bf16.msra.mxu0 %v1009
        %1027 = vmatpush.bf16.msra.mxu0 %v1008
        %1028 = vmatpush.bf16.msra.mxu0 %v1007
        %1029 = vmatpush.bf16.msra.mxu0 %v1006
        %1030 = vmatmul.bf16.gmra.mxu0 %v966
        %v1031 = vpop.f32.mrf.mxu0
        %v1032 = vadd.f32 0.0, %v1031
        %v1033 = vpop.f32.mrf.mxu0
        %v1034 = vadd.f32 0.0, %v1033
        %1035 = vmatmul.bf16.gmra.mxu0 %v967
        %v1036 = vpop.f32.mrf.mxu0
        %v1037 = vadd.f32 0.0, %v1036
        %v1038 = vpop.f32.mrf.mxu0
        %v1039 = vadd.f32 0.0, %v1038
        %1040 = vmatmul.bf16.gmra.mxu0 %v968
        %v1041 = vpop.f32.mrf.mxu0
        %v1042 = vadd.f32 0.0, %v1041
        %v1043 = vpop.f32.mrf.mxu0
        %v1044 = vadd.f32 0.0, %v1043
        %1045 = vmatmul.bf16.gmra.mxu0 %v969
        %v1046 = vpop.f32.mrf.mxu0
        %v1047 = vadd.f32 0.0, %v1046
        %v1048 = vpop.f32.mrf.mxu0
        %v1049 = vadd.f32 0.0, %v1048
        %1050 = vdwg.mxu0
        %v1051 = vadd.f32 %v933, %v1032
        %v1052 = vadd.f32 %v934, %v1034
        %v1053 = vadd.f32 %v935, %v1037
        %v1054 = vadd.f32 %v936, %v1039
        %v1055 = vadd.f32 %v937, %v1042
        %v1056 = vadd.f32 %v938, %v1044
        %v1057 = vadd.f32 %v939, %v1047
        %v1058 = vadd.f32 %v940, %v1049
        %1059 = vst [vmem:[#allocation3] sm:$0xff] %v1051
        %1060 = vst [vmem:[#allocation3 + $0x8] sm:$0xff] %v1052
        %1061 = vst [vmem:[#allocation3 + $0x10] sm:$0xff] %v1053
        %1062 = vst [vmem:[#allocation3 + $0x18] sm:$0xff] %v1054
        %1063 = vst [vmem:[#allocation3 + $0x20] sm:$0xff] %v1055
        %1064 = vst [vmem:[#allocation3 + $0x28] sm:$0xff] %v1056
        %1065 = vst [vmem:[#allocation3 + $0x30] sm:$0xff] %v1057
        %1066 = vst [vmem:[#allocation3 + $0x38] sm:$0xff] %v1058
        %v1067 = vld [vmem:[#allocation2] sm:$0xe]
        %v1068 = vld [vmem:[#allocation2 + $0x4] sm:$0x1]
        %v1069 = vld [vmem:[#allocation2 + $0x8] sm:$0xe]
        %v1070 = vld [vmem:[#allocation2 + $0xc] sm:$0x1]
        %v1071 = vld [vmem:[#allocation2 + $0x10] sm:$0xe]
        %v1072 = vld [vmem:[#allocation2 + $0x14] sm:$0x1]
        %v1073 = vld [vmem:[#allocation2 + $0x18] sm:$0xe]
        %v1074 = vld [vmem:[#allocation2 + $0x1c] sm:$0x1]
        %v1075 = vld [vmem:[#allocation2 + $0x20] sm:$0xe]
        %v1076 = vld [vmem:[#allocation2 + $0x24] sm:$0x1]
        %v1077 = vld [vmem:[#allocation2 + $0x28] sm:$0xe]
        %v1078 = vld [vmem:[#allocation2 + $0x2c] sm:$0x1]
        %v1079 = vld [vmem:[#allocation2 + $0x30] sm:$0xe]
        %v1080 = vld [vmem:[#allocation2 + $0x34] sm:$0x1]
        %v1081 = vld [vmem:[#allocation2 + $0x38] sm:$0xe]
        %v1082 = vld [vmem:[#allocation2 + $0x3c] sm:$0x1]
        %vm1099 = vcmask 1042432
        %vm1100 = vcmask 1046532
        %vm1101 = vmor %vm1099, %vm1100
        %v1102 = vrot.slane %v1067, 5
        %v1103 = vrot.slane %v1102, 4
        %v1104 = vrot.slane %v1068, 5
        %v1105 = vsel %vm1101, %v1103, %v1104
        %v1106 = vrot.slane %v1069, 5
        %v1107 = vrot.slane %v1106, 4
        %v1108 = vrot.slane %v1070, 5
        %v1109 = vsel %vm1101, %v1107, %v1108
        %v1110 = vrot.slane %v1071, 5
        %v1111 = vrot.slane %v1110, 4
        %v1112 = vrot.slane %v1072, 5
        %v1113 = vsel %vm1101, %v1111, %v1112
        %v1114 = vrot.slane %v1073, 5
        %v1115 = vrot.slane %v1114, 4
        %v1116 = vrot.slane %v1074, 5
        %v1117 = vsel %vm1101, %v1115, %v1116
        %v1118 = vrot.slane %v1075, 5
        %v1119 = vrot.slane %v1118, 4
        %v1120 = vrot.slane %v1076, 5
        %v1121 = vsel %vm1101, %v1119, %v1120
        %v1122 = vrot.slane %v1077, 5
        %v1123 = vrot.slane %v1122, 4
        %v1124 = vrot.slane %v1078, 5
        %v1125 = vsel %vm1101, %v1123, %v1124
        %v1126 = vrot.slane %v1079, 5
        %v1127 = vrot.slane %v1126, 4
        %v1128 = vrot.slane %v1080, 5
        %v1129 = vsel %vm1101, %v1127, %v1128
        %v1130 = vrot.slane %v1081, 5
        %v1131 = vrot.slane %v1130, 4
        %v1132 = vrot.slane %v1082, 5
        %v1133 = vsel %vm1101, %v1131, %v1132
        %v1134 = vld [vmem:[#allocation3] sm:$0xff]
        %v1135 = vld [vmem:[#allocation3 + $0x8] sm:$0xff]
        %v1136 = vld [vmem:[#allocation3 + $0x10] sm:$0xff]
        %v1137 = vld [vmem:[#allocation3 + $0x18] sm:$0xff]
        %v1138 = vld [vmem:[#allocation3 + $0x20] sm:$0xff]
        %v1139 = vld [vmem:[#allocation3 + $0x28] sm:$0xff]
        %v1140 = vld [vmem:[#allocation3 + $0x30] sm:$0xff]
        %v1141 = vld [vmem:[#allocation3 + $0x38] sm:$0xff]
        %s1142 = scalar_lea.vmem %s4, 128
        %v1143 = vld [vmem:[%s1142] sm:$0xf]
        %v1144 = vld [vmem:[%s1142 + $0x4] sm:$0xf]
        %v1145 = vld [vmem:[%s1142 + $0x8] sm:$0xf]
        %v1146 = vld [vmem:[%s1142 + $0xc] sm:$0xf]
        %v1147 = vld [vmem:[%s1142 + $0x10] sm:$0xf]
        %v1148 = vld [vmem:[%s1142 + $0x14] sm:$0xf]
        %v1149 = vld [vmem:[%s1142 + $0x18] sm:$0xf]
        %v1150 = vld [vmem:[%s1142 + $0x1c] sm:$0xf]
        %v1151 = vld [vmem:[%s1142 + $0x20] sm:$0xf]
        %v1152 = vld [vmem:[%s1142 + $0x24] sm:$0xf]
        %v1153 = vld [vmem:[%s1142 + $0x28] sm:$0xf]
        %v1154 = vld [vmem:[%s1142 + $0x2c] sm:$0xf]
        %v1155 = vld [vmem:[%s1142 + $0x30] sm:$0xf]
        %v1156 = vld [vmem:[%s1142 + $0x34] sm:$0xf]
        %v1157 = vld [vmem:[%s1142 + $0x38] sm:$0xf]
        %v1158 = vld [vmem:[%s1142 + $0x3c] sm:$0xf]
        %v1159 = vunpack.c.l.b16 %v1105
        %v1160 = vunpack.c.l.b16 %v1109
        %v1161 = vunpack.c.l.b16 %v1113
        %v1162 = vunpack.c.l.b16 %v1117
        %v1163 = vunpack.c.l.b16 %v1121
        %v1164 = vunpack.c.l.b16 %v1125
        %v1165 = vunpack.c.l.b16 %v1129
        %v1166 = vunpack.c.l.b16 %v1133
        %v1167 = vpack.c.b16 %v1160, %v1159
        %v1168 = vpack.c.b16 %v1162, %v1161
        %v1169 = vpack.c.b16 %v1164, %v1163
        %v1170 = vpack.c.b16 %v1166, %v1165
        %v1191 = vunpack.c.l.b16 %v1143
        %v1192 = vunpack.c.l.b16 %v1144
        %v1193 = vunpack.c.l.b16 %v1145
        %v1194 = vunpack.c.l.b16 %v1146
        %v1195 = vunpack.c.l.b16 %v1147
        %v1196 = vunpack.c.l.b16 %v1148
        %v1197 = vunpack.c.l.b16 %v1149
        %v1198 = vunpack.c.l.b16 %v1150
        %v1199 = vunpack.c.l.b16 %v1151
        %v1200 = vunpack.c.l.b16 %v1152
        %v1201 = vunpack.c.l.b16 %v1153
        %v1202 = vunpack.c.l.b16 %v1154
        %v1203 = vunpack.c.l.b16 %v1155
        %v1204 = vunpack.c.l.b16 %v1156
        %v1205 = vunpack.c.l.b16 %v1157
        %v1206 = vunpack.c.l.b16 %v1158
        %v1207 = vpack.c.b16 %v1192, %v1191
        %v1208 = vpack.c.b16 %v1194, %v1193
        %v1209 = vpack.c.b16 %v1196, %v1195
        %v1210 = vpack.c.b16 %v1198, %v1197
        %v1211 = vpack.c.b16 %v1200, %v1199
        %v1212 = vpack.c.b16 %v1202, %v1201
        %v1213 = vpack.c.b16 %v1204, %v1203
        %v1214 = vpack.c.b16 %v1206, %v1205
        %1223 = vmatpush.bf16.msra.mxu0 %v1214
        %1224 = vmatpush.bf16.msra.mxu0 %v1213
        %1225 = vmatpush.bf16.msra.mxu0 %v1212
        %1226 = vmatpush.bf16.msra.mxu0 %v1211
        %1227 = vmatpush.bf16.msra.mxu0 %v1210
        %1228 = vmatpush.bf16.msra.mxu0 %v1209
        %1229 = vmatpush.bf16.msra.mxu0 %v1208
        %1230 = vmatpush.bf16.msra.mxu0 %v1207
        %1231 = vmatmul.bf16.gmra.mxu0 %v1167
        %v1232 = vpop.f32.mrf.mxu0
        %v1233 = vadd.f32 0.0, %v1232
        %v1234 = vpop.f32.mrf.mxu0
        %v1235 = vadd.f32 0.0, %v1234
        %1236 = vmatmul.bf16.gmra.mxu0 %v1168
        %v1237 = vpop.f32.mrf.mxu0
        %v1238 = vadd.f32 0.0, %v1237
        %v1239 = vpop.f32.mrf.mxu0
        %v1240 = vadd.f32 0.0, %v1239
        %1241 = vmatmul.bf16.gmra.mxu0 %v1169
        %v1242 = vpop.f32.mrf.mxu0
        %v1243 = vadd.f32 0.0, %v1242
        %v1244 = vpop.f32.mrf.mxu0
        %v1245 = vadd.f32 0.0, %v1244
        %1246 = vmatmul.bf16.gmra.mxu0 %v1170
        %v1247 = vpop.f32.mrf.mxu0
        %v1248 = vadd.f32 0.0, %v1247
        %v1249 = vpop.f32.mrf.mxu0
        %v1250 = vadd.f32 0.0, %v1249
        %1251 = vdwg.mxu0
        %v1252 = vadd.f32 %v1134, %v1233
        %v1253 = vadd.f32 %v1135, %v1235
        %v1254 = vadd.f32 %v1136, %v1238
        %v1255 = vadd.f32 %v1137, %v1240
        %v1256 = vadd.f32 %v1138, %v1243
        %v1257 = vadd.f32 %v1139, %v1245
        %v1258 = vadd.f32 %v1140, %v1248
        %v1259 = vadd.f32 %v1141, %v1250
        %1260 = vst [vmem:[#allocation3] sm:$0xff] %v1252
        %1261 = vst [vmem:[#allocation3 + $0x8] sm:$0xff] %v1253
        %1262 = vst [vmem:[#allocation3 + $0x10] sm:$0xff] %v1254
        %1263 = vst [vmem:[#allocation3 + $0x18] sm:$0xff] %v1255
        %1264 = vst [vmem:[#allocation3 + $0x20] sm:$0xff] %v1256
        %1265 = vst [vmem:[#allocation3 + $0x28] sm:$0xff] %v1257
        %1266 = vst [vmem:[#allocation3 + $0x30] sm:$0xff] %v1258
        %1267 = vst [vmem:[#allocation3 + $0x38] sm:$0xff] %v1259
        %v1268 = vld [vmem:[%s590] sm:$0xf]
        %v1269 = vld [vmem:[%s590 + $0x8] sm:$0xf]
        %v1270 = vld [vmem:[%s590 + $0x10] sm:$0xf]
        %v1271 = vld [vmem:[%s590 + $0x18] sm:$0xf]
        %v1272 = vld [vmem:[%s590 + $0x20] sm:$0xf]
        %v1273 = vld [vmem:[%s590 + $0x28] sm:$0xf]
        %v1274 = vld [vmem:[%s590 + $0x30] sm:$0xf]
        %v1275 = vld [vmem:[%s590 + $0x38] sm:$0xf]
        %v1276 = vld [vmem:[#allocation3] sm:$0xff]
        %v1277 = vld [vmem:[#allocation3 + $0x8] sm:$0xff]
        %v1278 = vld [vmem:[#allocation3 + $0x10] sm:$0xff]
        %v1279 = vld [vmem:[#allocation3 + $0x18] sm:$0xff]
        %v1280 = vld [vmem:[#allocation3 + $0x20] sm:$0xff]
        %v1281 = vld [vmem:[#allocation3 + $0x28] sm:$0xff]
        %v1282 = vld [vmem:[#allocation3 + $0x30] sm:$0xff]
        %v1283 = vld [vmem:[#allocation3 + $0x38] sm:$0xff]
        %s1284 = scalar_lea.vmem %s4, 192
        %v1285 = vld [vmem:[%s1284] sm:$0xf]
        %v1286 = vld [vmem:[%s1284 + $0x4] sm:$0xf]
        %v1287 = vld [vmem:[%s1284 + $0x8] sm:$0xf]
        %v1288 = vld [vmem:[%s1284 + $0xc] sm:$0xf]
        %v1289 = vld [vmem:[%s1284 + $0x10] sm:$0xf]
        %v1290 = vld [vmem:[%s1284 + $0x14] sm:$0xf]
        %v1291 = vld [vmem:[%s1284 + $0x18] sm:$0xf]
        %v1292 = vld [vmem:[%s1284 + $0x1c] sm:$0xf]
        %v1293 = vld [vmem:[%s1284 + $0x20] sm:$0xf]
        %v1294 = vld [vmem:[%s1284 + $0x24] sm:$0xf]
        %v1295 = vld [vmem:[%s1284 + $0x28] sm:$0xf]
        %v1296 = vld [vmem:[%s1284 + $0x2c] sm:$0xf]
        %v1297 = vld [vmem:[%s1284 + $0x30] sm:$0xf]
        %v1298 = vld [vmem:[%s1284 + $0x34] sm:$0xf]
        %v1299 = vld [vmem:[%s1284 + $0x38] sm:$0xf]
        %v1300 = vld [vmem:[%s1284 + $0x3c] sm:$0xf]
        %v1309 = vunpack.c.l.b16 %v1268
        %v1310 = vunpack.c.l.b16 %v1269
        %v1311 = vunpack.c.l.b16 %v1270
        %v1312 = vunpack.c.l.b16 %v1271
        %v1313 = vunpack.c.l.b16 %v1272
        %v1314 = vunpack.c.l.b16 %v1273
        %v1315 = vunpack.c.l.b16 %v1274
        %v1316 = vunpack.c.l.b16 %v1275
        %v1317 = vpack.c.b16 %v1310, %v1309
        %v1318 = vpack.c.b16 %v1312, %v1311
        %v1319 = vpack.c.b16 %v1314, %v1313
        %v1320 = vpack.c.b16 %v1316, %v1315
        %v1341 = vunpack.c.l.b16 %v1285
        %v1342 = vunpack.c.l.b16 %v1286
        %v1343 = vunpack.c.l.b16 %v1287
        %v1344 = vunpack.c.l.b16 %v1288
        %v1345 = vunpack.c.l.b16 %v1289
        %v1346 = vunpack.c.l.b16 %v1290
        %v1347 = vunpack.c.l.b16 %v1291
        %v1348 = vunpack.c.l.b16 %v1292
        %v1349 = vunpack.c.l.b16 %v1293
        %v1350 = vunpack.c.l.b16 %v1294
        %v1351 = vunpack.c.l.b16 %v1295
        %v1352 = vunpack.c.l.b16 %v1296
        %v1353 = vunpack.c.l.b16 %v1297
        %v1354 = vunpack.c.l.b16 %v1298
        %v1355 = vunpack.c.l.b16 %v1299
        %v1356 = vunpack.c.l.b16 %v1300
        %v1357 = vpack.c.b16 %v1342, %v1341
        %v1358 = vpack.c.b16 %v1344, %v1343
        %v1359 = vpack.c.b16 %v1346, %v1345
        %v1360 = vpack.c.b16 %v1348, %v1347
        %v1361 = vpack.c.b16 %v1350, %v1349
        %v1362 = vpack.c.b16 %v1352, %v1351
        %v1363 = vpack.c.b16 %v1354, %v1353
        %v1364 = vpack.c.b16 %v1356, %v1355
        %1373 = vmatpush.bf16.msra.mxu0 %v1364
        %1374 = vmatpush.bf16.msra.mxu0 %v1363
        %1375 = vmatpush.bf16.msra.mxu0 %v1362
        %1376 = vmatpush.bf16.msra.mxu0 %v1361
        %1377 = vmatpush.bf16.msra.mxu0 %v1360
        %1378 = vmatpush.bf16.msra.mxu0 %v1359
        %1379 = vmatpush.bf16.msra.mxu0 %v1358
        %1380 = vmatpush.bf16.msra.mxu0 %v1357
        %1381 = vmatmul.bf16.gmra.mxu0 %v1317
        %v1382 = vpop.f32.mrf.mxu0
        %v1383 = vadd.f32 0.0, %v1382
        %v1384 = vpop.f32.mrf.mxu0
        %v1385 = vadd.f32 0.0, %v1384
        %1386 = vmatmul.bf16.gmra.mxu0 %v1318
        %v1387 = vpop.f32.mrf.mxu0
        %v1388 = vadd.f32 0.0, %v1387
        %v1389 = vpop.f32.mrf.mxu0
        %v1390 = vadd.f32 0.0, %v1389
        %1391 = vmatmul.bf16.gmra.mxu0 %v1319
        %v1392 = vpop.f32.mrf.mxu0
        %v1393 = vadd.f32 0.0, %v1392
        %v1394 = vpop.f32.mrf.mxu0
        %v1395 = vadd.f32 0.0, %v1394
        %1396 = vmatmul.bf16.gmra.mxu0 %v1320
        %v1397 = vpop.f32.mrf.mxu0
        %v1398 = vadd.f32 0.0, %v1397
        %v1399 = vpop.f32.mrf.mxu0
        %v1400 = vadd.f32 0.0, %v1399
        %1401 = vdwg.mxu0
        %v1402 = vadd.f32 %v1276, %v1383
        %v1403 = vadd.f32 %v1277, %v1385
        %v1404 = vadd.f32 %v1278, %v1388
        %v1405 = vadd.f32 %v1279, %v1390
        %v1406 = vadd.f32 %v1280, %v1393
        %v1407 = vadd.f32 %v1281, %v1395
        %v1408 = vadd.f32 %v1282, %v1398
        %v1409 = vadd.f32 %v1283, %v1400
        %1410 = vst [vmem:[#allocation3] sm:$0xff] %v1402
        %1411 = vst [vmem:[#allocation3 + $0x8] sm:$0xff] %v1403
        %1412 = vst [vmem:[#allocation3 + $0x10] sm:$0xff] %v1404
        %1413 = vst [vmem:[#allocation3 + $0x18] sm:$0xff] %v1405
        %1414 = vst [vmem:[#allocation3 + $0x20] sm:$0xff] %v1406
        %1415 = vst [vmem:[#allocation3 + $0x28] sm:$0xff] %v1407
        %1416 = vst [vmem:[#allocation3 + $0x30] sm:$0xff] %v1408
        %1417 = vst [vmem:[#allocation3 + $0x38] sm:$0xff] %v1409
        %v1418 = vld [vmem:[%s590] sm:$0xf]
        %v1419 = vld [vmem:[%s590 + $0x4] sm:$0x1]
        %v1420 = vld [vmem:[%s590 + $0x8] sm:$0xf]
        %v1421 = vld [vmem:[%s590 + $0xc] sm:$0x1]
        %v1422 = vld [vmem:[%s590 + $0x10] sm:$0xf]
        %v1423 = vld [vmem:[%s590 + $0x14] sm:$0x1]
        %v1424 = vld [vmem:[%s590 + $0x18] sm:$0xf]
        %v1425 = vld [vmem:[%s590 + $0x1c] sm:$0x1]
        %v1426 = vld [vmem:[%s590 + $0x20] sm:$0xf]
        %v1427 = vld [vmem:[%s590 + $0x24] sm:$0x1]
        %v1428 = vld [vmem:[%s590 + $0x28] sm:$0xf]
        %v1429 = vld [vmem:[%s590 + $0x2c] sm:$0x1]
        %v1430 = vld [vmem:[%s590 + $0x30] sm:$0xf]
        %v1431 = vld [vmem:[%s590 + $0x34] sm:$0x1]
        %v1432 = vld [vmem:[%s590 + $0x38] sm:$0xf]
        %v1433 = vld [vmem:[%s590 + $0x3c] sm:$0x1]
        %v1435 = vshrl.u32 %v1418, 16
        %v1437 = vrot.slane %v1435, 4
        %v1438 = vshll.u32 %v1418, 16
        %v1440 = vrot.slane %v1438, 5
        %v1441 = vor.u32 %v1437, %v1440
        %v1442 = vrot.slane %v1441, 4
        %v1444 = vshll.u32 %v1419, 16
        %v1446 = vrot.slane %v1444, 5
        %v1447 = vsel %vm820, %v1442, %v1446
        %v1449 = vshrl.u32 %v1420, 16
        %v1451 = vrot.slane %v1449, 4
        %v1452 = vshll.u32 %v1420, 16
        %v1454 = vrot.slane %v1452, 5
        %v1455 = vor.u32 %v1451, %v1454
        %v1456 = vrot.slane %v1455, 4
        %v1458 = vshll.u32 %v1421, 16
        %v1460 = vrot.slane %v1458, 5
        %v1461 = vsel %vm820, %v1456, %v1460
        %v1463 = vshrl.u32 %v1422, 16
        %v1465 = vrot.slane %v1463, 4
        %v1466 = vshll.u32 %v1422, 16
        %v1468 = vrot.slane %v1466, 5
        %v1469 = vor.u32 %v1465, %v1468
        %v1470 = vrot.slane %v1469, 4
        %v1472 = vshll.u32 %v1423, 16
        %v1474 = vrot.slane %v1472, 5
        %v1475 = vsel %vm820, %v1470, %v1474
        %v1477 = vshrl.u32 %v1424, 16
        %v1479 = vrot.slane %v1477, 4
        %v1480 = vshll.u32 %v1424, 16
        %v1482 = vrot.slane %v1480, 5
        %v1483 = vor.u32 %v1479, %v1482
        %v1484 = vrot.slane %v1483, 4
        %v1486 = vshll.u32 %v1425, 16
        %v1488 = vrot.slane %v1486, 5
        %v1489 = vsel %vm820, %v1484, %v1488
        %v1491 = vshrl.u32 %v1426, 16
        %v1493 = vrot.slane %v1491, 4
        %v1494 = vshll.u32 %v1426, 16
        %v1496 = vrot.slane %v1494, 5
        %v1497 = vor.u32 %v1493, %v1496
        %v1498 = vrot.slane %v1497, 4
        %v1500 = vshll.u32 %v1427, 16
        %v1502 = vrot.slane %v1500, 5
        %v1503 = vsel %vm820, %v1498, %v1502
        %v1505 = vshrl.u32 %v1428, 16
        %v1507 = vrot.slane %v1505, 4
        %v1508 = vshll.u32 %v1428, 16
        %v1510 = vrot.slane %v1508, 5
        %v1511 = vor.u32 %v1507, %v1510
        %v1512 = vrot.slane %v1511, 4
        %v1514 = vshll.u32 %v1429, 16
        %v1516 = vrot.slane %v1514, 5
        %v1517 = vsel %vm820, %v1512, %v1516
        %v1519 = vshrl.u32 %v1430, 16
        %v1521 = vrot.slane %v1519, 4
        %v1522 = vshll.u32 %v1430, 16
        %v1524 = vrot.slane %v1522, 5
        %v1525 = vor.u32 %v1521, %v1524
        %v1526 = vrot.slane %v1525, 4
        %v1528 = vshll.u32 %v1431, 16
        %v1530 = vrot.slane %v1528, 5
        %v1531 = vsel %vm820, %v1526, %v1530
        %v1533 = vshrl.u32 %v1432, 16
        %v1535 = vrot.slane %v1533, 4
        %v1536 = vshll.u32 %v1432, 16
        %v1538 = vrot.slane %v1536, 5
        %v1539 = vor.u32 %v1535, %v1538
        %v1540 = vrot.slane %v1539, 4
        %v1542 = vshll.u32 %v1433, 16
        %v1544 = vrot.slane %v1542, 5
        %v1545 = vsel %vm820, %v1540, %v1544
        %v1546 = vld [vmem:[#allocation3] sm:$0xff]
        %v1547 = vld [vmem:[#allocation3 + $0x8] sm:$0xff]
        %v1548 = vld [vmem:[#allocation3 + $0x10] sm:$0xff]
        %v1549 = vld [vmem:[#allocation3 + $0x18] sm:$0xff]
        %v1550 = vld [vmem:[#allocation3 + $0x20] sm:$0xff]
        %v1551 = vld [vmem:[#allocation3 + $0x28] sm:$0xff]
        %v1552 = vld [vmem:[#allocation3 + $0x30] sm:$0xff]
        %v1553 = vld [vmem:[#allocation3 + $0x38] sm:$0xff]
        %s1554 = scalar_lea.vmem %s4, 256
        %v1555 = vld [vmem:[%s1554] sm:$0xf]
        %v1556 = vld [vmem:[%s1554 + $0x4] sm:$0xf]
        %v1557 = vld [vmem:[%s1554 + $0x8] sm:$0xf]
        %v1558 = vld [vmem:[%s1554 + $0xc] sm:$0xf]
        %v1559 = vld [vmem:[%s1554 + $0x10] sm:$0xf]
        %v1560 = vld [vmem:[%s1554 + $0x14] sm:$0xf]
        %v1561 = vld [vmem:[%s1554 + $0x18] sm:$0xf]
        %v1562 = vld [vmem:[%s1554 + $0x1c] sm:$0xf]
        %v1563 = vld [vmem:[%s1554 + $0x20] sm:$0xf]
        %v1564 = vld [vmem:[%s1554 + $0x24] sm:$0xf]
        %v1565 = vld [vmem:[%s1554 + $0x28] sm:$0xf]
        %v1566 = vld [vmem:[%s1554 + $0x2c] sm:$0xf]
        %v1567 = vld [vmem:[%s1554 + $0x30] sm:$0xf]
        %v1568 = vld [vmem:[%s1554 + $0x34] sm:$0xf]
        %v1569 = vld [vmem:[%s1554 + $0x38] sm:$0xf]
        %v1570 = vld [vmem:[%s1554 + $0x3c] sm:$0xf]
        %v1571 = vunpack.c.l.b16 %v1447
        %v1572 = vunpack.c.l.b16 %v1461
        %v1573 = vunpack.c.l.b16 %v1475
        %v1574 = vunpack.c.l.b16 %v1489
        %v1575 = vunpack.c.l.b16 %v1503
        %v1576 = vunpack.c.l.b16 %v1517
        %v1577 = vunpack.c.l.b16 %v1531
        %v1578 = vunpack.c.l.b16 %v1545
        %v1579 = vpack.c.b16 %v1572, %v1571
        %v1580 = vpack.c.b16 %v1574, %v1573
        %v1581 = vpack.c.b16 %v1576, %v1575
        %v1582 = vpack.c.b16 %v1578, %v1577
        %v1603 = vunpack.c.l.b16 %v1555
        %v1604 = vunpack.c.l.b16 %v1556
        %v1605 = vunpack.c.l.b16 %v1557
        %v1606 = vunpack.c.l.b16 %v1558
        %v1607 = vunpack.c.l.b16 %v1559
        %v1608 = vunpack.c.l.b16 %v1560
        %v1609 = vunpack.c.l.b16 %v1561
        %v1610 = vunpack.c.l.b16 %v1562
        %v1611 = vunpack.c.l.b16 %v1563
        %v1612 = vunpack.c.l.b16 %v1564
        %v1613 = vunpack.c.l.b16 %v1565
        %v1614 = vunpack.c.l.b16 %v1566
        %v1615 = vunpack.c.l.b16 %v1567
        %v1616 = vunpack.c.l.b16 %v1568
        %v1617 = vunpack.c.l.b16 %v1569
        %v1618 = vunpack.c.l.b16 %v1570
        %v1619 = vpack.c.b16 %v1604, %v1603
        %v1620 = vpack.c.b16 %v1606, %v1605
        %v1621 = vpack.c.b16 %v1608, %v1607
        %v1622 = vpack.c.b16 %v1610, %v1609
        %v1623 = vpack.c.b16 %v1612, %v1611
        %v1624 = vpack.c.b16 %v1614, %v1613
        %v1625 = vpack.c.b16 %v1616, %v1615
        %v1626 = vpack.c.b16 %v1618, %v1617
        %1635 = vmatpush.bf16.msra.mxu0 %v1626
        %1636 = vmatpush.bf16.msra.mxu0 %v1625
        %1637 = vmatpush.bf16.msra.mxu0 %v1624
        %1638 = vmatpush.bf16.msra.mxu0 %v1623
        %1639 = vmatpush.bf16.msra.mxu0 %v1622
        %1640 = vmatpush.bf16.msra.mxu0 %v1621
        %1641 = vmatpush.bf16.msra.mxu0 %v1620
        %1642 = vmatpush.bf16.msra.mxu0 %v1619
        %1643 = vmatmul.bf16.gmra.mxu0 %v1579
        %v1644 = vpop.f32.mrf.mxu0
        %v1645 = vadd.f32 0.0, %v1644
        %v1646 = vpop.f32.mrf.mxu0
        %v1647 = vadd.f32 0.0, %v1646
        %1648 = vmatmul.bf16.gmra.mxu0 %v1580
        %v1649 = vpop.f32.mrf.mxu0
        %v1650 = vadd.f32 0.0, %v1649
        %v1651 = vpop.f32.mrf.mxu0
        %v1652 = vadd.f32 0.0, %v1651
        %1653 = vmatmul.bf16.gmra.mxu0 %v1581
        %v1654 = vpop.f32.mrf.mxu0
        %v1655 = vadd.f32 0.0, %v1654
        %v1656 = vpop.f32.mrf.mxu0
        %v1657 = vadd.f32 0.0, %v1656
        %1658 = vmatmul.bf16.gmra.mxu0 %v1582
        %v1659 = vpop.f32.mrf.mxu0
        %v1660 = vadd.f32 0.0, %v1659
        %v1661 = vpop.f32.mrf.mxu0
        %v1662 = vadd.f32 0.0, %v1661
        %1663 = vdwg.mxu0
        %v1664 = vadd.f32 %v1546, %v1645
        %v1665 = vadd.f32 %v1547, %v1647
        %v1666 = vadd.f32 %v1548, %v1650
        %v1667 = vadd.f32 %v1549, %v1652
        %v1668 = vadd.f32 %v1550, %v1655
        %v1669 = vadd.f32 %v1551, %v1657
        %v1670 = vadd.f32 %v1552, %v1660
        %v1671 = vadd.f32 %v1553, %v1662
        %1672 = vst [vmem:[#allocation3] sm:$0xff] %v1664
        %1673 = vst [vmem:[#allocation3 + $0x8] sm:$0xff] %v1665
        %1674 = vst [vmem:[#allocation3 + $0x10] sm:$0xff] %v1666
        %1675 = vst [vmem:[#allocation3 + $0x18] sm:$0xff] %v1667
        %1676 = vst [vmem:[#allocation3 + $0x20] sm:$0xff] %v1668
        %1677 = vst [vmem:[#allocation3 + $0x28] sm:$0xff] %v1669
        %1678 = vst [vmem:[#allocation3 + $0x30] sm:$0xff] %v1670
        %1679 = vst [vmem:[#allocation3 + $0x38] sm:$0xff] %v1671
        %v1680 = vld [vmem:[%s590] sm:$0xe]
        %v1681 = vld [vmem:[%s590 + $0x4] sm:$0x1]
        %v1682 = vld [vmem:[%s590 + $0x8] sm:$0xe]
        %v1683 = vld [vmem:[%s590 + $0xc] sm:$0x1]
        %v1684 = vld [vmem:[%s590 + $0x10] sm:$0xe]
        %v1685 = vld [vmem:[%s590 + $0x14] sm:$0x1]
        %v1686 = vld [vmem:[%s590 + $0x18] sm:$0xe]
        %v1687 = vld [vmem:[%s590 + $0x1c] sm:$0x1]
        %v1688 = vld [vmem:[%s590 + $0x20] sm:$0xe]
        %v1689 = vld [vmem:[%s590 + $0x24] sm:$0x1]
        %v1690 = vld [vmem:[%s590 + $0x28] sm:$0xe]
        %v1691 = vld [vmem:[%s590 + $0x2c] sm:$0x1]
        %v1692 = vld [vmem:[%s590 + $0x30] sm:$0xe]
        %v1693 = vld [vmem:[%s590 + $0x34] sm:$0x1]
        %v1694 = vld [vmem:[%s590 + $0x38] sm:$0xe]
        %v1695 = vld [vmem:[%s590 + $0x3c] sm:$0x1]
        %v1712 = vrot.slane %v1680, 5
        %v1713 = vrot.slane %v1712, 4
        %v1714 = vrot.slane %v1681, 5
        %v1715 = vsel %vm1101, %v1713, %v1714
        %v1716 = vrot.slane %v1682, 5
        %v1717 = vrot.slane %v1716, 4
        %v1718 = vrot.slane %v1683, 5
        %v1719 = vsel %vm1101, %v1717, %v1718
        %v1720 = vrot.slane %v1684, 5
        %v1721 = vrot.slane %v1720, 4
        %v1722 = vrot.slane %v1685, 5
        %v1723 = vsel %vm1101, %v1721, %v1722
        %v1724 = vrot.slane %v1686, 5
        %v1725 = vrot.slane %v1724, 4
        %v1726 = vrot.slane %v1687, 5
        %v1727 = vsel %vm1101, %v1725, %v1726
        %v1728 = vrot.slane %v1688, 5
        %v1729 = vrot.slane %v1728, 4
        %v1730 = vrot.slane %v1689, 5
        %v1731 = vsel %vm1101, %v1729, %v1730
        %v1732 = vrot.slane %v1690, 5
        %v1733 = vrot.slane %v1732, 4
        %v1734 = vrot.slane %v1691, 5
        %v1735 = vsel %vm1101, %v1733, %v1734
        %v1736 = vrot.slane %v1692, 5
        %v1737 = vrot.slane %v1736, 4
        %v1738 = vrot.slane %v1693, 5
        %v1739 = vsel %vm1101, %v1737, %v1738
        %v1740 = vrot.slane %v1694, 5
        %v1741 = vrot.slane %v1740, 4
        %v1742 = vrot.slane %v1695, 5
        %v1743 = vsel %vm1101, %v1741, %v1742
        %v1744 = vld [vmem:[#allocation3] sm:$0xff]
        %v1745 = vld [vmem:[#allocation3 + $0x8] sm:$0xff]
        %v1746 = vld [vmem:[#allocation3 + $0x10] sm:$0xff]
        %v1747 = vld [vmem:[#allocation3 + $0x18] sm:$0xff]
        %v1748 = vld [vmem:[#allocation3 + $0x20] sm:$0xff]
        %v1749 = vld [vmem:[#allocation3 + $0x28] sm:$0xff]
        %v1750 = vld [vmem:[#allocation3 + $0x30] sm:$0xff]
        %v1751 = vld [vmem:[#allocation3 + $0x38] sm:$0xff]
        %s1752 = scalar_lea.vmem %s4, 320
        %v1753 = vld [vmem:[%s1752] sm:$0xf]
        %v1754 = vld [vmem:[%s1752 + $0x4] sm:$0xf]
        %v1755 = vld [vmem:[%s1752 + $0x8] sm:$0xf]
        %v1756 = vld [vmem:[%s1752 + $0xc] sm:$0xf]
        %v1757 = vld [vmem:[%s1752 + $0x10] sm:$0xf]
        %v1758 = vld [vmem:[%s1752 + $0x14] sm:$0xf]
        %v1759 = vld [vmem:[%s1752 + $0x18] sm:$0xf]
        %v1760 = vld [vmem:[%s1752 + $0x1c] sm:$0xf]
        %v1761 = vld [vmem:[%s1752 + $0x20] sm:$0xf]
        %v1762 = vld [vmem:[%s1752 + $0x24] sm:$0xf]
        %v1763 = vld [vmem:[%s1752 + $0x28] sm:$0xf]
        %v1764 = vld [vmem:[%s1752 + $0x2c] sm:$0xf]
        %v1765 = vld [vmem:[%s1752 + $0x30] sm:$0xf]
        %v1766 = vld [vmem:[%s1752 + $0x34] sm:$0xf]
        %v1767 = vld [vmem:[%s1752 + $0x38] sm:$0xf]
        %v1768 = vld [vmem:[%s1752 + $0x3c] sm:$0xf]
        %v1769 = vunpack.c.l.b16 %v1715
        %v1770 = vunpack.c.l.b16 %v1719
        %v1771 = vunpack.c.l.b16 %v1723
        %v1772 = vunpack.c.l.b16 %v1727
        %v1773 = vunpack.c.l.b16 %v1731
        %v1774 = vunpack.c.l.b16 %v1735
        %v1775 = vunpack.c.l.b16 %v1739
        %v1776 = vunpack.c.l.b16 %v1743
        %v1777 = vpack.c.b16 %v1770, %v1769
        %v1778 = vpack.c.b16 %v1772, %v1771
        %v1779 = vpack.c.b16 %v1774, %v1773
        %v1780 = vpack.c.b16 %v1776, %v1775
        %v1801 = vunpack.c.l.b16 %v1753
        %v1802 = vunpack.c.l.b16 %v1754
        %v1803 = vunpack.c.l.b16 %v1755
        %v1804 = vunpack.c.l.b16 %v1756
        %v1805 = vunpack.c.l.b16 %v1757
        %v1806 = vunpack.c.l.b16 %v1758
        %v1807 = vunpack.c.l.b16 %v1759
        %v1808 = vunpack.c.l.b16 %v1760
        %v1809 = vunpack.c.l.b16 %v1761
        %v1810 = vunpack.c.l.b16 %v1762
        %v1811 = vunpack.c.l.b16 %v1763
        %v1812 = vunpack.c.l.b16 %v1764
        %v1813 = vunpack.c.l.b16 %v1765
        %v1814 = vunpack.c.l.b16 %v1766
        %v1815 = vunpack.c.l.b16 %v1767
        %v1816 = vunpack.c.l.b16 %v1768
        %v1817 = vpack.c.b16 %v1802, %v1801
        %v1818 = vpack.c.b16 %v1804, %v1803
        %v1819 = vpack.c.b16 %v1806, %v1805
        %v1820 = vpack.c.b16 %v1808, %v1807
        %v1821 = vpack.c.b16 %v1810, %v1809
        %v1822 = vpack.c.b16 %v1812, %v1811
        %v1823 = vpack.c.b16 %v1814, %v1813
        %v1824 = vpack.c.b16 %v1816, %v1815
        %1833 = vmatpush.bf16.msra.mxu0 %v1824
        %1834 = vmatpush.bf16.msra.mxu0 %v1823
        %1835 = vmatpush.bf16.msra.mxu0 %v1822
        %1836 = vmatpush.bf16.msra.mxu0 %v1821
        %1837 = vmatpush.bf16.msra.mxu0 %v1820
        %1838 = vmatpush.bf16.msra.mxu0 %v1819
        %1839 = vmatpush.bf16.msra.mxu0 %v1818
        %1840 = vmatpush.bf16.msra.mxu0 %v1817
        %1841 = vmatmul.bf16.gmra.mxu0 %v1777
        %v1842 = vpop.f32.mrf.mxu0
        %v1843 = vadd.f32 0.0, %v1842
        %v1844 = vpop.f32.mrf.mxu0
        %v1845 = vadd.f32 0.0, %v1844
        %1846 = vmatmul.bf16.gmra.mxu0 %v1778
        %v1847 = vpop.f32.mrf.mxu0
        %v1848 = vadd.f32 0.0, %v1847
        %v1849 = vpop.f32.mrf.mxu0
        %v1850 = vadd.f32 0.0, %v1849
        %1851 = vmatmul.bf16.gmra.mxu0 %v1779
        %v1852 = vpop.f32.mrf.mxu0
        %v1853 = vadd.f32 0.0, %v1852
        %v1854 = vpop.f32.mrf.mxu0
        %v1855 = vadd.f32 0.0, %v1854
        %1856 = vmatmul.bf16.gmra.mxu0 %v1780
        %v1857 = vpop.f32.mrf.mxu0
        %v1858 = vadd.f32 0.0, %v1857
        %v1859 = vpop.f32.mrf.mxu0
        %v1860 = vadd.f32 0.0, %v1859
        %1861 = vdwg.mxu0
        %v1862 = vadd.f32 %v1744, %v1843
        %v1863 = vadd.f32 %v1745, %v1845
        %v1864 = vadd.f32 %v1746, %v1848
        %v1865 = vadd.f32 %v1747, %v1850
        %v1866 = vadd.f32 %v1748, %v1853
        %v1867 = vadd.f32 %v1749, %v1855
        %v1868 = vadd.f32 %v1750, %v1858
        %v1869 = vadd.f32 %v1751, %v1860
        %1870 = vst [vmem:[#allocation3] sm:$0xff] %v1862
        %1871 = vst [vmem:[#allocation3 + $0x8] sm:$0xff] %v1863
        %1872 = vst [vmem:[#allocation3 + $0x10] sm:$0xff] %v1864
        %1873 = vst [vmem:[#allocation3 + $0x18] sm:$0xff] %v1865
        %1874 = vst [vmem:[#allocation3 + $0x20] sm:$0xff] %v1866
        %1875 = vst [vmem:[#allocation3 + $0x28] sm:$0xff] %v1867
        %1876 = vst [vmem:[#allocation3 + $0x30] sm:$0xff] %v1868
        %1877 = vst [vmem:[#allocation3 + $0x38] sm:$0xff] %v1869
        %s1878 = scalar_lea.vmem [#allocation2], 16
        %v1879 = vld [vmem:[%s1878] sm:$0xf]
        %v1880 = vld [vmem:[%s1878 + $0x8] sm:$0xf]
        %v1881 = vld [vmem:[%s1878 + $0x10] sm:$0xf]
        %v1882 = vld [vmem:[%s1878 + $0x18] sm:$0xf]
        %v1883 = vld [vmem:[%s1878 + $0x20] sm:$0xf]
        %v1884 = vld [vmem:[%s1878 + $0x28] sm:$0xf]
        %v1885 = vld [vmem:[%s1878 + $0x30] sm:$0xf]
        %v1886 = vld [vmem:[%s1878 + $0x38] sm:$0xf]
        %v1887 = vld [vmem:[#allocation3] sm:$0xff]
        %v1888 = vld [vmem:[#allocation3 + $0x8] sm:$0xff]
        %v1889 = vld [vmem:[#allocation3 + $0x10] sm:$0xff]
        %v1890 = vld [vmem:[#allocation3 + $0x18] sm:$0xff]
        %v1891 = vld [vmem:[#allocation3 + $0x20] sm:$0xff]
        %v1892 = vld [vmem:[#allocation3 + $0x28] sm:$0xff]
        %v1893 = vld [vmem:[#allocation3 + $0x30] sm:$0xff]
        %v1894 = vld [vmem:[#allocation3 + $0x38] sm:$0xff]
        %s1895 = scalar_lea.vmem %s4, 384
        %v1896 = vld [vmem:[%s1895] sm:$0xf]
        %v1897 = vld [vmem:[%s1895 + $0x4] sm:$0xf]
        %v1898 = vld [vmem:[%s1895 + $0x8] sm:$0xf]
        %v1899 = vld [vmem:[%s1895 + $0xc] sm:$0xf]
        %v1900 = vld [vmem:[%s1895 + $0x10] sm:$0xf]
        %v1901 = vld [vmem:[%s1895 + $0x14] sm:$0xf]
        %v1902 = vld [vmem:[%s1895 + $0x18] sm:$0xf]
        %v1903 = vld [vmem:[%s1895 + $0x1c] sm:$0xf]
        %v1904 = vld [vmem:[%s1895 + $0x20] sm:$0xf]
        %v1905 = vld [vmem:[%s1895 + $0x24] sm:$0xf]
        %v1906 = vld [vmem:[%s1895 + $0x28] sm:$0xf]
        %v1907 = vld [vmem:[%s1895 + $0x2c] sm:$0xf]
        %v1908 = vld [vmem:[%s1895 + $0x30] sm:$0xf]
        %v1909 = vld [vmem:[%s1895 + $0x34] sm:$0xf]
        %v1910 = vld [vmem:[%s1895 + $0x38] sm:$0xf]
        %v1911 = vld [vmem:[%s1895 + $0x3c] sm:$0xf]
        %v1920 = vunpack.c.l.b16 %v1879
        %v1921 = vunpack.c.l.b16 %v1880
        %v1922 = vunpack.c.l.b16 %v1881
        %v1923 = vunpack.c.l.b16 %v1882
        %v1924 = vunpack.c.l.b16 %v1883
        %v1925 = vunpack.c.l.b16 %v1884
        %v1926 = vunpack.c.l.b16 %v1885
        %v1927 = vunpack.c.l.b16 %v1886
        %v1928 = vpack.c.b16 %v1921, %v1920
        %v1929 = vpack.c.b16 %v1923, %v1922
        %v1930 = vpack.c.b16 %v1925, %v1924
        %v1931 = vpack.c.b16 %v1927, %v1926
        %v1952 = vunpack.c.l.b16 %v1896
        %v1953 = vunpack.c.l.b16 %v1897
        %v1954 = vunpack.c.l.b16 %v1898
        %v1955 = vunpack.c.l.b16 %v1899
        %v1956 = vunpack.c.l.b16 %v1900
        %v1957 = vunpack.c.l.b16 %v1901
        %v1958 = vunpack.c.l.b16 %v1902
        %v1959 = vunpack.c.l.b16 %v1903
        %v1960 = vunpack.c.l.b16 %v1904
        %v1961 = vunpack.c.l.b16 %v1905
        %v1962 = vunpack.c.l.b16 %v1906
        %v1963 = vunpack.c.l.b16 %v1907
        %v1964 = vunpack.c.l.b16 %v1908
        %v1965 = vunpack.c.l.b16 %v1909
        %v1966 = vunpack.c.l.b16 %v1910
        %v1967 = vunpack.c.l.b16 %v1911
        %v1968 = vpack.c.b16 %v1953, %v1952
        %v1969 = vpack.c.b16 %v1955, %v1954
        %v1970 = vpack.c.b16 %v1957, %v1956
        %v1971 = vpack.c.b16 %v1959, %v1958
        %v1972 = vpack.c.b16 %v1961, %v1960
        %v1973 = vpack.c.b16 %v1963, %v1962
        %v1974 = vpack.c.b16 %v1965, %v1964
        %v1975 = vpack.c.b16 %v1967, %v1966
        %1984 = vmatpush.bf16.msra.mxu0 %v1975
        %1985 = vmatpush.bf16.msra.mxu0 %v1974
        %1986 = vmatpush.bf16.msra.mxu0 %v1973
        %1987 = vmatpush.bf16.msra.mxu0 %v1972
        %1988 = vmatpush.bf16.msra.mxu0 %v1971
        %1989 = vmatpush.bf16.msra.mxu0 %v1970
        %1990 = vmatpush.bf16.msra.mxu0 %v1969
        %1991 = vmatpush.bf16.msra.mxu0 %v1968
        %1992 = vmatmul.bf16.gmra.mxu0 %v1928
        %v1993 = vpop.f32.mrf.mxu0
        %v1994 = vadd.f32 0.0, %v1993
        %v1995 = vpop.f32.mrf.mxu0
        %v1996 = vadd.f32 0.0, %v1995
        %1997 = vmatmul.bf16.gmra.mxu0 %v1929
        %v1998 = vpop.f32.mrf.mxu0
        %v1999 = vadd.f32 0.0, %v1998
        %v2000 = vpop.f32.mrf.mxu0
        %v2001 = vadd.f32 0.0, %v2000
        %2002 = vmatmul.bf16.gmra.mxu0 %v1930
        %v2003 = vpop.f32.mrf.mxu0
        %v2004 = vadd.f32 0.0, %v2003
        %v2005 = vpop.f32.mrf.mxu0
        %v2006 = vadd.f32 0.0, %v2005
        %2007 = vmatmul.bf16.gmra.mxu0 %v1931
        %v2008 = vpop.f32.mrf.mxu0
        %v2009 = vadd.f32 0.0, %v2008
        %v2010 = vpop.f32.mrf.mxu0
        %v2011 = vadd.f32 0.0, %v2010
        %2012 = vdwg.mxu0
        %v2013 = vadd.f32 %v1887, %v1994
        %v2014 = vadd.f32 %v1888, %v1996
        %v2015 = vadd.f32 %v1889, %v1999
        %v2016 = vadd.f32 %v1890, %v2001
        %v2017 = vadd.f32 %v1891, %v2004
        %v2018 = vadd.f32 %v1892, %v2006
        %v2019 = vadd.f32 %v1893, %v2009
        %v2020 = vadd.f32 %v1894, %v2011
        %2021 = vst [vmem:[#allocation3] sm:$0xff] %v2013
        %2022 = vst [vmem:[#allocation3 + $0x8] sm:$0xff] %v2014
        %2023 = vst [vmem:[#allocation3 + $0x10] sm:$0xff] %v2015
        %2024 = vst [vmem:[#allocation3 + $0x18] sm:$0xff] %v2016
        %2025 = vst [vmem:[#allocation3 + $0x20] sm:$0xff] %v2017
        %2026 = vst [vmem:[#allocation3 + $0x28] sm:$0xff] %v2018
        %2027 = vst [vmem:[#allocation3 + $0x30] sm:$0xff] %v2019
        %2028 = vst [vmem:[#allocation3 + $0x38] sm:$0xff] %v2020
        %v2029 = vld [vmem:[%s1878] sm:$0xf]
        %v2030 = vld [vmem:[%s1878 + $0x4] sm:$0x1]
        %v2031 = vld [vmem:[%s1878 + $0x8] sm:$0xf]
        %v2032 = vld [vmem:[%s1878 + $0xc] sm:$0x1]
        %v2033 = vld [vmem:[%s1878 + $0x10] sm:$0xf]
        %v2034 = vld [vmem:[%s1878 + $0x14] sm:$0x1]
        %v2035 = vld [vmem:[%s1878 + $0x18] sm:$0xf]
        %v2036 = vld [vmem:[%s1878 + $0x1c] sm:$0x1]
        %v2037 = vld [vmem:[%s1878 + $0x20] sm:$0xf]
        %v2038 = vld [vmem:[%s1878 + $0x24] sm:$0x1]
        %v2039 = vld [vmem:[%s1878 + $0x28] sm:$0xf]
        %v2040 = vld [vmem:[%s1878 + $0x2c] sm:$0x1]
        %v2041 = vld [vmem:[%s1878 + $0x30] sm:$0xf]
        %v2042 = vld [vmem:[%s1878 + $0x34] sm:$0x1]
        %v2043 = vld [vmem:[%s1878 + $0x38] sm:$0xf]
        %v2044 = vld [vmem:[%s1878 + $0x3c] sm:$0x1]
        %v2046 = vshrl.u32 %v2029, 16
        %v2048 = vrot.slane %v2046, 4
        %v2049 = vshll.u32 %v2029, 16
        %v2051 = vrot.slane %v2049, 5
        %v2052 = vor.u32 %v2048, %v2051
        %v2053 = vrot.slane %v2052, 4
        %v2055 = vshll.u32 %v2030, 16
        %v2057 = vrot.slane %v2055, 5
        %v2058 = vsel %vm820, %v2053, %v2057
        %v2060 = vshrl.u32 %v2031, 16
        %v2062 = vrot.slane %v2060, 4
        %v2063 = vshll.u32 %v2031, 16
        %v2065 = vrot.slane %v2063, 5
        %v2066 = vor.u32 %v2062, %v2065
        %v2067 = vrot.slane %v2066, 4
        %v2069 = vshll.u32 %v2032, 16
        %v2071 = vrot.slane %v2069, 5
        %v2072 = vsel %vm820, %v2067, %v2071
        %v2074 = vshrl.u32 %v2033, 16
        %v2076 = vrot.slane %v2074, 4
        %v2077 = vshll.u32 %v2033, 16
        %v2079 = vrot.slane %v2077, 5
        %v2080 = vor.u32 %v2076, %v2079
        %v2081 = vrot.slane %v2080, 4
        %v2083 = vshll.u32 %v2034, 16
        %v2085 = vrot.slane %v2083, 5
        %v2086 = vsel %vm820, %v2081, %v2085
        %v2088 = vshrl.u32 %v2035, 16
        %v2090 = vrot.slane %v2088, 4
        %v2091 = vshll.u32 %v2035, 16
        %v2093 = vrot.slane %v2091, 5
        %v2094 = vor.u32 %v2090, %v2093
        %v2095 = vrot.slane %v2094, 4
        %v2097 = vshll.u32 %v2036, 16
        %v2099 = vrot.slane %v2097, 5
        %v2100 = vsel %vm820, %v2095, %v2099
        %v2102 = vshrl.u32 %v2037, 16
        %v2104 = vrot.slane %v2102, 4
        %v2105 = vshll.u32 %v2037, 16
        %v2107 = vrot.slane %v2105, 5
        %v2108 = vor.u32 %v2104, %v2107
        %v2109 = vrot.slane %v2108, 4
        %v2111 = vshll.u32 %v2038, 16
        %v2113 = vrot.slane %v2111, 5
        %v2114 = vsel %vm820, %v2109, %v2113
        %v2116 = vshrl.u32 %v2039, 16
        %v2118 = vrot.slane %v2116, 4
        %v2119 = vshll.u32 %v2039, 16
        %v2121 = vrot.slane %v2119, 5
        %v2122 = vor.u32 %v2118, %v2121
        %v2123 = vrot.slane %v2122, 4
        %v2125 = vshll.u32 %v2040, 16
        %v2127 = vrot.slane %v2125, 5
        %v2128 = vsel %vm820, %v2123, %v2127
        %v2130 = vshrl.u32 %v2041, 16
        %v2132 = vrot.slane %v2130, 4
        %v2133 = vshll.u32 %v2041, 16
        %v2135 = vrot.slane %v2133, 5
        %v2136 = vor.u32 %v2132, %v2135
        %v2137 = vrot.slane %v2136, 4
        %v2139 = vshll.u32 %v2042, 16
        %v2141 = vrot.slane %v2139, 5
        %v2142 = vsel %vm820, %v2137, %v2141
        %v2144 = vshrl.u32 %v2043, 16
        %v2146 = vrot.slane %v2144, 4
        %v2147 = vshll.u32 %v2043, 16
        %v2149 = vrot.slane %v2147, 5
        %v2150 = vor.u32 %v2146, %v2149
        %v2151 = vrot.slane %v2150, 4
        %v2153 = vshll.u32 %v2044, 16
        %v2155 = vrot.slane %v2153, 5
        %v2156 = vsel %vm820, %v2151, %v2155
        %v2157 = vld [vmem:[#allocation3] sm:$0xff]
        %v2158 = vld [vmem:[#allocation3 + $0x8] sm:$0xff]
        %v2159 = vld [vmem:[#allocation3 + $0x10] sm:$0xff]
        %v2160 = vld [vmem:[#allocation3 + $0x18] sm:$0xff]
        %v2161 = vld [vmem:[#allocation3 + $0x20] sm:$0xff]
        %v2162 = vld [vmem:[#allocation3 + $0x28] sm:$0xff]
        %v2163 = vld [vmem:[#allocation3 + $0x30] sm:$0xff]
        %v2164 = vld [vmem:[#allocation3 + $0x38] sm:$0xff]
        %s2165 = scalar_lea.vmem %s4, 448
        %v2166 = vld [vmem:[%s2165] sm:$0xf]
        %v2167 = vld [vmem:[%s2165 + $0x4] sm:$0xf]
        %v2168 = vld [vmem:[%s2165 + $0x8] sm:$0xf]
        %v2169 = vld [vmem:[%s2165 + $0xc] sm:$0xf]
        %v2170 = vld [vmem:[%s2165 + $0x10] sm:$0xf]
        %v2171 = vld [vmem:[%s2165 + $0x14] sm:$0xf]
        %v2172 = vld [vmem:[%s2165 + $0x18] sm:$0xf]
        %v2173 = vld [vmem:[%s2165 + $0x1c] sm:$0xf]
        %v2174 = vld [vmem:[%s2165 + $0x20] sm:$0xf]
        %v2175 = vld [vmem:[%s2165 + $0x24] sm:$0xf]
        %v2176 = vld [vmem:[%s2165 + $0x28] sm:$0xf]
        %v2177 = vld [vmem:[%s2165 + $0x2c] sm:$0xf]
        %v2178 = vld [vmem:[%s2165 + $0x30] sm:$0xf]
        %v2179 = vld [vmem:[%s2165 + $0x34] sm:$0xf]
        %v2180 = vld [vmem:[%s2165 + $0x38] sm:$0xf]
        %v2181 = vld [vmem:[%s2165 + $0x3c] sm:$0xf]
        %v2182 = vunpack.c.l.b16 %v2058
        %v2183 = vunpack.c.l.b16 %v2072
        %v2184 = vunpack.c.l.b16 %v2086
        %v2185 = vunpack.c.l.b16 %v2100
        %v2186 = vunpack.c.l.b16 %v2114
        %v2187 = vunpack.c.l.b16 %v2128
        %v2188 = vunpack.c.l.b16 %v2142
        %v2189 = vunpack.c.l.b16 %v2156
        %v2190 = vpack.c.b16 %v2183, %v2182
        %v2191 = vpack.c.b16 %v2185, %v2184
        %v2192 = vpack.c.b16 %v2187, %v2186
        %v2193 = vpack.c.b16 %v2189, %v2188
        %v2214 = vunpack.c.l.b16 %v2166
        %v2215 = vunpack.c.l.b16 %v2167
        %v2216 = vunpack.c.l.b16 %v2168
        %v2217 = vunpack.c.l.b16 %v2169
        %v2218 = vunpack.c.l.b16 %v2170
        %v2219 = vunpack.c.l.b16 %v2171
        %v2220 = vunpack.c.l.b16 %v2172
        %v2221 = vunpack.c.l.b16 %v2173
        %v2222 = vunpack.c.l.b16 %v2174
        %v2223 = vunpack.c.l.b16 %v2175
        %v2224 = vunpack.c.l.b16 %v2176
        %v2225 = vunpack.c.l.b16 %v2177
        %v2226 = vunpack.c.l.b16 %v2178
        %v2227 = vunpack.c.l.b16 %v2179
        %v2228 = vunpack.c.l.b16 %v2180
        %v2229 = vunpack.c.l.b16 %v2181
        %v2230 = vpack.c.b16 %v2215, %v2214
        %v2231 = vpack.c.b16 %v2217, %v2216
        %v2232 = vpack.c.b16 %v2219, %v2218
        %v2233 = vpack.c.b16 %v2221, %v2220
        %v2234 = vpack.c.b16 %v2223, %v2222
        %v2235 = vpack.c.b16 %v2225, %v2224
        %v2236 = vpack.c.b16 %v2227, %v2226
        %v2237 = vpack.c.b16 %v2229, %v2228
        %2246 = vmatpush.bf16.msra.mxu0 %v2237
        %2247 = vmatpush.bf16.msra.mxu0 %v2236
        %2248 = vmatpush.bf16.msra.mxu0 %v2235
        %2249 = vmatpush.bf16.msra.mxu0 %v2234
        %2250 = vmatpush.bf16.msra.mxu0 %v2233
        %2251 = vmatpush.bf16.msra.mxu0 %v2232
        %2252 = vmatpush.bf16.msra.mxu0 %v2231
        %2253 = vmatpush.bf16.msra.mxu0 %v2230
        %2254 = vmatmul.bf16.gmra.mxu0 %v2190
        %v2255 = vpop.f32.mrf.mxu0
        %v2256 = vadd.f32 0.0, %v2255
        %v2257 = vpop.f32.mrf.mxu0
        %v2258 = vadd.f32 0.0, %v2257
        %2259 = vmatmul.bf16.gmra.mxu0 %v2191
        %v2260 = vpop.f32.mrf.mxu0
        %v2261 = vadd.f32 0.0, %v2260
        %v2262 = vpop.f32.mrf.mxu0
        %v2263 = vadd.f32 0.0, %v2262
        %2264 = vmatmul.bf16.gmra.mxu0 %v2192
        %v2265 = vpop.f32.mrf.mxu0
        %v2266 = vadd.f32 0.0, %v2265
        %v2267 = vpop.f32.mrf.mxu0
        %v2268 = vadd.f32 0.0, %v2267
        %2269 = vmatmul.bf16.gmra.mxu0 %v2193
        %v2270 = vpop.f32.mrf.mxu0
        %v2271 = vadd.f32 0.0, %v2270
        %v2272 = vpop.f32.mrf.mxu0
        %v2273 = vadd.f32 0.0, %v2272
        %2274 = vdwg.mxu0
        %v2275 = vadd.f32 %v2157, %v2256
        %v2276 = vadd.f32 %v2158, %v2258
        %v2277 = vadd.f32 %v2159, %v2261
        %v2278 = vadd.f32 %v2160, %v2263
        %v2279 = vadd.f32 %v2161, %v2266
        %v2280 = vadd.f32 %v2162, %v2268
        %v2281 = vadd.f32 %v2163, %v2271
        %v2282 = vadd.f32 %v2164, %v2273
        %2283 = vst [vmem:[#allocation3] sm:$0xff] %v2275
        %2284 = vst [vmem:[#allocation3 + $0x8] sm:$0xff] %v2276
        %2285 = vst [vmem:[#allocation3 + $0x10] sm:$0xff] %v2277
        %2286 = vst [vmem:[#allocation3 + $0x18] sm:$0xff] %v2278
        %2287 = vst [vmem:[#allocation3 + $0x20] sm:$0xff] %v2279
        %2288 = vst [vmem:[#allocation3 + $0x28] sm:$0xff] %v2280
        %2289 = vst [vmem:[#allocation3 + $0x30] sm:$0xff] %v2281
        %2290 = vst [vmem:[#allocation3 + $0x38] sm:$0xff] %v2282
        %v2291 = vld [vmem:[%s1878] sm:$0xe]
        %v2292 = vld [vmem:[%s1878 + $0x4] sm:$0x1]
        %v2293 = vld [vmem:[%s1878 + $0x8] sm:$0xe]
        %v2294 = vld [vmem:[%s1878 + $0xc] sm:$0x1]
        %v2295 = vld [vmem:[%s1878 + $0x10] sm:$0xe]
        %v2296 = vld [vmem:[%s1878 + $0x14] sm:$0x1]
        %v2297 = vld [vmem:[%s1878 + $0x18] sm:$0xe]
        %v2298 = vld [vmem:[%s1878 + $0x1c] sm:$0x1]
        %v2299 = vld [vmem:[%s1878 + $0x20] sm:$0xe]
        %v2300 = vld [vmem:[%s1878 + $0x24] sm:$0x1]
        %v2301 = vld [vmem:[%s1878 + $0x28] sm:$0xe]
        %v2302 = vld [vmem:[%s1878 + $0x2c] sm:$0x1]
        %v2303 = vld [vmem:[%s1878 + $0x30] sm:$0xe]
        %v2304 = vld [vmem:[%s1878 + $0x34] sm:$0x1]
        %v2305 = vld [vmem:[%s1878 + $0x38] sm:$0xe]
        %v2306 = vld [vmem:[%s1878 + $0x3c] sm:$0x1]
        %v2323 = vrot.slane %v2291, 5
        %v2324 = vrot.slane %v2323, 4
        %v2325 = vrot.slane %v2292, 5
        %v2326 = vsel %vm1101, %v2324, %v2325
        %v2327 = vrot.slane %v2293, 5
        %v2328 = vrot.slane %v2327, 4
        %v2329 = vrot.slane %v2294, 5
        %v2330 = vsel %vm1101, %v2328, %v2329
        %v2331 = vrot.slane %v2295, 5
        %v2332 = vrot.slane %v2331, 4
        %v2333 = vrot.slane %v2296, 5
        %v2334 = vsel %vm1101, %v2332, %v2333
        %v2335 = vrot.slane %v2297, 5
        %v2336 = vrot.slane %v2335, 4
        %v2337 = vrot.slane %v2298, 5
        %v2338 = vsel %vm1101, %v2336, %v2337
        %v2339 = vrot.slane %v2299, 5
        %v2340 = vrot.slane %v2339, 4
        %v2341 = vrot.slane %v2300, 5
        %v2342 = vsel %vm1101, %v2340, %v2341
        %v2343 = vrot.slane %v2301, 5
        %v2344 = vrot.slane %v2343, 4
        %v2345 = vrot.slane %v2302, 5
        %v2346 = vsel %vm1101, %v2344, %v2345
        %v2347 = vrot.slane %v2303, 5
        %v2348 = vrot.slane %v2347, 4
        %v2349 = vrot.slane %v2304, 5
        %v2350 = vsel %vm1101, %v2348, %v2349
        %v2351 = vrot.slane %v2305, 5
        %v2352 = vrot.slane %v2351, 4
        %v2353 = vrot.slane %v2306, 5
        %v2354 = vsel %vm1101, %v2352, %v2353
        %v2355 = vld [vmem:[#allocation3] sm:$0xff]
        %v2356 = vld [vmem:[#allocation3 + $0x8] sm:$0xff]
        %v2357 = vld [vmem:[#allocation3 + $0x10] sm:$0xff]
        %v2358 = vld [vmem:[#allocation3 + $0x18] sm:$0xff]
        %v2359 = vld [vmem:[#allocation3 + $0x20] sm:$0xff]
        %v2360 = vld [vmem:[#allocation3 + $0x28] sm:$0xff]
        %v2361 = vld [vmem:[#allocation3 + $0x30] sm:$0xff]
        %v2362 = vld [vmem:[#allocation3 + $0x38] sm:$0xff]
        %s2363 = scalar_lea.vmem %s4, 512
        %v2364 = vld [vmem:[%s2363] sm:$0xf]
        %v2365 = vld [vmem:[%s2363 + $0x4] sm:$0xf]
        %v2366 = vld [vmem:[%s2363 + $0x8] sm:$0xf]
        %v2367 = vld [vmem:[%s2363 + $0xc] sm:$0xf]
        %v2368 = vld [vmem:[%s2363 + $0x10] sm:$0xf]
        %v2369 = vld [vmem:[%s2363 + $0x14] sm:$0xf]
        %v2370 = vld [vmem:[%s2363 + $0x18] sm:$0xf]
        %v2371 = vld [vmem:[%s2363 + $0x1c] sm:$0xf]
        %v2372 = vld [vmem:[%s2363 + $0x20] sm:$0xf]
        %v2373 = vld [vmem:[%s2363 + $0x24] sm:$0xf]
        %v2374 = vld [vmem:[%s2363 + $0x28] sm:$0xf]
        %v2375 = vld [vmem:[%s2363 + $0x2c] sm:$0xf]
        %v2376 = vld [vmem:[%s2363 + $0x30] sm:$0xf]
        %v2377 = vld [vmem:[%s2363 + $0x34] sm:$0xf]
        %v2378 = vld [vmem:[%s2363 + $0x38] sm:$0xf]
        %v2379 = vld [vmem:[%s2363 + $0x3c] sm:$0xf]
        %v2380 = vunpack.c.l.b16 %v2326
        %v2381 = vunpack.c.l.b16 %v2330
        %v2382 = vunpack.c.l.b16 %v2334
        %v2383 = vunpack.c.l.b16 %v2338
        %v2384 = vunpack.c.l.b16 %v2342
        %v2385 = vunpack.c.l.b16 %v2346
        %v2386 = vunpack.c.l.b16 %v2350
        %v2387 = vunpack.c.l.b16 %v2354
        %v2388 = vpack.c.b16 %v2381, %v2380
        %v2389 = vpack.c.b16 %v2383, %v2382
        %v2390 = vpack.c.b16 %v2385, %v2384
        %v2391 = vpack.c.b16 %v2387, %v2386
        %v2412 = vunpack.c.l.b16 %v2364
        %v2413 = vunpack.c.l.b16 %v2365
        %v2414 = vunpack.c.l.b16 %v2366
        %v2415 = vunpack.c.l.b16 %v2367
        %v2416 = vunpack.c.l.b16 %v2368
        %v2417 = vunpack.c.l.b16 %v2369
        %v2418 = vunpack.c.l.b16 %v2370
        %v2419 = vunpack.c.l.b16 %v2371
        %v2420 = vunpack.c.l.b16 %v2372
        %v2421 = vunpack.c.l.b16 %v2373
        %v2422 = vunpack.c.l.b16 %v2374
        %v2423 = vunpack.c.l.b16 %v2375
        %v2424 = vunpack.c.l.b16 %v2376
        %v2425 = vunpack.c.l.b16 %v2377
        %v2426 = vunpack.c.l.b16 %v2378
        %v2427 = vunpack.c.l.b16 %v2379
        %v2428 = vpack.c.b16 %v2413, %v2412
        %v2429 = vpack.c.b16 %v2415, %v2414
        %v2430 = vpack.c.b16 %v2417, %v2416
        %v2431 = vpack.c.b16 %v2419, %v2418
        %v2432 = vpack.c.b16 %v2421, %v2420
        %v2433 = vpack.c.b16 %v2423, %v2422
        %v2434 = vpack.c.b16 %v2425, %v2424
        %v2435 = vpack.c.b16 %v2427, %v2426
        %2444 = vmatpush.bf16.msra.mxu0 %v2435
        %2445 = vmatpush.bf16.msra.mxu0 %v2434
        %2446 = vmatpush.bf16.msra.mxu0 %v2433
        %2447 = vmatpush.bf16.msra.mxu0 %v2432
        %2448 = vmatpush.bf16.msra.mxu0 %v2431
        %2449 = vmatpush.bf16.msra.mxu0 %v2430
        %2450 = vmatpush.bf16.msra.mxu0 %v2429
        %2451 = vmatpush.bf16.msra.mxu0 %v2428
        %2452 = vmatmul.bf16.gmra.mxu0 %v2388
        %v2453 = vpop.f32.mrf.mxu0
        %v2454 = vadd.f32 0.0, %v2453
        %v2455 = vpop.f32.mrf.mxu0
        %v2456 = vadd.f32 0.0, %v2455
        %2457 = vmatmul.bf16.gmra.mxu0 %v2389
        %v2458 = vpop.f32.mrf.mxu0
        %v2459 = vadd.f32 0.0, %v2458
        %v2460 = vpop.f32.mrf.mxu0
        %v2461 = vadd.f32 0.0, %v2460
        %2462 = vmatmul.bf16.gmra.mxu0 %v2390
        %v2463 = vpop.f32.mrf.mxu0
        %v2464 = vadd.f32 0.0, %v2463
        %v2465 = vpop.f32.mrf.mxu0
        %v2466 = vadd.f32 0.0, %v2465
        %2467 = vmatmul.bf16.gmra.mxu0 %v2391
        %v2468 = vpop.f32.mrf.mxu0
        %v2469 = vadd.f32 0.0, %v2468
        %v2470 = vpop.f32.mrf.mxu0
        %v2471 = vadd.f32 0.0, %v2470
        %2472 = vdwg.mxu0
        %v2473 = vadd.f32 %v2355, %v2454
        %v2474 = vadd.f32 %v2356, %v2456
        %v2475 = vadd.f32 %v2357, %v2459
        %v2476 = vadd.f32 %v2358, %v2461
        %v2477 = vadd.f32 %v2359, %v2464
        %v2478 = vadd.f32 %v2360, %v2466
        %v2479 = vadd.f32 %v2361, %v2469
        %v2480 = vadd.f32 %v2362, %v2471
        %2481 = vst [vmem:[#allocation3] sm:$0xff] %v2473
        %2482 = vst [vmem:[#allocation3 + $0x8] sm:$0xff] %v2474
        %2483 = vst [vmem:[#allocation3 + $0x10] sm:$0xff] %v2475
        %2484 = vst [vmem:[#allocation3 + $0x18] sm:$0xff] %v2476
        %2485 = vst [vmem:[#allocation3 + $0x20] sm:$0xff] %v2477
        %2486 = vst [vmem:[#allocation3 + $0x28] sm:$0xff] %v2478
        %2487 = vst [vmem:[#allocation3 + $0x30] sm:$0xff] %v2479
        %2488 = vst [vmem:[#allocation3 + $0x38] sm:$0xff] %v2480
        %v2489 = vld [vmem:[#allocation3] sm:$0xff]
        %v2490 = vld [vmem:[#allocation3 + $0x8] sm:$0xff]
        %v2491 = vld [vmem:[#allocation3 + $0x10] sm:$0xff]
        %v2492 = vld [vmem:[#allocation3 + $0x18] sm:$0xff]
        %v2493 = vld [vmem:[#allocation3 + $0x20] sm:$0xff]
        %v2494 = vld [vmem:[#allocation3 + $0x28] sm:$0xff]
        %v2495 = vld [vmem:[#allocation3 + $0x30] sm:$0xff]
        %v2496 = vld [vmem:[#allocation3 + $0x38] sm:$0xff]
        %v2497 = vpack.c.bf16 %v2489, %v2489
        %v2498 = vpack.c.bf16 %v2490, %v2490
        %v2499 = vpack.c.bf16 %v2491, %v2491
        %v2500 = vpack.c.bf16 %v2492, %v2492
        %v2501 = vpack.c.bf16 %v2493, %v2493
        %v2502 = vpack.c.bf16 %v2494, %v2494
        %v2503 = vpack.c.bf16 %v2495, %v2495
        %v2504 = vpack.c.bf16 %v2496, %v2496
        %2505 = vst [vmem:[%s405] sm:$0xf] %v2497
        %2506 = vst [vmem:[%s405 + $0x4] sm:$0xf] %v2498
        %2507 = vst [vmem:[%s405 + $0x8] sm:$0xf] %v2499
        %2508 = vst [vmem:[%s405 + $0xc] sm:$0xf] %v2500
        %2509 = vst [vmem:[%s405 + $0x10] sm:$0xf] %v2501
        %2510 = vst [vmem:[%s405 + $0x14] sm:$0xf] %v2502
        %2511 = vst [vmem:[%s405 + $0x18] sm:$0xf] %v2503
        %2512 = vst [vmem:[%s405 + $0x1c] sm:$0xf] %v2504
        %v2513 = vld [vmem:[%s417] sm:$0x1]
        %v2514 = vadd.f32 %v2489, %v2490
        %v2515 = vadd.f32 %v2514, %v2491
        %v2516 = vadd.f32 %v2515, %v2492
        %v2517 = vadd.f32 %v2516, %v2493
        %v2518 = vadd.f32 %v2517, %v2494
        %v2519 = vadd.f32 %v2518, %v2495
        %v2520 = vadd.f32 %v2519, %v2496
        %v2521 = vrot.slane %v2520, 4
        %v2522 = vadd.f32 %v2520, %v2521
        %v2523 = vrot.slane %v2522, 2
        %v2524 = vadd.f32 %v2522, %v2523
        %v2525 = vrot.slane %v2524, 1
        %v2526 = vadd.f32 %v2524, %v2525
        %v2527 = vadd.f32 %v2513, %v2526
        %2528 = vst [vmem:[%s417] sm:$0x1] %v2527
        %v2529 = vld [vmem:[%s417 + $0x1] sm:$0x1]
        %v2530 = vmul.f32 %v2489, %v2489
        %v2531 = vmul.f32 %v2490, %v2490
        %v2532 = vmul.f32 %v2491, %v2491
        %v2533 = vmul.f32 %v2492, %v2492
        %v2534 = vmul.f32 %v2493, %v2493
        %v2535 = vmul.f32 %v2494, %v2494
        %v2536 = vmul.f32 %v2495, %v2495
        %v2537 = vmul.f32 %v2496, %v2496
        %v2538 = vadd.f32 %v2530, %v2531
        %v2539 = vadd.f32 %v2538, %v2532
        %v2540 = vadd.f32 %v2539, %v2533
        %v2541 = vadd.f32 %v2540, %v2534
        %v2542 = vadd.f32 %v2541, %v2535
        %v2543 = vadd.f32 %v2542, %v2536
        %v2544 = vadd.f32 %v2543, %v2537
        %v2545 = vrot.slane %v2544, 4
        %v2546 = vadd.f32 %v2544, %v2545
        %v2547 = vrot.slane %v2546, 2
        %v2548 = vadd.f32 %v2546, %v2547
        %v2549 = vrot.slane %v2548, 1
        %v2550 = vadd.f32 %v2548, %v2549
        %v2551 = vadd.f32 %v2529, %v2550
        %2552 = vst [vmem:[%s417 + $0x1] sm:$0x1] %v2551
        %v2553 = vld [vmem:[%s398] sm:$0xf]
        %v2554 = vld [vmem:[%s398 + $0x4] sm:$0xf]
        %v2555 = vld [vmem:[%s398 + $0x8] sm:$0xf]
        %v2556 = vld [vmem:[%s398 + $0xc] sm:$0xf]
        %v2557 = vld [vmem:[%s398 + $0x10] sm:$0xf]
        %v2558 = vld [vmem:[%s398 + $0x14] sm:$0xf]
        %v2559 = vld [vmem:[%s398 + $0x18] sm:$0xf]
        %v2560 = vld [vmem:[%s398 + $0x1c] sm:$0xf]
        %v2561 = vld [vmem:[%s5] sm:$0xf]
        %v2570 = vunpack.c.l.b16 %v2553
        %v2571 = vunpack.c.l.b16 %v2554
        %v2572 = vunpack.c.l.b16 %v2555
        %v2573 = vunpack.c.l.b16 %v2556
        %v2574 = vunpack.c.l.b16 %v2557
        %v2575 = vunpack.c.l.b16 %v2558
        %v2576 = vunpack.c.l.b16 %v2559
        %v2577 = vunpack.c.l.b16 %v2560
        %v2578 = vpack.c.b16 %v2571, %v2570
        %v2579 = vpack.c.b16 %v2573, %v2572
        %v2580 = vpack.c.b16 %v2575, %v2574
        %v2581 = vpack.c.b16 %v2577, %v2576
        %vm2582 = vcmask 64512
        %v2584 = vsel %vm2582, %v2578, 0
        %v2587 = vsel %vm2582, %v2579, 0
        %v2590 = vsel %vm2582, %v2580, 0
        %v2593 = vsel %vm2582, %v2581, 0
        %vm2595 = vcmask 1043456
        %v2597 = vsel %vm2595, %v2561, 0
        %2599 = vmatpush.bf16.msra.mxu0 0
        %2600 = vmatpush.bf16.msra.mxu0 0
        %2601 = vmatpush.bf16.msra.mxu0 0
        %2602 = vmatpush.bf16.msra.mxu0 0
        %2603 = vmatpush.bf16.msra.mxu0 0
        %2604 = vmatpush.bf16.msra.mxu0 0
        %2605 = vmatpush.bf16.msra.mxu0 0
        %2606 = vmatpush.bf16.msra.mxu0 %v2597
        %2607 = vmatmul.bf16.gmra.mxu0 %v2584
        %v2608 = vpop.f32.mrf.mxu0
        %v2609 = vadd.f32 0.0, %v2608
        %v2610 = vpop.f32.mrf.mxu0
        %v2611 = vadd.f32 0.0, %v2610
        %2612 = vmatmul.bf16.gmra.mxu0 %v2587
        %v2613 = vpop.f32.mrf.mxu0
        %v2614 = vadd.f32 0.0, %v2613
        %v2615 = vpop.f32.mrf.mxu0
        %v2616 = vadd.f32 0.0, %v2615
        %2617 = vmatmul.bf16.gmra.mxu0 %v2590
        %v2618 = vpop.f32.mrf.mxu0
        %v2619 = vadd.f32 0.0, %v2618
        %v2620 = vpop.f32.mrf.mxu0
        %v2621 = vadd.f32 0.0, %v2620
        %2622 = vmatmul.bf16.gmra.mxu0 %v2593
        %v2623 = vpop.f32.mrf.mxu0
        %v2624 = vadd.f32 0.0, %v2623
        %v2625 = vpop.f32.mrf.mxu0
        %v2626 = vadd.f32 0.0, %v2625
        %2627 = vdwg.mxu0
        %v2628 = vpack.c.bf16 %v2609, %v2609
        %v2629 = vpack.c.bf16 %v2611, %v2611
        %v2630 = vpack.c.bf16 %v2614, %v2614
        %v2631 = vpack.c.bf16 %v2616, %v2616
        %v2632 = vpack.c.bf16 %v2619, %v2619
        %v2633 = vpack.c.bf16 %v2621, %v2621
        %v2634 = vpack.c.bf16 %v2624, %v2624
        %v2635 = vpack.c.bf16 %v2626, %v2626
        %2636 = vst [vmem:[%s412] sm:$0xf] %v2628
        %2637 = vst [vmem:[%s412 + $0x4] sm:$0xf] %v2629
        %2638 = vst [vmem:[%s412 + $0x8] sm:$0xf] %v2630
        %2639 = vst [vmem:[%s412 + $0xc] sm:$0xf] %v2631
        %2640 = vst [vmem:[%s412 + $0x10] sm:$0xf] %v2632
        %2641 = vst [vmem:[%s412 + $0x14] sm:$0xf] %v2633
        %2642 = vst [vmem:[%s412 + $0x18] sm:$0xf] %v2634
        %2643 = vst [vmem:[%s412 + $0x1c] sm:$0xf] %v2635
        %v2644 = vld [vmem:[%s421] sm:$0x1]
        %v2645 = vadd.f32 %v2609, %v2611
        %v2646 = vadd.f32 %v2645, %v2614
        %v2647 = vadd.f32 %v2646, %v2616
        %v2648 = vadd.f32 %v2647, %v2619
        %v2649 = vadd.f32 %v2648, %v2621
        %v2650 = vadd.f32 %v2649, %v2624
        %v2651 = vadd.f32 %v2650, %v2626
        %v2652 = vrot.slane %v2651, 4
        %v2653 = vadd.f32 %v2651, %v2652
        %v2654 = vrot.slane %v2653, 2
        %v2655 = vadd.f32 %v2653, %v2654
        %v2656 = vrot.slane %v2655, 1
        %v2657 = vadd.f32 %v2655, %v2656
        %v2658 = vadd.f32 %v2644, %v2657
        %2659 = vst [vmem:[%s421] sm:$0x1] %v2658
        %v2660 = vld [vmem:[%s421 + $0x1] sm:$0x1]
        %v2661 = vmul.f32 %v2609, %v2609
        %v2662 = vmul.f32 %v2611, %v2611
        %v2663 = vmul.f32 %v2614, %v2614
        %v2664 = vmul.f32 %v2616, %v2616
        %v2665 = vmul.f32 %v2619, %v2619
        %v2666 = vmul.f32 %v2621, %v2621
        %v2667 = vmul.f32 %v2624, %v2624
        %v2668 = vmul.f32 %v2626, %v2626
        %v2669 = vadd.f32 %v2661, %v2662
        %v2670 = vadd.f32 %v2669, %v2663
        %v2671 = vadd.f32 %v2670, %v2664
        %v2672 = vadd.f32 %v2671, %v2665
        %v2673 = vadd.f32 %v2672, %v2666
        %v2674 = vadd.f32 %v2673, %v2667
        %v2675 = vadd.f32 %v2674, %v2668
        %v2676 = vrot.slane %v2675, 4
        %v2677 = vadd.f32 %v2675, %v2676
        %v2678 = vrot.slane %v2677, 2
        %v2679 = vadd.f32 %v2677, %v2678
        %v2680 = vrot.slane %v2679, 1
        %v2681 = vadd.f32 %v2679, %v2680
        %v2682 = vadd.f32 %v2660, %v2681
        %2683 = vst [vmem:[%s421 + $0x1] sm:$0x1] %v2682
      $region52: #{basic_block_forward.4} parent=43 // pred_fallthru
        _
      %s2684 = sadd.s32 %s25, %s26
      %p2685 = scmp.lt.s32.totalorder %s2684, 1
      %s2686 = scalar_select %p2685, %s2684, 1
      %s2687 = smul.addr %s2686, 8
      %s2688 = smul.addr %s2687, 4
      %s2689 = scalar_lea.vmem %s6, %s2688
      %s2690 = sadd.s32 %s25, %s26
      %p2691 = scmp.lt.s32.totalorder %s2690, 1
      %s2692 = scalar_select %p2691, %s2690, 1
      %s2693 = smul.addr %s2692, 8
      %s2694 = smul.addr %s2693, 4
      %s2695 = scalar_lea.vmem %s7, %s2694
      %p2696 = scmp.lt.s32.totalorder %s25, 1
      %s2697 = scalar_select %p2696, %s25, 1
      %s2698 = smul.addr %s2697, 2
      %s2699 = scalar_lea.vmem %s8, %s2698
      %p2700 = scmp.lt.s32.totalorder %s25, 1
      %s2701 = scalar_select %p2700, %s25, 1
      %s2702 = smul.addr %s2701, 2
      %s2703 = scalar_lea.vmem %s9, %s2702
      // Predicated region
      $region53: #{basic_block_forward.4} parent=43 // pred_check
        %p2704 = pneg %p193
      $region54: #{basic_block_forward.4} parent=43 // pred_check_branch
        %2706 = sbr.rel (%p2704) target = $region56
      $region55: #{basic_block_forward.4} parent=43 // pred_region
        %s2707 = sadd.s32 %s25, %s26
      $region56: #{basic_block_forward.4} parent=43 // pred_fallthru
        _
      // Predicated region
      $region57: #{basic_block_forward.4} parent=43 // pred_check
        %p2708 = pneg %p221
      $region58: #{basic_block_forward.4} parent=43 // pred_check_branch
        %2710 = sbr.rel (%p2708) target = $region60
      $region59: #{basic_block_forward.4} parent=43 // pred_region
        %s2711 = sadd.s32 %s25, %s26
      $region60: #{basic_block_forward.4} parent=43 // pred_fallthru
        _
      // Predicated region
      $region61: #{basic_block_forward.4} parent=43 // pred_check
        %p2712 = pneg %p247
      $region62: #{basic_block_forward.4} parent=43 // pred_check_branch
        %2714 = sbr.rel (%p2712) target = $region64
      $region63: #{basic_block_forward.4} parent=43 // pred_region
        _
      $region64: #{basic_block_forward.4} parent=43 // pred_fallthru
        _
      // Predicated region
      $region65: #{basic_block_forward.4} parent=43 // pred_check
        %p2715 = pneg %p273
      $region66: #{basic_block_forward.4} parent=43 // pred_check_branch
        %2717 = sbr.rel (%p2715) target = $region68
      $region67: #{basic_block_forward.4} parent=43 // pred_region
        _
      $region68: #{basic_block_forward.4} parent=43 // pred_fallthru
        _
    $region44: #{basic_block_forward.4} parent=5 // pred_fallthru
      _
    %p2718 = scmp.le.s32.totalorder 2, %s16
    // Predicated region
    $region69: #{basic_block_forward.4} parent=5 // pred_check
      %p2719 = pneg %p2718
    $region70: #{basic_block_forward.4} parent=5 // pred_check_branch
      %2721 = sbr.rel (%p2719) target = $region72
    $region71: #{basic_block_forward.4} parent=5 // pred_region
      %s2722 = ssub.s32 %s16, 2
      // Predicated region
      $region73: #{basic_block_forward.4} parent=71 // pred_check
        %p2723 = pneg %p199
      $region74: #{basic_block_forward.4} parent=71 // pred_check_branch
        %2725 = sbr.rel (%p2723) target = $region76
      $region75: #{basic_block_forward.4} parent=71 // pred_region
        %s2726 = sadd.s32 %s27, %s28
        %p2727 = scmp.lt.s32.totalorder %s2726, 1
        %s2728 = scalar_select %p2727, %s2726, 1
        %s2729 = smul.addr %s2728, 8
        %s2730 = smul.addr %s2729, 4
        %s2731 = scalar_lea.vmem %s6, %s2730
      $region76: #{basic_block_forward.4} parent=71 // pred_fallthru
        _
      // Predicated region
      $region77: #{basic_block_forward.4} parent=71 // pred_check
        %p2732 = pneg %p227
      $region78: #{basic_block_forward.4} parent=71 // pred_check_branch
        %2734 = sbr.rel (%p2732) target = $region80
      $region79: #{basic_block_forward.4} parent=71 // pred_region
        %s2735 = sadd.s32 %s27, %s28
        %p2736 = scmp.lt.s32.totalorder %s2735, 1
        %s2737 = scalar_select %p2736, %s2735, 1
        %s2738 = smul.addr %s2737, 8
        %s2739 = smul.addr %s2738, 4
        %s2740 = scalar_lea.vmem %s7, %s2739
      $region80: #{basic_block_forward.4} parent=71 // pred_fallthru
        _
      // Predicated region
      $region81: #{basic_block_forward.4} parent=71 // pred_check
        %p2741 = pneg %p253
      $region82: #{basic_block_forward.4} parent=71 // pred_check_branch
        %2743 = sbr.rel (%p2741) target = $region84
      $region83: #{basic_block_forward.4} parent=71 // pred_region
        %p2744 = scmp.lt.s32.totalorder %s27, 1
        %s2745 = scalar_select %p2744, %s27, 1
        %s2746 = smul.addr %s2745, 2
        %s2747 = scalar_lea.vmem %s8, %s2746
      $region84: #{basic_block_forward.4} parent=71 // pred_fallthru
        _
      // Predicated region
      $region85: #{basic_block_forward.4} parent=71 // pred_check
        %p2748 = pneg %p279
      $region86: #{basic_block_forward.4} parent=71 // pred_check_branch
        %2750 = sbr.rel (%p2748) target = $region88
      $region87: #{basic_block_forward.4} parent=71 // pred_region
        %p2751 = scmp.lt.s32.totalorder %s27, 1
        %s2752 = scalar_select %p2751, %s27, 1
        %s2753 = smul.addr %s2752, 2
        %s2754 = scalar_lea.vmem %s9, %s2753
      $region88: #{basic_block_forward.4} parent=71 // pred_fallthru
        _
    $region72: #{basic_block_forward.4} parent=5 // pred_fallthru
      _
  $region6: #{basic_block_forward.4} parent=0 // loop_footer
    %s20 = sadd.s32 1, %s16
  $region7: #{basic_block_forward.4} parent=0 // loop_footer_branch
    %15 = sbr.rel target = $region3
  $region8: #{basic_block_forward.4} parent=0 // loop_exit
    _

</llo_original>
